<compile_context>
chip_gen: v7x
topology: tpu7x:2x2x1
jax: 0.10.0
libtpu: 0.0.40
codegen_flags: <defaults>
</compile_context>

<pallas_src>
import functools

import jax
import jax.numpy as jnp
import numpy as np
from jax import lax
from jax.experimental import pallas as pl
from jax.experimental.pallas import tpu as pltpu


def _round_up(x, m):
    return (x + m - 1) // m * m


# --------------------------------------------------------------------------
# Fused kernel: LSTM recurrence (returns ht[-1] implicitly) + MLP head
# --------------------------------------------------------------------------
def _lstm_head_kernel(x_ref, wih_ref, whh_ref, b_ref,
                      w1_ref, b1_ref, w2_ref, b2_ref, w3_ref, b3_ref,
                      wo_ref, bo_ref,
                      out_ref,
                      h_scr, c_scr, gx_scr,
                      *, t_blk, seq_len, hidden_p):
    """One grid step == one block of t_blk timesteps.

    x_ref:   (t_blk, Bp, Ip)   time block of padded embedded inputs (pipelined)
    wih_ref: (Ip, 4Hp)         W_ih^T, gate order [i, f, o, g], VMEM-resident
    whh_ref: (Hp, 4Hp)         W_hh^T, VMEM-resident
    b_ref:   (1, 4Hp)          b_ih + b_hh
    w{1,2,3}_ref/b{1,2,3}_ref: (Hp, Hp)/(1, Hp)   intermediate MLP (Linear+ReLU)
    wo_ref/bo_ref: (Hp, Op)/(1, Op)               output Linear
    out_ref: (Bp, Op)          final scores (written only in the last block)
    h_scr/c_scr: (Bp, Hp)      recurrent state carried across grid steps
    gx_scr: (t_blk*Bp, 4Hp)    staged input projection for the current block
    """
    blk = pl.program_id(0)
    n_blk = pl.num_programs(0)
    tb, bp, ip = x_ref.shape
    h3 = 3 * hidden_p

    @pl.when(blk == 0)
    def _():
        h_scr[...] = jnp.zeros_like(h_scr)
        c_scr[...] = jnp.zeros_like(c_scr)

    # Hoisted input projection for the whole time block: one well-shaped MXU
    # matmul, staged in VMEM scratch so vreg pressure stays flat as t_blk grows.
    x2d = x_ref[...].reshape(tb * bp, ip)
    gx_scr[...] = (jnp.dot(x2d, wih_ref[...],
                           preferred_element_type=jnp.float32) + b_ref[...])

    unroll = True if t_blk <= 8 else 4

    def run_recurrence(mask_tail):
        def body(t, carry):
            h, c = carry
            row = pl.multiple_of(t * bp, bp)              # bp is 8-aligned
            gates = gx_scr[pl.ds(row, bp), :] + jnp.dot(
                h.astype(whh_ref.dtype), whh_ref[...],
                preferred_element_type=jnp.float32)       # (Bp, 4Hp)
            # Gate order [i, f, o, g]: one contiguous sigmoid over 3Hp lanes,
            # tanh on the trailing Hp lanes.
            sig = jax.nn.sigmoid(gates[:, :h3])
            i_g = sig[:, 0:hidden_p]
            f_g = sig[:, hidden_p:2 * hidden_p]
            o_g = sig[:, 2 * hidden_p:h3]
            g_g = jnp.tanh(gates[:, h3:])
            c_new = f_g * c + i_g * g_g
            h_new = o_g * jnp.tanh(c_new)
            if mask_tail:                                  # only in the last block
                valid = (blk * t_blk + t) < seq_len
                h_new = jnp.where(valid, h_new, h)
                c_new = jnp.where(valid, c_new, c)
            return h_new, c_new

        h, c = lax.fori_loop(0, t_blk, body, (h_scr[...], c_scr[...]),
                             unroll=unroll)
        h_scr[...] = h
        c_scr[...] = c

    if seq_len % t_blk == 0:
        run_recurrence(False)
    else:
        @pl.when(blk < n_blk - 1)
        def _():
            run_recurrence(False)

        @pl.when(blk == n_blk - 1)
        def _():
            run_recurrence(True)

    # Fused head epilogue: 3x (Linear+ReLU) + out Linear, only in the last block.
    # Output block index is constant across the grid -> single HBM writeback.
    @pl.when(blk == n_blk - 1)
    def _():
        x = h_scr[...]
        for w_ref, bias_ref in ((w1_ref, b1_ref), (w2_ref, b2_ref),
                                (w3_ref, b3_ref)):
            x = jnp.maximum(
                jnp.dot(x.astype(w_ref.dtype), w_ref[...],
                        preferred_element_type=jnp.float32) + bias_ref[...], 0.0)
        out = jnp.dot(x.astype(wo_ref.dtype), wo_ref[...],
                      preferred_element_type=jnp.float32) + bo_ref[...]
        out_ref[...] = out.astype(out_ref.dtype)


def _lstm_mlp_head(x_p, arrays, dims, *, t_blk, seq_len, vmem_limit):
    Sp, Bp, Ip = x_p.shape
    Hp, Op = dims["Hp"], dims["Op"]
    kernel = functools.partial(_lstm_head_kernel, t_blk=t_blk, seq_len=seq_len,
                               hidden_p=Hp)

    def vmem_spec():
        # whole-array, VMEM-resident (single copy, no useless double buffering)
        return pl.BlockSpec(memory_space=pltpu.MemorySpace.VMEM)

    return pl.pallas_call(
        kernel,
        out_shape=jax.ShapeDtypeStruct((Bp, Op), jnp.float32),
        grid_spec=pltpu.PrefetchScalarGridSpec(
            num_scalar_prefetch=0,
            grid=(Sp // t_blk,),
            in_specs=[
                # time block of inputs: pipelined / double buffered
                pl.BlockSpec((t_blk, Bp, Ip), lambda b: (b, 0, 0)),
            ] + [vmem_spec() for _ in range(11)],
            out_specs=pl.BlockSpec((Bp, Op), lambda b: (0, 0)),
            scratch_shapes=[
                pltpu.VMEM((Bp, Hp), jnp.float32),              # h carry
                pltpu.VMEM((Bp, Hp), jnp.float32),              # c carry
                pltpu.VMEM((t_blk * Bp, 4 * Hp), jnp.float32),  # staged x @ W_ih^T
            ],
        ),
        compiler_params=pltpu.CompilerParams(
            dimension_semantics=("arbitrary",),   # time is a serial recurrence
            vmem_limit_bytes=vmem_limit),
    )(x_p, arrays["wih_t"], arrays["whh_t"], arrays["bias"],
      arrays["w1t"], arrays["b1"], arrays["w2t"], arrays["b2"],
      arrays["w3t"], arrays["b3"], arrays["wot"], arrays["bo"])


# --------------------------------------------------------------------------
# One-time parameter preparation (model-load time, NOT per forward call)
# --------------------------------------------------------------------------
def prepare_params(params, *, param_dtype=jnp.float32):
    """Pad / transpose / gate-reorder all weights once.

    param_dtype: f32 everywhere (default).  bf16 is recommended for
    W_ih/W_hh/head weights/embedding on v6e/v7x at production sizes
    (accumulation stays f32 via preferred_element_type; h/c carries stay f32).
    """
    V, E = params["embedding"].shape
    H = params["w_hh"].shape[1]
    O = params["w_out"].shape[0]
    Ip, Hp, Op = _round_up(E, 128), _round_up(H, 128), _round_up(O, 128)

    gate_order = jnp.array([0, 1, 3, 2])   # torch [i, f, g, o] -> kernel [i, f, o, g]

    # Pad each gate separately so gate k lives at lane offset k*Hp (aligned).
    def pad_gate_mat(w, in_dim, in_dim_p):             # (4H, in) -> (in_p, 4Hp)
        w4 = w.astype(param_dtype).reshape(4, H, in_dim)[gate_order]
        w4 = jnp.pad(w4, ((0, 0), (0, Hp - H), (0, in_dim_p - in_dim)))
        return w4.reshape(4 * Hp, in_dim_p).T

    bias = (params["b_ih"] + params["b_hh"]).astype(jnp.float32)
    bias = bias.reshape(4, H)[gate_order]
    bias = jnp.pad(bias, ((0, 0), (0, Hp - H))).reshape(1, 4 * Hp)

    def prep_lin(w, b, out_p, in_p):                   # torch Linear: y = x@w.T + b
        wp = jnp.pad(w.astype(param_dtype),
                     ((0, out_p - w.shape[0]), (0, in_p - w.shape[1])))
        bp = jnp.pad(b.astype(jnp.float32), (0, out_p - b.shape[0])).reshape(1, out_p)
        return wp.T, bp                                # kernel layout (in_p, out_p)

    w1t, b1 = prep_lin(params["w1"], params["b1"], Hp, Hp)
    w2t, b2 = prep_lin(params["w2"], params["b2"], Hp, Hp)
    w3t, b3 = prep_lin(params["w3"], params["b3"], Hp, Hp)
    wot, bo = prep_lin(params["w_out"], params["b_out"], Op, Hp)

    arrays = dict(
        # lane-padded embedding table -> gather output is already Ip-aligned
        embedding=jnp.pad(params["embedding"].astype(param_dtype),
                          ((0, 0), (0, Ip - E))),
        wih_t=pad_gate_mat(params["w_ih"], E, Ip),     # (Ip, 4Hp)
        whh_t=pad_gate_mat(params["w_hh"], H, Hp),     # (Hp, 4Hp)
        bias=bias,                                     # (1, 4Hp)
        w1t=w1t, b1=b1, w2t=w2t, b2=b2, w3t=w3t, b3=b3,
        wot=wot, bo=bo,
    )
    arrays = jax.block_until_ready(arrays)             # materialize once
    dims = dict(d_out=O, Ip=Ip, Hp=Hp, Op=Op)
    return dict(arrays=arrays, dims=dims)


# --------------------------------------------------------------------------
# Full IntentClassifier forward
# --------------------------------------------------------------------------
def intent_classifier_forward(tokens, prep, *, t_blk=16):
    """tokens: (S, B) int32, time-major (torchtext batch.hypothesis).

    t_blk guidance: 16 on v5e (128 = t_blk*Bp MXU rows), 32 on v6e/v7x.
    """
    arrays, dims = prep["arrays"], prep["dims"]
    S, B = tokens.shape
    Bp = _round_up(B, 8)
    Sp = _round_up(S, t_blk)
    Ip, Hp, Op = dims["Ip"], dims["Hp"], dims["Op"]

    # 1) embedding lookup (dynamic gather, plain JAX; table is lane-padded).
    # config.projection == False -> no projection; fix_emb is a forward no-op.
    emb = jnp.take(arrays["embedding"], tokens, axis=0)          # (S, B, Ip)
    x_p = jnp.pad(emb, ((0, Sp - S), (0, Bp - B), (0, 0)))       # (Sp, Bp, Ip)

    # Explicit VMEM budget (clamped to <= 64 MiB so it is valid on v7x too).
    pbytes = jnp.dtype(arrays["wih_t"].dtype).itemsize
    footprint = (2 * t_blk * Bp * Ip * pbytes                    # x double buffer
                 + (Ip + Hp) * 4 * Hp * pbytes + 4 * Hp * 4      # LSTM weights+bias
                 + (3 * Hp + Op) * Hp * pbytes + (3 * Hp + Op) * 4   # head weights+bias
                 + (2 * Bp * Hp + t_blk * Bp * 4 * Hp + Bp * Op) * 4)  # scratch + out
    vmem_limit = int(min(64 * 2 ** 20, max(32 * 2 ** 20, 2 * footprint)))

    # 2+3) fused LSTM recurrence (ht[-1]) + intermediate MLP + output layer.
    scores_p = _lstm_mlp_head(x_p, arrays, dims, t_blk=t_blk, seq_len=S,
                              vmem_limit=vmem_limit)             # (Bp, Op)
    scores = scores_p[:B, :dims["d_out"]]
    # returnIntermediate=False -> (scores, oodScores=None, intermediateRepn=None)
    return scores, None, None


# --------------------------------------------------------------------------
# Pure-JAX reference (mirrors the PyTorch forward semantics)
# --------------------------------------------------------------------------
def intent_classifier_reference(tokens, params):
    emb = params["embedding"][tokens]                            # (S, B, E)
    S, B, E = emb.shape
    H = params["w_hh"].shape[1]

    def cell(x, h, c):
        gates = (x @ params["w_ih"].T + params["b_ih"]
                 + h @ params["w_hh"].T + params["b_hh"])
        i_g, f_g, g_g, o_g = jnp.split(gates, 4, axis=1)
        i_g = jax.nn.sigmoid(i_g)
        f_g = jax.nn.sigmoid(f_g)
        g_g = jnp.tanh(g_g)
        o_g = jax.nn.sigmoid(o_g)
        c_new = f_g * c + i_g * g_g
        return o_g * jnp.tanh(c_new), c_new

    def step(carry, x_t):
        h, c = carry
        h, c = cell(x_t, h, c)
        return (h, c), None

    (h, _), _ = lax.scan(step, (jnp.zeros((B, H)), jnp.zeros((B, H))), emb)

    x = h
    for k in (1, 2, 3):
        x = jax.nn.relu(x @ params[f"w{k}"].T + params[f"b{k}"])
    return x @ params["w_out"].T + params["b_out"]


if __name__ == "__main__":
    S, B = 10, 2                    # seq_len (exercises tail masking), batch
    V, E, H, O = 100, 16, 32, 8     # n_embed, d_embed, d_hidden, d_out

    key = jax.random.PRNGKey(0)
    ks = jax.random.split(key, 16)

    tokens = jax.random.randint(ks[0], (S, B), 0, V, dtype=jnp.int32)
    bound = 1.0 / np.sqrt(H)
    u = lambda k, shape: jax.random.uniform(k, shape, jnp.float32, -bound, bound)

    params = dict(
        embedding=jax.random.normal(ks[1], (V, E), jnp.float32),
        w_ih=u(ks[2], (4 * H, E)), w_hh=u(ks[3], (4 * H, H)),
        b_ih=u(ks[4], (4 * H,)),   b_hh=u(ks[5], (4 * H,)),
        w1=u(ks[6], (H, H)),  b1=u(ks[7], (H,)),
        w2=u(ks[8], (H, H)),  b2=u(ks[9], (H,)),
        w3=u(ks[10], (H, H)), b3=u(ks[11], (H,)),
        w_out=u(ks[12], (O, H)), b_out=u(ks[13], (O,)),
    )

    # One-time weight prep (hoisted off the forward path).
    prep = prepare_params(params, param_dtype=jnp.float32)

    # t_blk=4 -> 3 time blocks (2 full + 1 masked tail) to exercise the grid,
    # tail masking and the fused head epilogue.
    scores, ood_scores, intermediate = intent_classifier_forward(
        tokens, prep, t_blk=4)
    scores = jax.block_until_ready(scores)

    ref = intent_classifier_reference(tokens, params)
    np.testing.assert_allclose(np.asarray(scores), np.asarray(ref),
                               rtol=1e-5, atol=1e-5)
    assert ood_scores is None and intermediate is None
    print("KERNEL_OK")
</pallas_src>

<mosaic_0001>
module attributes {stable_mosaic.version = 11 : i64} {
  func.func @_lstm_head_kernel(%arg0: i32, %arg1: memref<4x8x128xf32, #tpu.memory_space<vmem>>, %arg2: memref<128x512xf32, #tpu.memory_space<vmem>>, %arg3: memref<128x512xf32, #tpu.memory_space<vmem>>, %arg4: memref<1x512xf32, #tpu.memory_space<vmem>>, %arg5: memref<128x128xf32, #tpu.memory_space<vmem>>, %arg6: memref<1x128xf32, #tpu.memory_space<vmem>>, %arg7: memref<128x128xf32, #tpu.memory_space<vmem>>, %arg8: memref<1x128xf32, #tpu.memory_space<vmem>>, %arg9: memref<128x128xf32, #tpu.memory_space<vmem>>, %arg10: memref<1x128xf32, #tpu.memory_space<vmem>>, %arg11: memref<128x128xf32, #tpu.memory_space<vmem>>, %arg12: memref<1x128xf32, #tpu.memory_space<vmem>>, %arg13: memref<8x128xf32, #tpu.memory_space<vmem>>, %arg14: memref<8x128xf32, #tpu.memory_space<vmem>>, %arg15: memref<8x128xf32, #tpu.memory_space<vmem>>, %arg16: memref<32x512xf32, #tpu.memory_space<vmem>>) attributes {dimension_semantics = [#tpu.dimension_semantics<arbitrary>], iteration_bounds = array<i64: 3>, scalar_prefetch = 0 : i64, scratch_operands = 3 : i64, tpu.core_type = #tpu.core_type<tc>, window_params = [{transform_indices = @transform_0, window_bounds = array<i64: 4, 8, 128>}, {pipeline_mode = #tpu.pipeline_mode<synchronous>, transform_indices = @transform_1, window_bounds = array<i64: 128, 512>}, {pipeline_mode = #tpu.pipeline_mode<synchronous>, transform_indices = @transform_2, window_bounds = array<i64: 128, 512>}, {pipeline_mode = #tpu.pipeline_mode<synchronous>, transform_indices = @transform_3, window_bounds = array<i64: 1, 512>}, {pipeline_mode = #tpu.pipeline_mode<synchronous>, transform_indices = @transform_4, window_bounds = array<i64: 128, 128>}, {pipeline_mode = #tpu.pipeline_mode<synchronous>, transform_indices = @transform_5, window_bounds = array<i64: 1, 128>}, {pipeline_mode = #tpu.pipeline_mode<synchronous>, transform_indices = @transform_6, window_bounds = array<i64: 128, 128>}, {pipeline_mode = #tpu.pipeline_mode<synchronous>, transform_indices = @transform_7, window_bounds = array<i64: 1, 128>}, {pipeline_mode = #tpu.pipeline_mode<synchronous>, transform_indices = @transform_8, window_bounds = array<i64: 128, 128>}, {pipeline_mode = #tpu.pipeline_mode<synchronous>, transform_indices = @transform_9, window_bounds = array<i64: 1, 128>}, {pipeline_mode = #tpu.pipeline_mode<synchronous>, transform_indices = @transform_10, window_bounds = array<i64: 128, 128>}, {pipeline_mode = #tpu.pipeline_mode<synchronous>, transform_indices = @transform_11, window_bounds = array<i64: 1, 128>}, {pipeline_mode = #tpu.pipeline_mode<synchronous>, transform_indices = @transform_12, window_bounds = array<i64: 8, 128>}]} {
    %c0_i32 = arith.constant 0 : i32
    %0 = arith.cmpi eq, %arg0, %c0_i32 : i32
    %1 = arith.extui %0 : i1 to i32
    %c0_i32_0 = arith.constant 0 : i32
    %2 = arith.cmpi ne, %1, %c0_i32_0 : i32
    scf.if %2 {
      %cst_14 = arith.constant 0.000000e+00 : f32
      %20 = vector.broadcast %cst_14 : f32 to vector<8x128xf32>
      %c0_15 = arith.constant 0 : index
      %c0_16 = arith.constant 0 : index
      %21 = vector.load %arg14[%c0_15, %c0_16] : memref<8x128xf32, #tpu.memory_space<vmem>>, vector<8x128xf32>
      tpu.vector_store %arg14[%c0_15, %c0_16], %20 {strides = array<i32>} : memref<8x128xf32, #tpu.memory_space<vmem>>, vector<8x128xf32>,
      %cst_17 = arith.constant 0.000000e+00 : f32
      %22 = vector.broadcast %cst_17 : f32 to vector<8x128xf32>
      %c0_18 = arith.constant 0 : index
      %c0_19 = arith.constant 0 : index
      %23 = vector.load %arg15[%c0_18, %c0_19] : memref<8x128xf32, #tpu.memory_space<vmem>>, vector<8x128xf32>
      tpu.vector_store %arg15[%c0_18, %c0_19], %22 {strides = array<i32>} : memref<8x128xf32, #tpu.memory_space<vmem>>, vector<8x128xf32>,
    } else {
    }
    %c0 = arith.constant 0 : index
    %c0_1 = arith.constant 0 : index
    %c0_2 = arith.constant 0 : index
    %3 = vector.load %arg1[%c0, %c0_1, %c0_2] : memref<4x8x128xf32, #tpu.memory_space<vmem>>, vector<4x8x128xf32>
    %4 = vector.shape_cast %3 : vector<4x8x128xf32> to vector<32x128xf32>
    %c0_3 = arith.constant 0 : index
    %c0_4 = arith.constant 0 : index
    %5 = vector.load %arg2[%c0_3, %c0_4] : memref<128x512xf32, #tpu.memory_space<vmem>>, vector<128x512xf32>
    %cst = arith.constant dense<0.000000e+00> : vector<32x512xf32>
    %6 = tpu.matmul %4, %5, %cst {dimension_numbers = #tpu.dot_dimension_numbers<[1], [0], [0], [1], [0, 0, 1, 1], [], []>} : vector<32x128xf32>, vector<128x512xf32>, vector<32x512xf32> -> vector<32x512xf32>
    %c0_5 = arith.constant 0 : index
    %c0_6 = arith.constant 0 : index
    %7 = vector.load %arg4[%c0_5, %c0_6] : memref<1x512xf32, #tpu.memory_space<vmem>>, vector<1x512xf32>
    %8 = vector.broadcast %7 : vector<1x512xf32> to vector<32x512xf32>
    %9 = arith.addf %6, %8 : vector<32x512xf32>
    %c0_7 = arith.constant 0 : index
    %c0_8 = arith.constant 0 : index
    %10 = vector.load %arg16[%c0_7, %c0_8] : memref<32x512xf32, #tpu.memory_space<vmem>>, vector<32x512xf32>
    tpu.vector_store %arg16[%c0_7, %c0_8], %9 {strides = array<i32>} : memref<32x512xf32, #tpu.memory_space<vmem>>, vector<32x512xf32>,
    %c2_i32 = arith.constant 2 : i32
    %11 = arith.cmpi slt, %arg0, %c2_i32 : i32
    %12 = arith.extui %11 : i1 to i32
    %c0_i32_9 = arith.constant 0 : i32
    %13 = arith.cmpi ne, %12, %c0_i32_9 : i32
    scf.if %13 {
      %c0_14 = arith.constant 0 : index
      %c0_15 = arith.constant 0 : index
      %20 = vector.load %arg14[%c0_14, %c0_15] : memref<8x128xf32, #tpu.memory_space<vmem>>, vector<8x128xf32>
      %c0_16 = arith.constant 0 : index
      %c0_17 = arith.constant 0 : index
      %21 = vector.load %arg15[%c0_16, %c0_17] : memref<8x128xf32, #tpu.memory_space<vmem>>, vector<8x128xf32>
      %c0_i32_18 = arith.constant 0 : i32
      %c8_i32 = arith.constant 8 : i32
      %22 = arith.muli %c0_i32_18, %c8_i32 : i32
      %23 = tpu.assume_multiple %22, 8 : i32
      %24 = arith.index_cast %23 : i32 to index
      %c0_19 = arith.constant 0 : index
      %25 = vector.load %arg16[%24, %c0_19] : memref<32x512xf32, #tpu.memory_space<vmem>>, vector<8x512xf32>
      %c0_20 = arith.constant 0 : index
      %c0_21 = arith.constant 0 : index
      %26 = vector.load %arg3[%c0_20, %c0_21] : memref<128x512xf32, #tpu.memory_space<vmem>>, vector<128x512xf32>
      %cst_22 = arith.constant dense<0.000000e+00> : vector<8x512xf32>
      %27 = tpu.matmul %20, %26, %cst_22 {dimension_numbers = #tpu.dot_dimension_numbers<[1], [0], [0], [1], [0, 0, 1, 1], [], []>} : vector<8x128xf32>, vector<128x512xf32>, vector<8x512xf32> -> vector<8x512xf32>
      %28 = arith.addf %25, %27 : vector<8x512xf32>
      %29 = vector.extract_strided_slice %28 {offsets = [0, 0], sizes = [8, 384], strides = [1, 1]} : vector<8x512xf32> to vector<8x384xf32>
      %30 = arith.negf %29 : vector<8x384xf32>
      %31 = math.exp %30 : vector<8x384xf32>
      %cst_23 = arith.constant 1.000000e+00 : f32
      %32 = vector.broadcast %cst_23 : f32 to vector<8x384xf32>
      %33 = arith.addf %32, %31 : vector<8x384xf32>
      %34 = arith.divf %32, %33 : vector<8x384xf32>
      %35 = vector.extract_strided_slice %34 {offsets = [0, 0], sizes = [8, 128], strides = [1, 1]} : vector<8x384xf32> to vector<8x128xf32>
      %36 = vector.extract_strided_slice %34 {offsets = [0, 128], sizes = [8, 128], strides = [1, 1]} : vector<8x384xf32> to vector<8x128xf32>
      %37 = vector.extract_strided_slice %34 {offsets = [0, 256], sizes = [8, 128], strides = [1, 1]} : vector<8x384xf32> to vector<8x128xf32>
      %38 = vector.extract_strided_slice %28 {offsets = [0, 384], sizes = [8, 128], strides = [1, 1]} : vector<8x512xf32> to vector<8x128xf32>
      %39 = math.tanh %38 : vector<8x128xf32>
      %40 = arith.mulf %36, %21 : vector<8x128xf32>
      %41 = arith.mulf %35, %39 : vector<8x128xf32>
      %42 = arith.addf %40, %41 : vector<8x128xf32>
      %43 = math.tanh %42 : vector<8x128xf32>
      %44 = arith.mulf %37, %43 : vector<8x128xf32>
      %c1_i32 = arith.constant 1 : i32
      %c8_i32_24 = arith.constant 8 : i32
      %45 = arith.muli %c1_i32, %c8_i32_24 : i32
      %46 = tpu.assume_multiple %45, 8 : i32
      %47 = arith.index_cast %46 : i32 to index
      %c0_25 = arith.constant 0 : index
      %48 = vector.load %arg16[%47, %c0_25] : memref<32x512xf32, #tpu.memory_space<vmem>>, vector<8x512xf32>
      %c0_26 = arith.constant 0 : index
      %c0_27 = arith.constant 0 : index
      %49 = vector.load %arg3[%c0_26, %c0_27] : memref<128x512xf32, #tpu.memory_space<vmem>>, vector<128x512xf32>
      %cst_28 = arith.constant dense<0.000000e+00> : vector<8x512xf32>
      %50 = tpu.matmul %44, %49, %cst_28 {dimension_numbers = #tpu.dot_dimension_numbers<[1], [0], [0], [1], [0, 0, 1, 1], [], []>} : vector<8x128xf32>, vector<128x512xf32>, vector<8x512xf32> -> vector<8x512xf32>
      %51 = arith.addf %48, %50 : vector<8x512xf32>
      %52 = vector.extract_strided_slice %51 {offsets = [0, 0], sizes = [8, 384], strides = [1, 1]} : vector<8x512xf32> to vector<8x384xf32>
      %53 = arith.negf %52 : vector<8x384xf32>
      %54 = math.exp %53 : vector<8x384xf32>
      %cst_29 = arith.constant 1.000000e+00 : f32
      %55 = vector.broadcast %cst_29 : f32 to vector<8x384xf32>
      %56 = arith.addf %55, %54 : vector<8x384xf32>
      %57 = arith.divf %55, %56 : vector<8x384xf32>
      %58 = vector.extract_strided_slice %57 {offsets = [0, 0], sizes = [8, 128], strides = [1, 1]} : vector<8x384xf32> to vector<8x128xf32>
      %59 = vector.extract_strided_slice %57 {offsets = [0, 128], sizes = [8, 128], strides = [1, 1]} : vector<8x384xf32> to vector<8x128xf32>
      %60 = vector.extract_strided_slice %57 {offsets = [0, 256], sizes = [8, 128], strides = [1, 1]} : vector<8x384xf32> to vector<8x128xf32>
      %61 = vector.extract_strided_slice %51 {offsets = [0, 384], sizes = [8, 128], strides = [1, 1]} : vector<8x512xf32> to vector<8x128xf32>
      %62 = math.tanh %61 : vector<8x128xf32>
      %63 = arith.mulf %59, %42 : vector<8x128xf32>
      %64 = arith.mulf %58, %62 : vector<8x128xf32>
      %65 = arith.addf %63, %64 : vector<8x128xf32>
      %66 = math.tanh %65 : vector<8x128xf32>
      %67 = arith.mulf %60, %66 : vector<8x128xf32>
      %c2_i32_30 = arith.constant 2 : i32
      %c8_i32_31 = arith.constant 8 : i32
      %68 = arith.muli %c2_i32_30, %c8_i32_31 : i32
      %69 = tpu.assume_multiple %68, 8 : i32
      %70 = arith.index_cast %69 : i32 to index
      %c0_32 = arith.constant 0 : index
      %71 = vector.load %arg16[%70, %c0_32] : memref<32x512xf32, #tpu.memory_space<vmem>>, vector<8x512xf32>
      %c0_33 = arith.constant 0 : index
      %c0_34 = arith.constant 0 : index
      %72 = vector.load %arg3[%c0_33, %c0_34] : memref<128x512xf32, #tpu.memory_space<vmem>>, vector<128x512xf32>
      %cst_35 = arith.constant dense<0.000000e+00> : vector<8x512xf32>
      %73 = tpu.matmul %67, %72, %cst_35 {dimension_numbers = #tpu.dot_dimension_numbers<[1], [0], [0], [1], [0, 0, 1, 1], [], []>} : vector<8x128xf32>, vector<128x512xf32>, vector<8x512xf32> -> vector<8x512xf32>
      %74 = arith.addf %71, %73 : vector<8x512xf32>
      %75 = vector.extract_strided_slice %74 {offsets = [0, 0], sizes = [8, 384], strides = [1, 1]} : vector<8x512xf32> to vector<8x384xf32>
      %76 = arith.negf %75 : vector<8x384xf32>
      %77 = math.exp %76 : vector<8x384xf32>
      %cst_36 = arith.constant 1.000000e+00 : f32
      %78 = vector.broadcast %cst_36 : f32 to vector<8x384xf32>
      %79 = arith.addf %78, %77 : vector<8x384xf32>
      %80 = arith.divf %78, %79 : vector<8x384xf32>
      %81 = vector.extract_strided_slice %80 {offsets = [0, 0], sizes = [8, 128], strides = [1, 1]} : vector<8x384xf32> to vector<8x128xf32>
      %82 = vector.extract_strided_slice %80 {offsets = [0, 128], sizes = [8, 128], strides = [1, 1]} : vector<8x384xf32> to vector<8x128xf32>
      %83 = vector.extract_strided_slice %80 {offsets = [0, 256], sizes = [8, 128], strides = [1, 1]} : vector<8x384xf32> to vector<8x128xf32>
      %84 = vector.extract_strided_slice %74 {offsets = [0, 384], sizes = [8, 128], strides = [1, 1]} : vector<8x512xf32> to vector<8x128xf32>
      %85 = math.tanh %84 : vector<8x128xf32>
      %86 = arith.mulf %82, %65 : vector<8x128xf32>
      %87 = arith.mulf %81, %85 : vector<8x128xf32>
      %88 = arith.addf %86, %87 : vector<8x128xf32>
      %89 = math.tanh %88 : vector<8x128xf32>
      %90 = arith.mulf %83, %89 : vector<8x128xf32>
      %c3_i32 = arith.constant 3 : i32
      %c8_i32_37 = arith.constant 8 : i32
      %91 = arith.muli %c3_i32, %c8_i32_37 : i32
      %92 = tpu.assume_multiple %91, 8 : i32
      %93 = arith.index_cast %92 : i32 to index
      %c0_38 = arith.constant 0 : index
      %94 = vector.load %arg16[%93, %c0_38] : memref<32x512xf32, #tpu.memory_space<vmem>>, vector<8x512xf32>
      %c0_39 = arith.constant 0 : index
      %c0_40 = arith.constant 0 : index
      %95 = vector.load %arg3[%c0_39, %c0_40] : memref<128x512xf32, #tpu.memory_space<vmem>>, vector<128x512xf32>
      %cst_41 = arith.constant dense<0.000000e+00> : vector<8x512xf32>
      %96 = tpu.matmul %90, %95, %cst_41 {dimension_numbers = #tpu.dot_dimension_numbers<[1], [0], [0], [1], [0, 0, 1, 1], [], []>} : vector<8x128xf32>, vector<128x512xf32>, vector<8x512xf32> -> vector<8x512xf32>
      %97 = arith.addf %94, %96 : vector<8x512xf32>
      %98 = vector.extract_strided_slice %97 {offsets = [0, 0], sizes = [8, 384], strides = [1, 1]} : vector<8x512xf32> to vector<8x384xf32>
      %99 = arith.negf %98 : vector<8x384xf32>
      %100 = math.exp %99 : vector<8x384xf32>
      %cst_42 = arith.constant 1.000000e+00 : f32
      %101 = vector.broadcast %cst_42 : f32 to vector<8x384xf32>
      %102 = arith.addf %101, %100 : vector<8x384xf32>
      %103 = arith.divf %101, %102 : vector<8x384xf32>
      %104 = vector.extract_strided_slice %103 {offsets = [0, 0], sizes = [8, 128], strides = [1, 1]} : vector<8x384xf32> to vector<8x128xf32>
      %105 = vector.extract_strided_slice %103 {offsets = [0, 128], sizes = [8, 128], strides = [1, 1]} : vector<8x384xf32> to vector<8x128xf32>
      %106 = vector.extract_strided_slice %103 {offsets = [0, 256], sizes = [8, 128], strides = [1, 1]} : vector<8x384xf32> to vector<8x128xf32>
      %107 = vector.extract_strided_slice %97 {offsets = [0, 384], sizes = [8, 128], strides = [1, 1]} : vector<8x512xf32> to vector<8x128xf32>
      %108 = math.tanh %107 : vector<8x128xf32>
      %109 = arith.mulf %105, %88 : vector<8x128xf32>
      %110 = arith.mulf %104, %108 : vector<8x128xf32>
      %111 = arith.addf %109, %110 : vector<8x128xf32>
      %112 = math.tanh %111 : vector<8x128xf32>
      %113 = arith.mulf %106, %112 : vector<8x128xf32>
      %c4_i32 = arith.constant 4 : i32
      %c0_43 = arith.constant 0 : index
      %c0_44 = arith.constant 0 : index
      %114 = vector.load %arg14[%c0_43, %c0_44] : memref<8x128xf32, #tpu.memory_space<vmem>>, vector<8x128xf32>
      tpu.vector_store %arg14[%c0_43, %c0_44], %113 {strides = array<i32>} : memref<8x128xf32, #tpu.memory_space<vmem>>, vector<8x128xf32>,
      %c0_45 = arith.constant 0 : index
      %c0_46 = arith.constant 0 : index
      %115 = vector.load %arg15[%c0_45, %c0_46] : memref<8x128xf32, #tpu.memory_space<vmem>>, vector<8x128xf32>
      tpu.vector_store %arg15[%c0_45, %c0_46], %111 {strides = array<i32>} : memref<8x128xf32, #tpu.memory_space<vmem>>, vector<8x128xf32>,
    } else {
    }
    %c2_i32_10 = arith.constant 2 : i32
    %14 = arith.cmpi eq, %arg0, %c2_i32_10 : i32
    %15 = arith.extui %14 : i1 to i32
    %c0_i32_11 = arith.constant 0 : i32
    %16 = arith.cmpi ne, %15, %c0_i32_11 : i32
    scf.if %16 {
      %c0_14 = arith.constant 0 : index
      %c0_15 = arith.constant 0 : index
      %20 = vector.load %arg14[%c0_14, %c0_15] : memref<8x128xf32, #tpu.memory_space<vmem>>, vector<8x128xf32>
      %c0_16 = arith.constant 0 : index
      %c0_17 = arith.constant 0 : index
      %21 = vector.load %arg15[%c0_16, %c0_17] : memref<8x128xf32, #tpu.memory_space<vmem>>, vector<8x128xf32>
      %c0_i32_18 = arith.constant 0 : i32
      %c8_i32 = arith.constant 8 : i32
      %22 = arith.muli %c0_i32_18, %c8_i32 : i32
      %23 = tpu.assume_multiple %22, 8 : i32
      %24 = arith.index_cast %23 : i32 to index
      %c0_19 = arith.constant 0 : index
      %25 = vector.load %arg16[%24, %c0_19] : memref<32x512xf32, #tpu.memory_space<vmem>>, vector<8x512xf32>
      %c0_20 = arith.constant 0 : index
      %c0_21 = arith.constant 0 : index
      %26 = vector.load %arg3[%c0_20, %c0_21] : memref<128x512xf32, #tpu.memory_space<vmem>>, vector<128x512xf32>
      %cst_22 = arith.constant dense<0.000000e+00> : vector<8x512xf32>
      %27 = tpu.matmul %20, %26, %cst_22 {dimension_numbers = #tpu.dot_dimension_numbers<[1], [0], [0], [1], [0, 0, 1, 1], [], []>} : vector<8x128xf32>, vector<128x512xf32>, vector<8x512xf32> -> vector<8x512xf32>
      %28 = arith.addf %25, %27 : vector<8x512xf32>
      %29 = vector.extract_strided_slice %28 {offsets = [0, 0], sizes = [8, 384], strides = [1, 1]} : vector<8x512xf32> to vector<8x384xf32>
      %30 = arith.negf %29 : vector<8x384xf32>
      %31 = math.exp %30 : vector<8x384xf32>
      %cst_23 = arith.constant 1.000000e+00 : f32
      %32 = vector.broadcast %cst_23 : f32 to vector<8x384xf32>
      %33 = arith.addf %32, %31 : vector<8x384xf32>
      %34 = arith.divf %32, %33 : vector<8x384xf32>
      %35 = vector.extract_strided_slice %34 {offsets = [0, 0], sizes = [8, 128], strides = [1, 1]} : vector<8x384xf32> to vector<8x128xf32>
      %36 = vector.extract_strided_slice %34 {offsets = [0, 128], sizes = [8, 128], strides = [1, 1]} : vector<8x384xf32> to vector<8x128xf32>
      %37 = vector.extract_strided_slice %34 {offsets = [0, 256], sizes = [8, 128], strides = [1, 1]} : vector<8x384xf32> to vector<8x128xf32>
      %38 = vector.extract_strided_slice %28 {offsets = [0, 384], sizes = [8, 128], strides = [1, 1]} : vector<8x512xf32> to vector<8x128xf32>
      %39 = math.tanh %38 : vector<8x128xf32>
      %40 = arith.mulf %36, %21 : vector<8x128xf32>
      %41 = arith.mulf %35, %39 : vector<8x128xf32>
      %42 = arith.addf %40, %41 : vector<8x128xf32>
      %43 = math.tanh %42 : vector<8x128xf32>
      %44 = arith.mulf %37, %43 : vector<8x128xf32>
      %c4_i32 = arith.constant 4 : i32
      %45 = arith.muli %arg0, %c4_i32 : i32
      %46 = arith.addi %45, %c0_i32_18 : i32
      %c10_i32 = arith.constant 10 : i32
      %47 = arith.cmpi slt, %46, %c10_i32 : i32
      %48 = arith.select %47, %44, %20 : vector<8x128xf32>
      %49 = arith.select %47, %42, %21 : vector<8x128xf32>
      %c1_i32 = arith.constant 1 : i32
      %c8_i32_24 = arith.constant 8 : i32
      %50 = arith.muli %c1_i32, %c8_i32_24 : i32
      %51 = tpu.assume_multiple %50, 8 : i32
      %52 = arith.index_cast %51 : i32 to index
      %c0_25 = arith.constant 0 : index
      %53 = vector.load %arg16[%52, %c0_25] : memref<32x512xf32, #tpu.memory_space<vmem>>, vector<8x512xf32>
      %c0_26 = arith.constant 0 : index
      %c0_27 = arith.constant 0 : index
      %54 = vector.load %arg3[%c0_26, %c0_27] : memref<128x512xf32, #tpu.memory_space<vmem>>, vector<128x512xf32>
      %cst_28 = arith.constant dense<0.000000e+00> : vector<8x512xf32>
      %55 = tpu.matmul %48, %54, %cst_28 {dimension_numbers = #tpu.dot_dimension_numbers<[1], [0], [0], [1], [0, 0, 1, 1], [], []>} : vector<8x128xf32>, vector<128x512xf32>, vector<8x512xf32> -> vector<8x512xf32>
      %56 = arith.addf %53, %55 : vector<8x512xf32>
      %57 = vector.extract_strided_slice %56 {offsets = [0, 0], sizes = [8, 384], strides = [1, 1]} : vector<8x512xf32> to vector<8x384xf32>
      %58 = arith.negf %57 : vector<8x384xf32>
      %59 = math.exp %58 : vector<8x384xf32>
      %cst_29 = arith.constant 1.000000e+00 : f32
      %60 = vector.broadcast %cst_29 : f32 to vector<8x384xf32>
      %61 = arith.addf %60, %59 : vector<8x384xf32>
      %62 = arith.divf %60, %61 : vector<8x384xf32>
      %63 = vector.extract_strided_slice %62 {offsets = [0, 0], sizes = [8, 128], strides = [1, 1]} : vector<8x384xf32> to vector<8x128xf32>
      %64 = vector.extract_strided_slice %62 {offsets = [0, 128], sizes = [8, 128], strides = [1, 1]} : vector<8x384xf32> to vector<8x128xf32>
      %65 = vector.extract_strided_slice %62 {offsets = [0, 256], sizes = [8, 128], strides = [1, 1]} : vector<8x384xf32> to vector<8x128xf32>
      %66 = vector.extract_strided_slice %56 {offsets = [0, 384], sizes = [8, 128], strides = [1, 1]} : vector<8x512xf32> to vector<8x128xf32>
      %67 = math.tanh %66 : vector<8x128xf32>
      %68 = arith.mulf %64, %49 : vector<8x128xf32>
      %69 = arith.mulf %63, %67 : vector<8x128xf32>
      %70 = arith.addf %68, %69 : vector<8x128xf32>
      %71 = math.tanh %70 : vector<8x128xf32>
      %72 = arith.mulf %65, %71 : vector<8x128xf32>
      %c4_i32_30 = arith.constant 4 : i32
      %73 = arith.muli %arg0, %c4_i32_30 : i32
      %74 = arith.addi %73, %c1_i32 : i32
      %c10_i32_31 = arith.constant 10 : i32
      %75 = arith.cmpi slt, %74, %c10_i32_31 : i32
      %76 = arith.select %75, %72, %48 : vector<8x128xf32>
      %77 = arith.select %75, %70, %49 : vector<8x128xf32>
      %c2_i32_32 = arith.constant 2 : i32
      %c8_i32_33 = arith.constant 8 : i32
      %78 = arith.muli %c2_i32_32, %c8_i32_33 : i32
      %79 = tpu.assume_multiple %78, 8 : i32
      %80 = arith.index_cast %79 : i32 to index
      %c0_34 = arith.constant 0 : index
      %81 = vector.load %arg16[%80, %c0_34] : memref<32x512xf32, #tpu.memory_space<vmem>>, vector<8x512xf32>
      %c0_35 = arith.constant 0 : index
      %c0_36 = arith.constant 0 : index
      %82 = vector.load %arg3[%c0_35, %c0_36] : memref<128x512xf32, #tpu.memory_space<vmem>>, vector<128x512xf32>
      %cst_37 = arith.constant dense<0.000000e+00> : vector<8x512xf32>
      %83 = tpu.matmul %76, %82, %cst_37 {dimension_numbers = #tpu.dot_dimension_numbers<[1], [0], [0], [1], [0, 0, 1, 1], [], []>} : vector<8x128xf32>, vector<128x512xf32>, vector<8x512xf32> -> vector<8x512xf32>
      %84 = arith.addf %81, %83 : vector<8x512xf32>
      %85 = vector.extract_strided_slice %84 {offsets = [0, 0], sizes = [8, 384], strides = [1, 1]} : vector<8x512xf32> to vector<8x384xf32>
      %86 = arith.negf %85 : vector<8x384xf32>
      %87 = math.exp %86 : vector<8x384xf32>
      %cst_38 = arith.constant 1.000000e+00 : f32
      %88 = vector.broadcast %cst_38 : f32 to vector<8x384xf32>
      %89 = arith.addf %88, %87 : vector<8x384xf32>
      %90 = arith.divf %88, %89 : vector<8x384xf32>
      %91 = vector.extract_strided_slice %90 {offsets = [0, 0], sizes = [8, 128], strides = [1, 1]} : vector<8x384xf32> to vector<8x128xf32>
      %92 = vector.extract_strided_slice %90 {offsets = [0, 128], sizes = [8, 128], strides = [1, 1]} : vector<8x384xf32> to vector<8x128xf32>
      %93 = vector.extract_strided_slice %90 {offsets = [0, 256], sizes = [8, 128], strides = [1, 1]} : vector<8x384xf32> to vector<8x128xf32>
      %94 = vector.extract_strided_slice %84 {offsets = [0, 384], sizes = [8, 128], strides = [1, 1]} : vector<8x512xf32> to vector<8x128xf32>
      %95 = math.tanh %94 : vector<8x128xf32>
      %96 = arith.mulf %92, %77 : vector<8x128xf32>
      %97 = arith.mulf %91, %95 : vector<8x128xf32>
      %98 = arith.addf %96, %97 : vector<8x128xf32>
      %99 = math.tanh %98 : vector<8x128xf32>
      %100 = arith.mulf %93, %99 : vector<8x128xf32>
      %c4_i32_39 = arith.constant 4 : i32
      %101 = arith.muli %arg0, %c4_i32_39 : i32
      %102 = arith.addi %101, %c2_i32_32 : i32
      %c10_i32_40 = arith.constant 10 : i32
      %103 = arith.cmpi slt, %102, %c10_i32_40 : i32
      %104 = arith.select %103, %100, %76 : vector<8x128xf32>
      %105 = arith.select %103, %98, %77 : vector<8x128xf32>
      %c3_i32 = arith.constant 3 : i32
      %c8_i32_41 = arith.constant 8 : i32
      %106 = arith.muli %c3_i32, %c8_i32_41 : i32
      %107 = tpu.assume_multiple %106, 8 : i32
      %108 = arith.index_cast %107 : i32 to index
      %c0_42 = arith.constant 0 : index
      %109 = vector.load %arg16[%108, %c0_42] : memref<32x512xf32, #tpu.memory_space<vmem>>, vector<8x512xf32>
      %c0_43 = arith.constant 0 : index
      %c0_44 = arith.constant 0 : index
      %110 = vector.load %arg3[%c0_43, %c0_44] : memref<128x512xf32, #tpu.memory_space<vmem>>, vector<128x512xf32>
      %cst_45 = arith.constant dense<0.000000e+00> : vector<8x512xf32>
      %111 = tpu.matmul %104, %110, %cst_45 {dimension_numbers = #tpu.dot_dimension_numbers<[1], [0], [0], [1], [0, 0, 1, 1], [], []>} : vector<8x128xf32>, vector<128x512xf32>, vector<8x512xf32> -> vector<8x512xf32>
      %112 = arith.addf %109, %111 : vector<8x512xf32>
      %113 = vector.extract_strided_slice %112 {offsets = [0, 0], sizes = [8, 384], strides = [1, 1]} : vector<8x512xf32> to vector<8x384xf32>
      %114 = arith.negf %113 : vector<8x384xf32>
      %115 = math.exp %114 : vector<8x384xf32>
      %cst_46 = arith.constant 1.000000e+00 : f32
      %116 = vector.broadcast %cst_46 : f32 to vector<8x384xf32>
      %117 = arith.addf %116, %115 : vector<8x384xf32>
      %118 = arith.divf %116, %117 : vector<8x384xf32>
      %119 = vector.extract_strided_slice %118 {offsets = [0, 0], sizes = [8, 128], strides = [1, 1]} : vector<8x384xf32> to vector<8x128xf32>
      %120 = vector.extract_strided_slice %118 {offsets = [0, 128], sizes = [8, 128], strides = [1, 1]} : vector<8x384xf32> to vector<8x128xf32>
      %121 = vector.extract_strided_slice %118 {offsets = [0, 256], sizes = [8, 128], strides = [1, 1]} : vector<8x384xf32> to vector<8x128xf32>
      %122 = vector.extract_strided_slice %112 {offsets = [0, 384], sizes = [8, 128], strides = [1, 1]} : vector<8x512xf32> to vector<8x128xf32>
      %123 = math.tanh %122 : vector<8x128xf32>
      %124 = arith.mulf %120, %105 : vector<8x128xf32>
      %125 = arith.mulf %119, %123 : vector<8x128xf32>
      %126 = arith.addf %124, %125 : vector<8x128xf32>
      %127 = math.tanh %126 : vector<8x128xf32>
      %128 = arith.mulf %121, %127 : vector<8x128xf32>
      %c4_i32_47 = arith.constant 4 : i32
      %129 = arith.muli %arg0, %c4_i32_47 : i32
      %130 = arith.addi %129, %c3_i32 : i32
      %c10_i32_48 = arith.constant 10 : i32
      %131 = arith.cmpi slt, %130, %c10_i32_48 : i32
      %132 = arith.select %131, %128, %104 : vector<8x128xf32>
      %133 = arith.select %131, %126, %105 : vector<8x128xf32>
      %c4_i32_49 = arith.constant 4 : i32
      %c0_50 = arith.constant 0 : index
      %c0_51 = arith.constant 0 : index
      %134 = vector.load %arg14[%c0_50, %c0_51] : memref<8x128xf32, #tpu.memory_space<vmem>>, vector<8x128xf32>
      tpu.vector_store %arg14[%c0_50, %c0_51], %132 {strides = array<i32>} : memref<8x128xf32, #tpu.memory_space<vmem>>, vector<8x128xf32>,
      %c0_52 = arith.constant 0 : index
      %c0_53 = arith.constant 0 : index
      %135 = vector.load %arg15[%c0_52, %c0_53] : memref<8x128xf32, #tpu.memory_space<vmem>>, vector<8x128xf32>
      tpu.vector_store %arg15[%c0_52, %c0_53], %133 {strides = array<i32>} : memref<8x128xf32, #tpu.memory_space<vmem>>, vector<8x128xf32>,
    } else {
    }
    %c2_i32_12 = arith.constant 2 : i32
    %17 = arith.cmpi eq, %arg0, %c2_i32_12 : i32
    %18 = arith.extui %17 : i1 to i32
    %c0_i32_13 = arith.constant 0 : i32
    %19 = arith.cmpi ne, %18, %c0_i32_13 : i32
    scf.if %19 {
      %c0_14 = arith.constant 0 : index
      %c0_15 = arith.constant 0 : index
      %20 = vector.load %arg14[%c0_14, %c0_15] : memref<8x128xf32, #tpu.memory_space<vmem>>, vector<8x128xf32>
      %c0_16 = arith.constant 0 : index
      %c0_17 = arith.constant 0 : index
      %21 = vector.load %arg5[%c0_16, %c0_17] : memref<128x128xf32, #tpu.memory_space<vmem>>, vector<128x128xf32>
      %cst_18 = arith.constant dense<0.000000e+00> : vector<8x128xf32>
      %22 = tpu.matmul %20, %21, %cst_18 {dimension_numbers = #tpu.dot_dimension_numbers<[1], [0], [0], [1], [0, 0, 1, 1], [], []>} : vector<8x128xf32>, vector<128x128xf32>, vector<8x128xf32> -> vector<8x128xf32>
      %c0_19 = arith.constant 0 : index
      %c0_20 = arith.constant 0 : index
      %23 = vector.load %arg6[%c0_19, %c0_20] : memref<1x128xf32, #tpu.memory_space<vmem>>, vector<1x128xf32>
      %24 = vector.broadcast %23 : vector<1x128xf32> to vector<8x128xf32>
      %25 = arith.addf %22, %24 : vector<8x128xf32>
      %cst_21 = arith.constant 0.000000e+00 : f32
      %26 = vector.broadcast %cst_21 : f32 to vector<8x128xf32>
      %27 = arith.maximumf %25, %26 : vector<8x128xf32>
      %c0_22 = arith.constant 0 : index
      %c0_23 = arith.constant 0 : index
      %28 = vector.load %arg7[%c0_22, %c0_23] : memref<128x128xf32, #tpu.memory_space<vmem>>, vector<128x128xf32>
      %cst_24 = arith.constant dense<0.000000e+00> : vector<8x128xf32>
      %29 = tpu.matmul %27, %28, %cst_24 {dimension_numbers = #tpu.dot_dimension_numbers<[1], [0], [0], [1], [0, 0, 1, 1], [], []>} : vector<8x128xf32>, vector<128x128xf32>, vector<8x128xf32> -> vector<8x128xf32>
      %c0_25 = arith.constant 0 : index
      %c0_26 = arith.constant 0 : index
      %30 = vector.load %arg8[%c0_25, %c0_26] : memref<1x128xf32, #tpu.memory_space<vmem>>, vector<1x128xf32>
      %31 = vector.broadcast %30 : vector<1x128xf32> to vector<8x128xf32>
      %32 = arith.addf %29, %31 : vector<8x128xf32>
      %cst_27 = arith.constant 0.000000e+00 : f32
      %33 = vector.broadcast %cst_27 : f32 to vector<8x128xf32>
      %34 = arith.maximumf %32, %33 : vector<8x128xf32>
      %c0_28 = arith.constant 0 : index
      %c0_29 = arith.constant 0 : index
      %35 = vector.load %arg9[%c0_28, %c0_29] : memref<128x128xf32, #tpu.memory_space<vmem>>, vector<128x128xf32>
      %cst_30 = arith.constant dense<0.000000e+00> : vector<8x128xf32>
      %36 = tpu.matmul %34, %35, %cst_30 {dimension_numbers = #tpu.dot_dimension_numbers<[1], [0], [0], [1], [0, 0, 1, 1], [], []>} : vector<8x128xf32>, vector<128x128xf32>, vector<8x128xf32> -> vector<8x128xf32>
      %c0_31 = arith.constant 0 : index
      %c0_32 = arith.constant 0 : index
      %37 = vector.load %arg10[%c0_31, %c0_32] : memref<1x128xf32, #tpu.memory_space<vmem>>, vector<1x128xf32>
      %38 = vector.broadcast %37 : vector<1x128xf32> to vector<8x128xf32>
      %39 = arith.addf %36, %38 : vector<8x128xf32>
      %cst_33 = arith.constant 0.000000e+00 : f32
      %40 = vector.broadcast %cst_33 : f32 to vector<8x128xf32>
      %41 = arith.maximumf %39, %40 : vector<8x128xf32>
      %c0_34 = arith.constant 0 : index
      %c0_35 = arith.constant 0 : index
      %42 = vector.load %arg11[%c0_34, %c0_35] : memref<128x128xf32, #tpu.memory_space<vmem>>, vector<128x128xf32>
      %cst_36 = arith.constant dense<0.000000e+00> : vector<8x128xf32>
      %43 = tpu.matmul %41, %42, %cst_36 {dimension_numbers = #tpu.dot_dimension_numbers<[1], [0], [0], [1], [0, 0, 1, 1], [], []>} : vector<8x128xf32>, vector<128x128xf32>, vector<8x128xf32> -> vector<8x128xf32>
      %c0_37 = arith.constant 0 : index
      %c0_38 = arith.constant 0 : index
      %44 = vector.load %arg12[%c0_37, %c0_38] : memref<1x128xf32, #tpu.memory_space<vmem>>, vector<1x128xf32>
      %45 = vector.broadcast %44 : vector<1x128xf32> to vector<8x128xf32>
      %46 = arith.addf %43, %45 : vector<8x128xf32>
      %c0_39 = arith.constant 0 : index
      %c0_40 = arith.constant 0 : index
      %47 = vector.load %arg13[%c0_39, %c0_40] : memref<8x128xf32, #tpu.memory_space<vmem>>, vector<8x128xf32>
      tpu.vector_store %arg13[%c0_39, %c0_40], %46 {strides = array<i32>} : memref<8x128xf32, #tpu.memory_space<vmem>>, vector<8x128xf32>,
    } else {
    }
    return
  }
  func.func @transform_0(%arg0: i32) -> (i32, i32, i32) {
    %c0_i32 = arith.constant 0 : i32
    %c0_i32_0 = arith.constant 0 : i32
    %c0_i32_1 = arith.constant 0 : i32
    return %arg0, %c0_i32, %c0_i32_0 : i32, i32, i32
  }
  func.func @transform_1(%arg0: i32) -> (i32, i32) {
    %c0_i32 = arith.constant 0 : i32
    %c0_i32_0 = arith.constant 0 : i32
    %c0_i32_1 = arith.constant 0 : i32
    return %c0_i32, %c0_i32_0 : i32, i32
  }
  func.func @transform_2(%arg0: i32) -> (i32, i32) {
    %c0_i32 = arith.constant 0 : i32
    %c0_i32_0 = arith.constant 0 : i32
    %c0_i32_1 = arith.constant 0 : i32
    return %c0_i32, %c0_i32_0 : i32, i32
  }
  func.func @transform_3(%arg0: i32) -> (i32, i32) {
    %c0_i32 = arith.constant 0 : i32
    %c0_i32_0 = arith.constant 0 : i32
    %c0_i32_1 = arith.constant 0 : i32
    return %c0_i32, %c0_i32_0 : i32, i32
  }
  func.func @transform_4(%arg0: i32) -> (i32, i32) {
    %c0_i32 = arith.constant 0 : i32
    %c0_i32_0 = arith.constant 0 : i32
    %c0_i32_1 = arith.constant 0 : i32
    return %c0_i32, %c0_i32_0 : i32, i32
  }
  func.func @transform_5(%arg0: i32) -> (i32, i32) {
    %c0_i32 = arith.constant 0 : i32
    %c0_i32_0 = arith.constant 0 : i32
    %c0_i32_1 = arith.constant 0 : i32
    return %c0_i32, %c0_i32_0 : i32, i32
  }
  func.func @transform_6(%arg0: i32) -> (i32, i32) {
    %c0_i32 = arith.constant 0 : i32
    %c0_i32_0 = arith.constant 0 : i32
    %c0_i32_1 = arith.constant 0 : i32
    return %c0_i32, %c0_i32_0 : i32, i32
  }
  func.func @transform_7(%arg0: i32) -> (i32, i32) {
    %c0_i32 = arith.constant 0 : i32
    %c0_i32_0 = arith.constant 0 : i32
    %c0_i32_1 = arith.constant 0 : i32
    return %c0_i32, %c0_i32_0 : i32, i32
  }
  func.func @transform_8(%arg0: i32) -> (i32, i32) {
    %c0_i32 = arith.constant 0 : i32
    %c0_i32_0 = arith.constant 0 : i32
    %c0_i32_1 = arith.constant 0 : i32
    return %c0_i32, %c0_i32_0 : i32, i32
  }
  func.func @transform_9(%arg0: i32) -> (i32, i32) {
    %c0_i32 = arith.constant 0 : i32
    %c0_i32_0 = arith.constant 0 : i32
    %c0_i32_1 = arith.constant 0 : i32
    return %c0_i32, %c0_i32_0 : i32, i32
  }
  func.func @transform_10(%arg0: i32) -> (i32, i32) {
    %c0_i32 = arith.constant 0 : i32
    %c0_i32_0 = arith.constant 0 : i32
    %c0_i32_1 = arith.constant 0 : i32
    return %c0_i32, %c0_i32_0 : i32, i32
  }
  func.func @transform_11(%arg0: i32) -> (i32, i32) {
    %c0_i32 = arith.constant 0 : i32
    %c0_i32_0 = arith.constant 0 : i32
    %c0_i32_1 = arith.constant 0 : i32
    return %c0_i32, %c0_i32_0 : i32, i32
  }
  func.func @transform_12(%arg0: i32) -> (i32, i32) {
    %c0_i32 = arith.constant 0 : i32
    %c0_i32_0 = arith.constant 0 : i32
    %c0_i32_1 = arith.constant 0 : i32
    return %c0_i32, %c0_i32_0 : i32, i32
  }
}

</mosaic_0001>

<llo_original>
// kernel: tpu_custom_call.1
$region0: #{tpu_custom_call.1}
  #allocation0 [shape = 'u32[]', space=smem, size = 0x4, offset = 0x4, fixed_abs, tag = 'smem constant byte address 0x4 - core index']
  #allocation1 [shape = 'u32[144,128]{1,0:T(1,128)}', space=vmem, size = 0x12000, scoped, tag = 'internal scratch']
  #allocation2 [shape = 'f32[8,128]{1,0:T(8,128)}', space=vmem, size = 0x1000, scoped, tag = 'scratch operand']
  #allocation3 [shape = 'f32[8,128]{1,0:T(8,128)}', space=vmem, size = 0x1000, scoped, tag = 'scratch operand']
  #allocation4 [shape = 'f32[32,512]{1,0:T(8,128)}', space=vmem, size = 0x10000, scoped, tag = 'scratch operand']
  %s0 = inlined_call_operand.hbm [shape: f32[12,8,128], index: 0, kind: input, shape index: {}]
  %s1 = inlined_call_operand.hbm [shape: f32[128,512], index: 1, kind: input, shape index: {}]
  %s2 = inlined_call_operand.hbm [shape: f32[128,512], index: 2, kind: input, shape index: {}]
  %s3 = inlined_call_operand.vmem [shape: f32[1,512], index: 3, kind: input, shape index: {}]
  %s4 = inlined_call_operand.hbm [shape: f32[128,128], index: 4, kind: input, shape index: {}]
  %s5 = inlined_call_operand.vmem [shape: f32[1,128], index: 5, kind: input, shape index: {}]
  %s6 = inlined_call_operand.hbm [shape: f32[128,128], index: 6, kind: input, shape index: {}]
  %s7 = inlined_call_operand.vmem [shape: f32[1,128], index: 7, kind: input, shape index: {}]
  %s8 = inlined_call_operand.hbm [shape: f32[128,128], index: 8, kind: input, shape index: {}]
  %s9 = inlined_call_operand.vmem [shape: f32[1,128], index: 9, kind: input, shape index: {}]
  %s10 = inlined_call_operand.hbm [shape: f32[128,128], index: 10, kind: input, shape index: {}]
  %s11 = inlined_call_operand.vmem [shape: f32[1,128], index: 11, kind: input, shape index: {}]
  %s12 = inlined_call_operand.hbm [shape: f32[8,128], index: 12, kind: output, shape index: {}]
  %s13 = sld [smem:[#allocation0]]
  $region121: #{tpu_custom_call.1} parent=0
    _
  %s15 = ssub.s32 1, %s13
  %s16 = scalar_select 0, %s15, %s13
  $region1: #{tpu_custom_call.1} parent=0
    #allocation5 [shape = 'u8[32768]{0}', space=vmem, size = 0x8000, scoped, tag = 'input window, operand 0']
    #allocation6 [shape = 's32[2]{0}', space=sflag, size = 0x8, scoped, tag = 'scoped memory for tpu_custom_call.1']
    #allocation7 [shape = 's32[2]{0}', space=sflag, size = 0x8, scoped, tag = 'scoped memory for tpu_custom_call.1']
    #allocation8 [shape = 'u8[262144]{0}', space=vmem, size = 0x40000, scoped, tag = 'input window, operand 1, single buffered']
    #allocation9 [shape = 's32[1]{0}', space=sflag, size = 0x4, scoped, tag = 'scoped memory for tpu_custom_call.1']
    #allocation10 [shape = 'u8[262144]{0}', space=vmem, size = 0x40000, scoped, tag = 'input window, operand 2, single buffered']
    #allocation11 [shape = 'u8[65536]{0}', space=vmem, size = 0x10000, scoped, tag = 'input window, operand 4, single buffered']
    #allocation12 [shape = 's32[1]{0}', space=sflag, size = 0x4, scoped, tag = 'scoped memory for tpu_custom_call.1']
    #allocation13 [shape = 'u8[65536]{0}', space=vmem, size = 0x10000, scoped, tag = 'input window, operand 6, single buffered']
    #allocation14 [shape = 'u8[65536]{0}', space=vmem, size = 0x10000, scoped, tag = 'input window, operand 8, single buffered']
    #allocation15 [shape = 's32[1]{0}', space=sflag, size = 0x4, scoped, tag = 'scoped memory for tpu_custom_call.1']
    #allocation16 [shape = 'u8[65536]{0}', space=vmem, size = 0x10000, scoped, tag = 'input window, operand 10, single buffered']
    #allocation17 [shape = 'u8[4096]{0}', space=vmem, size = 0x1000, scoped, tag = 'output window, operand 0, single buffered']
    %17 = vsyncpa [#allocation6], 0
    %s18 = scalar_lea.sflag [#allocation6], 1
    %19 = vsyncpa %s18, 0
    %20 = vsyncpa [#allocation9], 0
    %21 = vsyncpa [#allocation12], 0
    %22 = vsyncpa [#allocation15], 0
    %23 = vsyncpa [#allocation7], 0
    loop: start=0, step=1, limit=5
    $region2: #{tpu_custom_call.1} parent=1 // loop_pre_header
      _
    $region3: #{tpu_custom_call.1} parent=1 // loop_header
      %s25 = sphi 0, %s29
      %p26 = scmp.ge.s32.totalorder %s25, 5
      %s35 = sphi 0, %s37
      %s38 = sphi 0, %s35
      %s39 = sphi 0, %s38
      %s55 = sphi 0, %s39
      %s59 = sphi 0, %s59
      %s61 = sphi 0, %s59
      %s62 = sphi 0, %s61
      %s76 = sphi 0, %s62
      %s80 = sphi 0, %s80
      %s82 = sphi 0, %s80
      %s83 = sphi 0, %s82
      %s97 = sphi 0, %s83
      %s101 = sphi 0, %s101
      %s103 = sphi 0, %s101
      %s104 = sphi 0, %s103
      %s118 = sphi 0, %s104
      %s122 = sphi 0, %s122
      %s124 = sphi 0, %s122
      %s125 = sphi 0, %s124
      %s139 = sphi 0, %s125
      %s143 = sphi 0, %s143
      %s145 = sphi 0, %s143
      %s146 = sphi 0, %s145
      %s160 = sphi 0, %s146
      %s164 = sphi 0, %s164
      %s166 = sphi 0, %s164
      %s167 = sphi 0, %s166
      %s181 = sphi 0, %s167
      %s185 = sphi 0, %s185
      %s187 = sphi 0, %s185
      %s188 = sphi 0, %s187
      %s202 = sphi 0, %s188
      %s206 = sphi 0, %s206
      %s208 = sphi 0, %s206
      %s209 = sphi 0, %s208
      %s223 = sphi 0, %s209
      %s227 = sphi 0, %s227
      %s229 = sphi 0, %s227
      %s230 = sphi 0, %s229
      %s244 = sphi 0, %s230
      %s248 = sphi 0, %s248
      %s250 = sphi 0, %s248
      %s251 = sphi 0, %s250
      %s265 = sphi 0, %s251
      %s269 = sphi 0, %s269
      %s271 = sphi 0, %s269
      %s272 = sphi 0, %s271
      %s286 = sphi 0, %s272
      %s290 = sphi 0, %s290
      %s292 = sphi 0, %s290
      %s293 = sphi 0, %s292
      %s307 = sphi 0, %s293
    $region4: #{tpu_custom_call.1} parent=1 // loop_header_branch
      %28 = sbr.rel (%p26) target = $region8
    $region5: #{tpu_custom_call.1} parent=1 // loop_body
      %s30 = ssub.s32 %s25, 1
      %s31 = ssub.s32 %s25, 2
      %s32 = sadd.s32 %s25, 1
      %s33 = ssub.s32 %s25, %s32
      %p34 = scmp.eq.s32.totalorder %s33, 0
      %s36 = sadd.s32 %s35, 1
      %s37 = scalar_select %p34, %s35, %s36
      %p40 = pneg %p34
      %p41 = scmp.eq.s32.totalorder %s25, 2
      %p42 = por %p40, %p41
      %p43 = scmp.ne.s32.totalorder %s35, %s38
      %p44 = scmp.eq.s32.totalorder %s25, 0
      %p45 = por %p43, %p44
      %p46 = scmp.ne.s32.totalorder %s35, %s38
      %p47 = scmp.eq.s32.totalorder %s30, 2
      %p48 = por %p46, %p47
      %p49 = scmp.ne.s32.totalorder %s38, %s39
      %p50 = scmp.eq.s32.totalorder %s30, 0
      %p51 = por %p49, %p50
      %p52 = scmp.ne.s32.totalorder %s38, %s39
      %p53 = scmp.eq.s32.totalorder %s31, 2
      %p54 = por %p52, %p53
      %p56 = scmp.ne.s32.totalorder %s39, %s55
      %p57 = scmp.eq.s32.totalorder %s31, 0
      %p58 = por %p56, %p57
      %s60 = sadd.s32 %s59, 1
      %p63 = scmp.eq.s32.totalorder %s25, 2
      %p64 = scmp.ne.s32.totalorder %s59, %s61
      %p65 = scmp.eq.s32.totalorder %s25, 0
      %p66 = por %p64, %p65
      %p67 = scmp.ne.s32.totalorder %s59, %s61
      %p68 = scmp.eq.s32.totalorder %s30, 2
      %p69 = por %p67, %p68
      %p70 = scmp.ne.s32.totalorder %s61, %s62
      %p71 = scmp.eq.s32.totalorder %s30, 0
      %p72 = por %p70, %p71
      %p73 = scmp.ne.s32.totalorder %s61, %s62
      %p74 = scmp.eq.s32.totalorder %s31, 2
      %p75 = por %p73, %p74
      %p77 = scmp.ne.s32.totalorder %s62, %s76
      %p78 = scmp.eq.s32.totalorder %s31, 0
      %p79 = por %p77, %p78
      %s81 = sadd.s32 %s80, 1
      %p84 = scmp.eq.s32.totalorder %s25, 2
      %p85 = scmp.ne.s32.totalorder %s80, %s82
      %p86 = scmp.eq.s32.totalorder %s25, 0
      %p87 = por %p85, %p86
      %p88 = scmp.ne.s32.totalorder %s80, %s82
      %p89 = scmp.eq.s32.totalorder %s30, 2
      %p90 = por %p88, %p89
      %p91 = scmp.ne.s32.totalorder %s82, %s83
      %p92 = scmp.eq.s32.totalorder %s30, 0
      %p93 = por %p91, %p92
      %p94 = scmp.ne.s32.totalorder %s82, %s83
      %p95 = scmp.eq.s32.totalorder %s31, 2
      %p96 = por %p94, %p95
      %p98 = scmp.ne.s32.totalorder %s83, %s97
      %p99 = scmp.eq.s32.totalorder %s31, 0
      %p100 = por %p98, %p99
      %s102 = sadd.s32 %s101, 1
      %p105 = scmp.eq.s32.totalorder %s25, 2
      %p106 = scmp.ne.s32.totalorder %s101, %s103
      %p107 = scmp.eq.s32.totalorder %s25, 0
      %p108 = por %p106, %p107
      %p109 = scmp.ne.s32.totalorder %s101, %s103
      %p110 = scmp.eq.s32.totalorder %s30, 2
      %p111 = por %p109, %p110
      %p112 = scmp.ne.s32.totalorder %s103, %s104
      %p113 = scmp.eq.s32.totalorder %s30, 0
      %p114 = por %p112, %p113
      %p115 = scmp.ne.s32.totalorder %s103, %s104
      %p116 = scmp.eq.s32.totalorder %s31, 2
      %p117 = por %p115, %p116
      %p119 = scmp.ne.s32.totalorder %s104, %s118
      %p120 = scmp.eq.s32.totalorder %s31, 0
      %p121 = por %p119, %p120
      %s123 = sadd.s32 %s122, 1
      %p126 = scmp.eq.s32.totalorder %s25, 2
      %p127 = scmp.ne.s32.totalorder %s122, %s124
      %p128 = scmp.eq.s32.totalorder %s25, 0
      %p129 = por %p127, %p128
      %p130 = scmp.ne.s32.totalorder %s122, %s124
      %p131 = scmp.eq.s32.totalorder %s30, 2
      %p132 = por %p130, %p131
      %p133 = scmp.ne.s32.totalorder %s124, %s125
      %p134 = scmp.eq.s32.totalorder %s30, 0
      %p135 = por %p133, %p134
      %p136 = scmp.ne.s32.totalorder %s124, %s125
      %p137 = scmp.eq.s32.totalorder %s31, 2
      %p138 = por %p136, %p137
      %p140 = scmp.ne.s32.totalorder %s125, %s139
      %p141 = scmp.eq.s32.totalorder %s31, 0
      %p142 = por %p140, %p141
      %s144 = sadd.s32 %s143, 1
      %p147 = scmp.eq.s32.totalorder %s25, 2
      %p148 = scmp.ne.s32.totalorder %s143, %s145
      %p149 = scmp.eq.s32.totalorder %s25, 0
      %p150 = por %p148, %p149
      %p151 = scmp.ne.s32.totalorder %s143, %s145
      %p152 = scmp.eq.s32.totalorder %s30, 2
      %p153 = por %p151, %p152
      %p154 = scmp.ne.s32.totalorder %s145, %s146
      %p155 = scmp.eq.s32.totalorder %s30, 0
      %p156 = por %p154, %p155
      %p157 = scmp.ne.s32.totalorder %s145, %s146
      %p158 = scmp.eq.s32.totalorder %s31, 2
      %p159 = por %p157, %p158
      %p161 = scmp.ne.s32.totalorder %s146, %s160
      %p162 = scmp.eq.s32.totalorder %s31, 0
      %p163 = por %p161, %p162
      %s165 = sadd.s32 %s164, 1
      %p168 = scmp.eq.s32.totalorder %s25, 2
      %p169 = scmp.ne.s32.totalorder %s164, %s166
      %p170 = scmp.eq.s32.totalorder %s25, 0
      %p171 = por %p169, %p170
      %p172 = scmp.ne.s32.totalorder %s164, %s166
      %p173 = scmp.eq.s32.totalorder %s30, 2
      %p174 = por %p172, %p173
      %p175 = scmp.ne.s32.totalorder %s166, %s167
      %p176 = scmp.eq.s32.totalorder %s30, 0
      %p177 = por %p175, %p176
      %p178 = scmp.ne.s32.totalorder %s166, %s167
      %p179 = scmp.eq.s32.totalorder %s31, 2
      %p180 = por %p178, %p179
      %p182 = scmp.ne.s32.totalorder %s167, %s181
      %p183 = scmp.eq.s32.totalorder %s31, 0
      %p184 = por %p182, %p183
      %s186 = sadd.s32 %s185, 1
      %p189 = scmp.eq.s32.totalorder %s25, 2
      %p190 = scmp.ne.s32.totalorder %s185, %s187
      %p191 = scmp.eq.s32.totalorder %s25, 0
      %p192 = por %p190, %p191
      %p193 = scmp.ne.s32.totalorder %s185, %s187
      %p194 = scmp.eq.s32.totalorder %s30, 2
      %p195 = por %p193, %p194
      %p196 = scmp.ne.s32.totalorder %s187, %s188
      %p197 = scmp.eq.s32.totalorder %s30, 0
      %p198 = por %p196, %p197
      %p199 = scmp.ne.s32.totalorder %s187, %s188
      %p200 = scmp.eq.s32.totalorder %s31, 2
      %p201 = por %p199, %p200
      %p203 = scmp.ne.s32.totalorder %s188, %s202
      %p204 = scmp.eq.s32.totalorder %s31, 0
      %p205 = por %p203, %p204
      %s207 = sadd.s32 %s206, 1
      %p210 = scmp.eq.s32.totalorder %s25, 2
      %p211 = scmp.ne.s32.totalorder %s206, %s208
      %p212 = scmp.eq.s32.totalorder %s25, 0
      %p213 = por %p211, %p212
      %p214 = scmp.ne.s32.totalorder %s206, %s208
      %p215 = scmp.eq.s32.totalorder %s30, 2
      %p216 = por %p214, %p215
      %p217 = scmp.ne.s32.totalorder %s208, %s209
      %p218 = scmp.eq.s32.totalorder %s30, 0
      %p219 = por %p217, %p218
      %p220 = scmp.ne.s32.totalorder %s208, %s209
      %p221 = scmp.eq.s32.totalorder %s31, 2
      %p222 = por %p220, %p221
      %p224 = scmp.ne.s32.totalorder %s209, %s223
      %p225 = scmp.eq.s32.totalorder %s31, 0
      %p226 = por %p224, %p225
      %s228 = sadd.s32 %s227, 1
      %p231 = scmp.eq.s32.totalorder %s25, 2
      %p232 = scmp.ne.s32.totalorder %s227, %s229
      %p233 = scmp.eq.s32.totalorder %s25, 0
      %p234 = por %p232, %p233
      %p235 = scmp.ne.s32.totalorder %s227, %s229
      %p236 = scmp.eq.s32.totalorder %s30, 2
      %p237 = por %p235, %p236
      %p238 = scmp.ne.s32.totalorder %s229, %s230
      %p239 = scmp.eq.s32.totalorder %s30, 0
      %p240 = por %p238, %p239
      %p241 = scmp.ne.s32.totalorder %s229, %s230
      %p242 = scmp.eq.s32.totalorder %s31, 2
      %p243 = por %p241, %p242
      %p245 = scmp.ne.s32.totalorder %s230, %s244
      %p246 = scmp.eq.s32.totalorder %s31, 0
      %p247 = por %p245, %p246
      %s249 = sadd.s32 %s248, 1
      %p252 = scmp.eq.s32.totalorder %s25, 2
      %p253 = scmp.ne.s32.totalorder %s248, %s250
      %p254 = scmp.eq.s32.totalorder %s25, 0
      %p255 = por %p253, %p254
      %p256 = scmp.ne.s32.totalorder %s248, %s250
      %p257 = scmp.eq.s32.totalorder %s30, 2
      %p258 = por %p256, %p257
      %p259 = scmp.ne.s32.totalorder %s250, %s251
      %p260 = scmp.eq.s32.totalorder %s30, 0
      %p261 = por %p259, %p260
      %p262 = scmp.ne.s32.totalorder %s250, %s251
      %p263 = scmp.eq.s32.totalorder %s31, 2
      %p264 = por %p262, %p263
      %p266 = scmp.ne.s32.totalorder %s251, %s265
      %p267 = scmp.eq.s32.totalorder %s31, 0
      %p268 = por %p266, %p267
      %s270 = sadd.s32 %s269, 1
      %p273 = scmp.eq.s32.totalorder %s25, 2
      %p274 = scmp.ne.s32.totalorder %s269, %s271
      %p275 = scmp.eq.s32.totalorder %s25, 0
      %p276 = por %p274, %p275
      %p277 = scmp.ne.s32.totalorder %s269, %s271
      %p278 = scmp.eq.s32.totalorder %s30, 2
      %p279 = por %p277, %p278
      %p280 = scmp.ne.s32.totalorder %s271, %s272
      %p281 = scmp.eq.s32.totalorder %s30, 0
      %p282 = por %p280, %p281
      %p283 = scmp.ne.s32.totalorder %s271, %s272
      %p284 = scmp.eq.s32.totalorder %s31, 2
      %p285 = por %p283, %p284
      %p287 = scmp.ne.s32.totalorder %s272, %s286
      %p288 = scmp.eq.s32.totalorder %s31, 0
      %p289 = por %p287, %p288
      %s291 = sadd.s32 %s290, 1
      %p294 = scmp.eq.s32.totalorder %s25, 2
      %p295 = scmp.ne.s32.totalorder %s290, %s292
      %p296 = scmp.eq.s32.totalorder %s25, 0
      %p297 = por %p295, %p296
      %p298 = scmp.ne.s32.totalorder %s290, %s292
      %p299 = scmp.eq.s32.totalorder %s30, 2
      %p300 = por %p298, %p299
      %p301 = scmp.ne.s32.totalorder %s292, %s293
      %p302 = scmp.eq.s32.totalorder %s30, 0
      %p303 = por %p301, %p302
      %p304 = scmp.ne.s32.totalorder %s292, %s293
      %p305 = scmp.eq.s32.totalorder %s31, 2
      %p306 = por %p304, %p305
      %p308 = scmp.ne.s32.totalorder %s293, %s307
      %p309 = scmp.eq.s32.totalorder %s31, 0
      %p310 = por %p308, %p309
      %p311 = scmp.le.s32.totalorder 1, %s25
      %p312 = scmp.lt.s32.totalorder %s25, 4
      %p313 = pnand %p311, %p312
      %p314 = pneg %p313
      // Predicated region
      $region9: #{tpu_custom_call.1} parent=5 // pred_check
        _
      $region10: #{tpu_custom_call.1} parent=5 // pred_check_branch
        %316 = sbr.rel (%p313) target = $region12
      $region11: #{tpu_custom_call.1} parent=5 // pred_region
        %s317 = ssub.s32 %s25, 1
        // Predicated region
        $region13: #{tpu_custom_call.1} parent=11 // pred_check
          %p318 = pneg %p72
        $region14: #{tpu_custom_call.1} parent=11 // pred_check_branch
          %320 = sbr.rel (%p318) target = $region16
        $region15: #{tpu_custom_call.1} parent=11 // pred_region
          %s322 = ssub.s32 8192, 8192
          %323 = vsyncadd [#allocation9], %s322
          %s324 = sshll.u32 [#allocation8], 4
          %s325 = int_to_ptr.vmem [resolvable:$true] %s324
          %330 = dma.hbm_to_vmem [thread:$0]  %s1, 8192, %s325, [#allocation9], 512, 512, 32
        $region16: #{tpu_custom_call.1} parent=11 // pred_fallthru
          _
        // Predicated region
        $region17: #{tpu_custom_call.1} parent=11 // pred_check
          %p331 = pneg %p93
        $region18: #{tpu_custom_call.1} parent=11 // pred_check_branch
          %333 = sbr.rel (%p331) target = $region20
        $region19: #{tpu_custom_call.1} parent=11 // pred_region
          %s335 = ssub.s32 8192, 8192
          %336 = vsyncadd [#allocation9], %s335
          %s337 = sshll.u32 [#allocation10], 4
          %s338 = int_to_ptr.vmem [resolvable:$true] %s337
          %343 = dma.hbm_to_vmem [thread:$0]  %s2, 8192, %s338, [#allocation9], 512, 512, 32
        $region20: #{tpu_custom_call.1} parent=11 // pred_fallthru
          _
        // Predicated region
        $region21: #{tpu_custom_call.1} parent=11 // pred_check
          %p344 = pneg %p114
        $region22: #{tpu_custom_call.1} parent=11 // pred_check_branch
          %346 = sbr.rel (%p344) target = $region24
        $region23: #{tpu_custom_call.1} parent=11 // pred_region
          _
        $region24: #{tpu_custom_call.1} parent=11 // pred_fallthru
          _
        // Predicated region
        $region25: #{tpu_custom_call.1} parent=11 // pred_check
          %p347 = pneg %p135
        $region26: #{tpu_custom_call.1} parent=11 // pred_check_branch
          %349 = sbr.rel (%p347) target = $region28
        $region27: #{tpu_custom_call.1} parent=11 // pred_region
          %s351 = ssub.s32 2048, 2048
          %352 = vsyncadd [#allocation12], %s351
          %s353 = sshll.u32 [#allocation11], 4
          %s354 = int_to_ptr.vmem [resolvable:$true] %s353
          %359 = dma.hbm_to_vmem [thread:$0]  %s4, 2048, %s354, [#allocation12], 128, 128, 8
        $region28: #{tpu_custom_call.1} parent=11 // pred_fallthru
          _
        // Predicated region
        $region29: #{tpu_custom_call.1} parent=11 // pred_check
          %p360 = pneg %p156
        $region30: #{tpu_custom_call.1} parent=11 // pred_check_branch
          %362 = sbr.rel (%p360) target = $region32
        $region31: #{tpu_custom_call.1} parent=11 // pred_region
          _
        $region32: #{tpu_custom_call.1} parent=11 // pred_fallthru
          _
        // Predicated region
        $region33: #{tpu_custom_call.1} parent=11 // pred_check
          %p363 = pneg %p177
        $region34: #{tpu_custom_call.1} parent=11 // pred_check_branch
          %365 = sbr.rel (%p363) target = $region36
        $region35: #{tpu_custom_call.1} parent=11 // pred_region
          %s367 = ssub.s32 2048, 2048
          %368 = vsyncadd [#allocation12], %s367
          %s369 = sshll.u32 [#allocation13], 4
          %s370 = int_to_ptr.vmem [resolvable:$true] %s369
          %375 = dma.hbm_to_vmem [thread:$0]  %s6, 2048, %s370, [#allocation12], 128, 128, 8
        $region36: #{tpu_custom_call.1} parent=11 // pred_fallthru
          _
        // Predicated region
        $region37: #{tpu_custom_call.1} parent=11 // pred_check
          %p376 = pneg %p198
        $region38: #{tpu_custom_call.1} parent=11 // pred_check_branch
          %378 = sbr.rel (%p376) target = $region40
        $region39: #{tpu_custom_call.1} parent=11 // pred_region
          _
        $region40: #{tpu_custom_call.1} parent=11 // pred_fallthru
          _
        // Predicated region
        $region41: #{tpu_custom_call.1} parent=11 // pred_check
          %p379 = pneg %p219
        $region42: #{tpu_custom_call.1} parent=11 // pred_check_branch
          %381 = sbr.rel (%p379) target = $region44
        $region43: #{tpu_custom_call.1} parent=11 // pred_region
          %s383 = ssub.s32 2048, 2048
          %384 = vsyncadd [#allocation15], %s383
          %s385 = sshll.u32 [#allocation14], 4
          %s386 = int_to_ptr.vmem [resolvable:$true] %s385
          %391 = dma.hbm_to_vmem [thread:$0]  %s8, 2048, %s386, [#allocation15], 128, 128, 8
        $region44: #{tpu_custom_call.1} parent=11 // pred_fallthru
          _
        // Predicated region
        $region45: #{tpu_custom_call.1} parent=11 // pred_check
          %p392 = pneg %p240
        $region46: #{tpu_custom_call.1} parent=11 // pred_check_branch
          %394 = sbr.rel (%p392) target = $region48
        $region47: #{tpu_custom_call.1} parent=11 // pred_region
          _
        $region48: #{tpu_custom_call.1} parent=11 // pred_fallthru
          _
        // Predicated region
        $region49: #{tpu_custom_call.1} parent=11 // pred_check
          %p395 = pneg %p261
        $region50: #{tpu_custom_call.1} parent=11 // pred_check_branch
          %397 = sbr.rel (%p395) target = $region52
        $region51: #{tpu_custom_call.1} parent=11 // pred_region
          %s399 = ssub.s32 2048, 2048
          %400 = vsyncadd [#allocation15], %s399
          %s401 = sshll.u32 [#allocation16], 4
          %s402 = int_to_ptr.vmem [resolvable:$true] %s401
          %407 = dma.hbm_to_vmem [thread:$0]  %s10, 2048, %s402, [#allocation15], 128, 128, 8
        $region52: #{tpu_custom_call.1} parent=11 // pred_fallthru
          _
        // Predicated region
        $region53: #{tpu_custom_call.1} parent=11 // pred_check
          %p408 = pneg %p282
        $region54: #{tpu_custom_call.1} parent=11 // pred_check_branch
          %410 = sbr.rel (%p408) target = $region56
        $region55: #{tpu_custom_call.1} parent=11 // pred_region
          _
        $region56: #{tpu_custom_call.1} parent=11 // pred_fallthru
          _
      $region12: #{tpu_custom_call.1} parent=5 // pred_fallthru
        _
      %p411 = scmp.lt.s32.totalorder %s25, 3
      // Predicated region
      $region57: #{tpu_custom_call.1} parent=5 // pred_check
        %p412 = pneg %p411
      $region58: #{tpu_custom_call.1} parent=5 // pred_check_branch
        %414 = sbr.rel (%p412) target = $region60
      $region59: #{tpu_custom_call.1} parent=5 // pred_region
        // Predicated region
        $region61: #{tpu_custom_call.1} parent=59 // pred_check
          %p415 = pneg %p45
        $region62: #{tpu_custom_call.1} parent=59 // pred_check_branch
          %417 = sbr.rel (%p415) target = $region64
        $region63: #{tpu_custom_call.1} parent=59 // pred_region
          %s418 = sand.u32 %s35, 1
          %s419 = scalar_lea.sflag [#allocation6], %s418
          %s420 = sand.u32 %s35, 1
          %s421 = smul.addr %s420, 32
          %s422 = scalar_lea.vmem [#allocation5], %s421
          %s423 = smul.u32 4, %s25
          %s425 = ssub.s32 512, 512
          %426 = vsyncadd %s419, %s425
          %s427 = smul.addr %s423, 128
          %s428 = scalar_lea.hbm %s0, %s427
          %s429 = sshll.u32 %s422, 4
          %s430 = int_to_ptr.vmem [resolvable:$true] %s429
          %435 = dma.hbm_to_vmem [thread:$0]  %s428, 512, %s430, %s419, 128, 128, 8
        $region64: #{tpu_custom_call.1} parent=59 // pred_fallthru
          _
      $region60: #{tpu_custom_call.1} parent=5 // pred_fallthru
        _
      %p436 = scmp.le.s32.totalorder 1, %s25
      %p437 = scmp.lt.s32.totalorder %s25, 4
      %p438 = pnand %p436, %p437
      %p439 = pneg %p438
      // Predicated region
      $region65: #{tpu_custom_call.1} parent=5 // pred_check
        _
      $region66: #{tpu_custom_call.1} parent=5 // pred_check_branch
        %441 = sbr.rel (%p438) target = $region68
      $region67: #{tpu_custom_call.1} parent=5 // pred_region
        %s442 = ssub.s32 %s25, 1
        %s443 = sand.u32 %s38, 1
        %s444 = scalar_lea.sflag [#allocation6], %s443
        %s445 = sand.u32 %s38, 1
        %s446 = smul.addr %s445, 32
        %s447 = scalar_lea.vmem [#allocation5], %s446
        // Predicated region
        $region69: #{tpu_custom_call.1} parent=67 // pred_check
          %p448 = pneg %p51
        $region70: #{tpu_custom_call.1} parent=67 // pred_check_branch
          %450 = sbr.rel (%p448) target = $region72
        $region71: #{tpu_custom_call.1} parent=67 // pred_region
          %451 = dma.done %s444, 512
        $region72: #{tpu_custom_call.1} parent=67 // pred_fallthru
          _
        // Predicated region
        $region73: #{tpu_custom_call.1} parent=67 // pred_check
          %p452 = pneg %p72
        $region74: #{tpu_custom_call.1} parent=67 // pred_check_branch
          %454 = sbr.rel (%p452) target = $region76
        $region75: #{tpu_custom_call.1} parent=67 // pred_region
          %455 = dma.done [#allocation9], 8192
        $region76: #{tpu_custom_call.1} parent=67 // pred_fallthru
          _
        // Predicated region
        $region77: #{tpu_custom_call.1} parent=67 // pred_check
          %p456 = pneg %p93
        $region78: #{tpu_custom_call.1} parent=67 // pred_check_branch
          %458 = sbr.rel (%p456) target = $region80
        $region79: #{tpu_custom_call.1} parent=67 // pred_region
          %459 = dma.done [#allocation9], 8192
        $region80: #{tpu_custom_call.1} parent=67 // pred_fallthru
          _
        // Predicated region
        $region81: #{tpu_custom_call.1} parent=67 // pred_check
          %p460 = pneg %p135
        $region82: #{tpu_custom_call.1} parent=67 // pred_check_branch
          %462 = sbr.rel (%p460) target = $region84
        $region83: #{tpu_custom_call.1} parent=67 // pred_region
          %463 = dma.done [#allocation12], 2048
        $region84: #{tpu_custom_call.1} parent=67 // pred_fallthru
          _
        // Predicated region
        $region85: #{tpu_custom_call.1} parent=67 // pred_check
          %p464 = pneg %p177
        $region86: #{tpu_custom_call.1} parent=67 // pred_check_branch
          %466 = sbr.rel (%p464) target = $region88
        $region87: #{tpu_custom_call.1} parent=67 // pred_region
          %467 = dma.done [#allocation12], 2048
        $region88: #{tpu_custom_call.1} parent=67 // pred_fallthru
          _
        // Predicated region
        $region89: #{tpu_custom_call.1} parent=67 // pred_check
          %p468 = pneg %p219
        $region90: #{tpu_custom_call.1} parent=67 // pred_check_branch
          %470 = sbr.rel (%p468) target = $region92
        $region91: #{tpu_custom_call.1} parent=67 // pred_region
          %471 = dma.done [#allocation15], 2048
        $region92: #{tpu_custom_call.1} parent=67 // pred_fallthru
          _
        // Predicated region
        $region93: #{tpu_custom_call.1} parent=67 // pred_check
          %p472 = pneg %p261
        $region94: #{tpu_custom_call.1} parent=67 // pred_check_branch
          %474 = sbr.rel (%p472) target = $region96
        $region95: #{tpu_custom_call.1} parent=67 // pred_region
          %475 = dma.done [#allocation15], 2048
        $region96: #{tpu_custom_call.1} parent=67 // pred_fallthru
          _
        %s476 = sand.u32 %s38, 1
        %s477 = scalar_lea.sflag [#allocation6], %s476
        %s478 = sand.u32 %s38, 1
        %s479 = smul.addr %s478, 32
        %s480 = scalar_lea.vmem [#allocation5], %s479
        %p481 = pneg %p51
        %p482 = pneg %p48
        %p483 = pneg %p72
        %p484 = pneg %p69
        %p485 = pneg %p93
        %p486 = pneg %p90
        %p487 = pneg %p114
        %p488 = pneg %p111
        %p489 = pneg %p135
        %p490 = pneg %p132
        %p491 = pneg %p156
        %p492 = pneg %p153
        %p493 = pneg %p177
        %p494 = pneg %p174
        %p495 = pneg %p198
        %p496 = pneg %p195
        %p497 = pneg %p219
        %p498 = pneg %p216
        %p499 = pneg %p240
        %p500 = pneg %p237
        %p501 = pneg %p261
        %p502 = pneg %p258
        %p503 = pneg %p282
        %p504 = pneg %p279
        %p505 = pneg %p303
        %p506 = pneg %p300
        %s507 = smul.u32 4, %s30
        %p508 = scmp.eq.s32.totalorder %s30, 0
        // Predicated region
        $region97: #{tpu_custom_call.1} parent=67 // pred_check
          %p509 = pneg %p508
        $region98: #{tpu_custom_call.1} parent=67 // pred_check_branch
          %511 = sbr.rel (%p509) target = $region100
        $region99: #{tpu_custom_call.1} parent=67 // pred_region
          %512 = vst [vmem:[#allocation2] sm:$0xff] 0.0
          %513 = vst [vmem:[#allocation3] sm:$0xff] 0.0
        $region100: #{tpu_custom_call.1} parent=67 // pred_fallthru
          _
        %v514 = vld [vmem:[%s447] sm:$0xff]
        %v515 = vld [vmem:[%s447 + $0x8] sm:$0xff]
        %v516 = vld [vmem:[%s447 + $0x10] sm:$0xff]
        %v517 = vld [vmem:[%s447 + $0x18] sm:$0xff]
        %v518 = vld [vmem:[#allocation8] sm:$0xff]
        %v519 = vld [vmem:[#allocation8 + $0x8] sm:$0xff]
        %v520 = vld [vmem:[#allocation8 + $0x10] sm:$0xff]
        %v521 = vld [vmem:[#allocation8 + $0x18] sm:$0xff]
        %v522 = vld [vmem:[#allocation8 + $0x20] sm:$0xff]
        %v523 = vld [vmem:[#allocation8 + $0x28] sm:$0xff]
        %v524 = vld [vmem:[#allocation8 + $0x30] sm:$0xff]
        %v525 = vld [vmem:[#allocation8 + $0x38] sm:$0xff]
        %v526 = vld [vmem:[#allocation8 + $0x40] sm:$0xff]
        %v527 = vld [vmem:[#allocation8 + $0x48] sm:$0xff]
        %v528 = vld [vmem:[#allocation8 + $0x50] sm:$0xff]
        %v529 = vld [vmem:[#allocation8 + $0x58] sm:$0xff]
        %v530 = vld [vmem:[#allocation8 + $0x60] sm:$0xff]
        %v531 = vld [vmem:[#allocation8 + $0x68] sm:$0xff]
        %v532 = vld [vmem:[#allocation8 + $0x70] sm:$0xff]
        %v533 = vld [vmem:[#allocation8 + $0x78] sm:$0xff]
        %v534 = vld [vmem:[#allocation8 + $0x80] sm:$0xff]
        %v535 = vld [vmem:[#allocation8 + $0x88] sm:$0xff]
        %v536 = vld [vmem:[#allocation8 + $0x90] sm:$0xff]
        %v537 = vld [vmem:[#allocation8 + $0x98] sm:$0xff]
        %v538 = vld [vmem:[#allocation8 + $0xa0] sm:$0xff]
        %v539 = vld [vmem:[#allocation8 + $0xa8] sm:$0xff]
        %v540 = vld [vmem:[#allocation8 + $0xb0] sm:$0xff]
        %v541 = vld [vmem:[#allocation8 + $0xb8] sm:$0xff]
        %v542 = vld [vmem:[#allocation8 + $0xc0] sm:$0xff]
        %v543 = vld [vmem:[#allocation8 + $0xc8] sm:$0xff]
        %v544 = vld [vmem:[#allocation8 + $0xd0] sm:$0xff]
        %v545 = vld [vmem:[#allocation8 + $0xd8] sm:$0xff]
        %v546 = vld [vmem:[#allocation8 + $0xe0] sm:$0xff]
        %v547 = vld [vmem:[#allocation8 + $0xe8] sm:$0xff]
        %v548 = vld [vmem:[#allocation8 + $0xf0] sm:$0xff]
        %v549 = vld [vmem:[#allocation8 + $0xf8] sm:$0xff]
        %v550 = vld [vmem:[#allocation8 + $0x100] sm:$0xff]
        %v551 = vld [vmem:[#allocation8 + $0x108] sm:$0xff]
        %v552 = vld [vmem:[#allocation8 + $0x110] sm:$0xff]
        %v553 = vld [vmem:[#allocation8 + $0x118] sm:$0xff]
        %v554 = vld [vmem:[#allocation8 + $0x120] sm:$0xff]
        %v555 = vld [vmem:[#allocation8 + $0x128] sm:$0xff]
        %v556 = vld [vmem:[#allocation8 + $0x130] sm:$0xff]
        %v557 = vld [vmem:[#allocation8 + $0x138] sm:$0xff]
        %v558 = vld [vmem:[#allocation8 + $0x140] sm:$0xff]
        %v559 = vld [vmem:[#allocation8 + $0x148] sm:$0xff]
        %v560 = vld [vmem:[#allocation8 + $0x150] sm:$0xff]
        %v561 = vld [vmem:[#allocation8 + $0x158] sm:$0xff]
        %v562 = vld [vmem:[#allocation8 + $0x160] sm:$0xff]
        %v563 = vld [vmem:[#allocation8 + $0x168] sm:$0xff]
        %v564 = vld [vmem:[#allocation8 + $0x170] sm:$0xff]
        %v565 = vld [vmem:[#allocation8 + $0x178] sm:$0xff]
        %v566 = vld [vmem:[#allocation8 + $0x180] sm:$0xff]
        %v567 = vld [vmem:[#allocation8 + $0x188] sm:$0xff]
        %v568 = vld [vmem:[#allocation8 + $0x190] sm:$0xff]
        %v569 = vld [vmem:[#allocation8 + $0x198] sm:$0xff]
        %v570 = vld [vmem:[#allocation8 + $0x1a0] sm:$0xff]
        %v571 = vld [vmem:[#allocation8 + $0x1a8] sm:$0xff]
        %v572 = vld [vmem:[#allocation8 + $0x1b0] sm:$0xff]
        %v573 = vld [vmem:[#allocation8 + $0x1b8] sm:$0xff]
        %v574 = vld [vmem:[#allocation8 + $0x1c0] sm:$0xff]
        %v575 = vld [vmem:[#allocation8 + $0x1c8] sm:$0xff]
        %v576 = vld [vmem:[#allocation8 + $0x1d0] sm:$0xff]
        %v577 = vld [vmem:[#allocation8 + $0x1d8] sm:$0xff]
        %v578 = vld [vmem:[#allocation8 + $0x1e0] sm:$0xff]
        %v579 = vld [vmem:[#allocation8 + $0x1e8] sm:$0xff]
        %v580 = vld [vmem:[#allocation8 + $0x1f0] sm:$0xff]
        %v581 = vld [vmem:[#allocation8 + $0x1f8] sm:$0xff]
        %v582 = vld [vmem:[%s3] sm:$0xf]
        %v584 = vlaneseq
        %v585 = vshrl.u32 %v584, 7
        %v586 = vsub.s32 0, %v585
        %v587 = vrot.slane %v582, %v586
        %v588 = vlaneseq
        %v589 = vshrl.u32 %v588, 7
        %v590 = vsub.s32 1, %v589
        %v591 = vrot.slane %v582, %v590
        %v592 = vlaneseq
        %v593 = vshrl.u32 %v592, 7
        %v594 = vsub.s32 2, %v593
        %v595 = vrot.slane %v582, %v594
        %v596 = vlaneseq
        %v597 = vshrl.u32 %v596, 7
        %v598 = vsub.s32 3, %v597
        %v599 = vrot.slane %v582, %v598
        %604 = vmatprep.subr.mxu0 %v519
        %605 = vmatpush1.msra.mxu0 %v518
        %606 = vmatprep.subr.mxu0 %v523
        %607 = vmatpush1.msra.mxu0 %v522
        %608 = vmatprep.subr.mxu0 %v527
        %609 = vmatpush1.msra.mxu0 %v526
        %610 = vmatprep.subr.mxu0 %v531
        %611 = vmatpush1.msra.mxu0 %v530
        %612 = vmatprep.subr.mxu0 %v535
        %613 = vmatpush1.msra.mxu0 %v534
        %614 = vmatprep.subr.mxu0 %v539
        %615 = vmatpush1.msra.mxu0 %v538
        %616 = vmatprep.subr.mxu0 %v543
        %617 = vmatpush1.msra.mxu0 %v542
        %618 = vmatprep.subr.mxu0 %v547
        %619 = vmatpush1.msra.mxu0 %v546
        %620 = vmatprep.subr.mxu0 %v551
        %621 = vmatpush1.msra.mxu0 %v550
        %622 = vmatprep.subr.mxu0 %v555
        %623 = vmatpush1.msra.mxu0 %v554
        %624 = vmatprep.subr.mxu0 %v559
        %625 = vmatpush1.msra.mxu0 %v558
        %626 = vmatprep.subr.mxu0 %v563
        %627 = vmatpush1.msra.mxu0 %v562
        %628 = vmatprep.subr.mxu0 %v567
        %629 = vmatpush1.msra.mxu0 %v566
        %630 = vmatprep.subr.mxu0 %v571
        %631 = vmatpush1.msra.mxu0 %v570
        %632 = vmatprep.subr.mxu0 %v575
        %633 = vmatpush1.msra.mxu0 %v574
        %634 = vmatprep.subr.mxu0 %v579
        %635 = vmatpush1.msra.mxu0 %v578
        %636 = vmatprep.subr.mxu0 0.0
        %637 = vmatpush1.msra.mxu0 0.0
        %638 = vmatprep.subr.mxu0 0.0
        %639 = vmatpush1.msra.mxu0 0.0
        %640 = vmatprep.subr.mxu0 0.0
        %641 = vmatpush1.msra.mxu0 0.0
        %642 = vmatprep.subr.mxu0 0.0
        %643 = vmatpush1.msra.mxu0 0.0
        %644 = vmatprep.subr.mxu0 0.0
        %645 = vmatpush1.msra.mxu0 0.0
        %646 = vmatprep.subr.mxu0 0.0
        %647 = vmatpush1.msra.mxu0 0.0
        %648 = vmatprep.subr.mxu0 0.0
        %649 = vmatpush1.msra.mxu0 0.0
        %650 = vmatprep.subr.mxu0 0.0
        %651 = vmatpush1.msra.mxu0 0.0
        %652 = vmatprep.subr.mxu0 0.0
        %653 = vmatpush1.msra.mxu0 0.0
        %654 = vmatprep.subr.mxu0 0.0
        %655 = vmatpush1.msra.mxu0 0.0
        %656 = vmatprep.subr.mxu0 0.0
        %657 = vmatpush1.msra.mxu0 0.0
        %658 = vmatprep.subr.mxu0 0.0
        %659 = vmatpush1.msra.mxu0 0.0
        %660 = vmatprep.subr.mxu0 0.0
        %661 = vmatpush1.msra.mxu0 0.0
        %662 = vmatprep.subr.mxu0 0.0
        %663 = vmatpush1.msra.mxu0 0.0
        %664 = vmatprep.subr.mxu0 0.0
        %665 = vmatpush1.msra.mxu0 0.0
        %666 = vmatprep.subr.mxu0 0.0
        %667 = vmatpush1.msra.mxu0 0.0
        %668 = vmatprep.mubr.f32.mxu0 0.0
        %669 = vmatmul.mubr.f32.gmra.mrb[0].mxu0 %v514
        %v670 = vpop.f32.mrb[0].mxu0
        %v671 = vadd.f32 %v587, %v670
        %v672 = vpop.f32.mrb[0].mxu0
        %v673 = vadd.f32 %v591, %v672
        %674 = vmatprep.mubr.f32.mxu0 0.0
        %675 = vmatmul.mubr.f32.gmra.mrb[0].mxu0 %v515
        %v676 = vpop.f32.mrb[0].mxu0
        %v677 = vadd.f32 %v587, %v676
        %v678 = vpop.f32.mrb[0].mxu0
        %v679 = vadd.f32 %v591, %v678
        %680 = vmatprep.mubr.f32.mxu0 0.0
        %681 = vmatmul.mubr.f32.gmra.mrb[0].mxu0 %v516
        %v682 = vpop.f32.mrb[0].mxu0
        %v683 = vadd.f32 %v587, %v682
        %v684 = vpop.f32.mrb[0].mxu0
        %v685 = vadd.f32 %v591, %v684
        %686 = vmatprep.mubr.f32.mxu0 0.0
        %687 = vmatmul.mubr.f32.gmra.mrb[0].mxu0 %v517
        %v688 = vpop.f32.mrb[0].mxu0
        %v689 = vadd.f32 %v587, %v688
        %v690 = vpop.f32.mrb[0].mxu0
        %v691 = vadd.f32 %v591, %v690
        %692 = vdwg.mxu0
        %693 = vmatprep.subr.mxu0 %v521
        %694 = vmatpush1.msra.mxu0 %v520
        %695 = vmatprep.subr.mxu0 %v525
        %696 = vmatpush1.msra.mxu0 %v524
        %697 = vmatprep.subr.mxu0 %v529
        %698 = vmatpush1.msra.mxu0 %v528
        %699 = vmatprep.subr.mxu0 %v533
        %700 = vmatpush1.msra.mxu0 %v532
        %701 = vmatprep.subr.mxu0 %v537
        %702 = vmatpush1.msra.mxu0 %v536
        %703 = vmatprep.subr.mxu0 %v541
        %704 = vmatpush1.msra.mxu0 %v540
        %705 = vmatprep.subr.mxu0 %v545
        %706 = vmatpush1.msra.mxu0 %v544
        %707 = vmatprep.subr.mxu0 %v549
        %708 = vmatpush1.msra.mxu0 %v548
        %709 = vmatprep.subr.mxu0 %v553
        %710 = vmatpush1.msra.mxu0 %v552
        %711 = vmatprep.subr.mxu0 %v557
        %712 = vmatpush1.msra.mxu0 %v556
        %713 = vmatprep.subr.mxu0 %v561
        %714 = vmatpush1.msra.mxu0 %v560
        %715 = vmatprep.subr.mxu0 %v565
        %716 = vmatpush1.msra.mxu0 %v564
        %717 = vmatprep.subr.mxu0 %v569
        %718 = vmatpush1.msra.mxu0 %v568
        %719 = vmatprep.subr.mxu0 %v573
        %720 = vmatpush1.msra.mxu0 %v572
        %721 = vmatprep.subr.mxu0 %v577
        %722 = vmatpush1.msra.mxu0 %v576
        %723 = vmatprep.subr.mxu0 %v581
        %724 = vmatpush1.msra.mxu0 %v580
        %725 = vmatprep.subr.mxu0 0.0
        %726 = vmatpush1.msra.mxu0 0.0
        %727 = vmatprep.subr.mxu0 0.0
        %728 = vmatpush1.msra.mxu0 0.0
        %729 = vmatprep.subr.mxu0 0.0
        %730 = vmatpush1.msra.mxu0 0.0
        %731 = vmatprep.subr.mxu0 0.0
        %732 = vmatpush1.msra.mxu0 0.0
        %733 = vmatprep.subr.mxu0 0.0
        %734 = vmatpush1.msra.mxu0 0.0
        %735 = vmatprep.subr.mxu0 0.0
        %736 = vmatpush1.msra.mxu0 0.0
        %737 = vmatprep.subr.mxu0 0.0
        %738 = vmatpush1.msra.mxu0 0.0
        %739 = vmatprep.subr.mxu0 0.0
        %740 = vmatpush1.msra.mxu0 0.0
        %741 = vmatprep.subr.mxu0 0.0
        %742 = vmatpush1.msra.mxu0 0.0
        %743 = vmatprep.subr.mxu0 0.0
        %744 = vmatpush1.msra.mxu0 0.0
        %745 = vmatprep.subr.mxu0 0.0
        %746 = vmatpush1.msra.mxu0 0.0
        %747 = vmatprep.subr.mxu0 0.0
        %748 = vmatpush1.msra.mxu0 0.0
        %749 = vmatprep.subr.mxu0 0.0
        %750 = vmatpush1.msra.mxu0 0.0
        %751 = vmatprep.subr.mxu0 0.0
        %752 = vmatpush1.msra.mxu0 0.0
        %753 = vmatprep.subr.mxu0 0.0
        %754 = vmatpush1.msra.mxu0 0.0
        %755 = vmatprep.subr.mxu0 0.0
        %756 = vmatpush1.msra.mxu0 0.0
        %757 = vmatprep.mubr.f32.mxu0 0.0
        %758 = vmatmul.mubr.f32.gmra.mrb[0].mxu0 %v514
        %v759 = vpop.f32.mrb[0].mxu0
        %v760 = vadd.f32 %v595, %v759
        %v761 = vpop.f32.mrb[0].mxu0
        %v762 = vadd.f32 %v599, %v761
        %763 = vmatprep.mubr.f32.mxu0 0.0
        %764 = vmatmul.mubr.f32.gmra.mrb[0].mxu0 %v515
        %v765 = vpop.f32.mrb[0].mxu0
        %v766 = vadd.f32 %v595, %v765
        %v767 = vpop.f32.mrb[0].mxu0
        %v768 = vadd.f32 %v599, %v767
        %769 = vmatprep.mubr.f32.mxu0 0.0
        %770 = vmatmul.mubr.f32.gmra.mrb[0].mxu0 %v516
        %v771 = vpop.f32.mrb[0].mxu0
        %v772 = vadd.f32 %v595, %v771
        %v773 = vpop.f32.mrb[0].mxu0
        %v774 = vadd.f32 %v599, %v773
        %775 = vmatprep.mubr.f32.mxu0 0.0
        %776 = vmatmul.mubr.f32.gmra.mrb[0].mxu0 %v517
        %v777 = vpop.f32.mrb[0].mxu0
        %v778 = vadd.f32 %v595, %v777
        %v779 = vpop.f32.mrb[0].mxu0
        %v780 = vadd.f32 %v599, %v779
        %781 = vdwg.mxu0
        %782 = vst [vmem:[#allocation4] sm:$0xff] %v671
        %783 = vst [vmem:[#allocation4 + $0x8] sm:$0xff] %v673
        %784 = vst [vmem:[#allocation4 + $0x10] sm:$0xff] %v760
        %785 = vst [vmem:[#allocation4 + $0x18] sm:$0xff] %v762
        %786 = vst [vmem:[#allocation4 + $0x20] sm:$0xff] %v677
        %787 = vst [vmem:[#allocation4 + $0x28] sm:$0xff] %v679
        %788 = vst [vmem:[#allocation4 + $0x30] sm:$0xff] %v766
        %789 = vst [vmem:[#allocation4 + $0x38] sm:$0xff] %v768
        %790 = vst [vmem:[#allocation4 + $0x40] sm:$0xff] %v683
        %791 = vst [vmem:[#allocation4 + $0x48] sm:$0xff] %v685
        %792 = vst [vmem:[#allocation4 + $0x50] sm:$0xff] %v772
        %793 = vst [vmem:[#allocation4 + $0x58] sm:$0xff] %v774
        %794 = vst [vmem:[#allocation4 + $0x60] sm:$0xff] %v689
        %795 = vst [vmem:[#allocation4 + $0x68] sm:$0xff] %v691
        %796 = vst [vmem:[#allocation4 + $0x70] sm:$0xff] %v778
        %797 = vst [vmem:[#allocation4 + $0x78] sm:$0xff] %v780
        %p798 = scmp.lt.s32.totalorder %s30, 2
        // Predicated region
        $region101: #{tpu_custom_call.1} parent=67 // pred_check
          %p799 = pneg %p798
        $region102: #{tpu_custom_call.1} parent=67 // pred_check_branch
          %801 = sbr.rel (%p799) target = $region104
        $region103: #{tpu_custom_call.1} parent=67 // pred_region
          %v802 = vld [vmem:[#allocation2] sm:$0xff]
          %v803 = vld [vmem:[#allocation3] sm:$0xff]
          %s804 = smul.u32 0, 4
          %s805 = smul.addr %s804, 8
          %s806 = scalar_lea.vmem [#allocation4], %s805
          %v807 = vld [vmem:[%s806] sm:$0xff]
          %v808 = vld [vmem:[%s806 + $0x8] sm:$0xff]
          %v809 = vld [vmem:[%s806 + $0x10] sm:$0xff]
          %v810 = vld [vmem:[%s806 + $0x18] sm:$0xff]
          %v811 = vld [vmem:[#allocation10] sm:$0xff]
          %v812 = vld [vmem:[#allocation10 + $0x8] sm:$0xff]
          %v813 = vld [vmem:[#allocation10 + $0x10] sm:$0xff]
          %v814 = vld [vmem:[#allocation10 + $0x18] sm:$0xff]
          %v815 = vld [vmem:[#allocation10 + $0x20] sm:$0xff]
          %v816 = vld [vmem:[#allocation10 + $0x28] sm:$0xff]
          %v817 = vld [vmem:[#allocation10 + $0x30] sm:$0xff]
          %v818 = vld [vmem:[#allocation10 + $0x38] sm:$0xff]
          %v819 = vld [vmem:[#allocation10 + $0x40] sm:$0xff]
          %v820 = vld [vmem:[#allocation10 + $0x48] sm:$0xff]
          %v821 = vld [vmem:[#allocation10 + $0x50] sm:$0xff]
          %v822 = vld [vmem:[#allocation10 + $0x58] sm:$0xff]
          %v823 = vld [vmem:[#allocation10 + $0x60] sm:$0xff]
          %v824 = vld [vmem:[#allocation10 + $0x68] sm:$0xff]
          %v825 = vld [vmem:[#allocation10 + $0x70] sm:$0xff]
          %v826 = vld [vmem:[#allocation10 + $0x78] sm:$0xff]
          %v827 = vld [vmem:[#allocation10 + $0x80] sm:$0xff]
          %v828 = vld [vmem:[#allocation10 + $0x88] sm:$0xff]
          %v829 = vld [vmem:[#allocation10 + $0x90] sm:$0xff]
          %v830 = vld [vmem:[#allocation10 + $0x98] sm:$0xff]
          %v831 = vld [vmem:[#allocation10 + $0xa0] sm:$0xff]
          %v832 = vld [vmem:[#allocation10 + $0xa8] sm:$0xff]
          %v833 = vld [vmem:[#allocation10 + $0xb0] sm:$0xff]
          %v834 = vld [vmem:[#allocation10 + $0xb8] sm:$0xff]
          %v835 = vld [vmem:[#allocation10 + $0xc0] sm:$0xff]
          %v836 = vld [vmem:[#allocation10 + $0xc8] sm:$0xff]
          %v837 = vld [vmem:[#allocation10 + $0xd0] sm:$0xff]
          %v838 = vld [vmem:[#allocation10 + $0xd8] sm:$0xff]
          %v839 = vld [vmem:[#allocation10 + $0xe0] sm:$0xff]
          %v840 = vld [vmem:[#allocation10 + $0xe8] sm:$0xff]
          %v841 = vld [vmem:[#allocation10 + $0xf0] sm:$0xff]
          %v842 = vld [vmem:[#allocation10 + $0xf8] sm:$0xff]
          %v843 = vld [vmem:[#allocation10 + $0x100] sm:$0xff]
          %v844 = vld [vmem:[#allocation10 + $0x108] sm:$0xff]
          %v845 = vld [vmem:[#allocation10 + $0x110] sm:$0xff]
          %v846 = vld [vmem:[#allocation10 + $0x118] sm:$0xff]
          %v847 = vld [vmem:[#allocation10 + $0x120] sm:$0xff]
          %v848 = vld [vmem:[#allocation10 + $0x128] sm:$0xff]
          %v849 = vld [vmem:[#allocation10 + $0x130] sm:$0xff]
          %v850 = vld [vmem:[#allocation10 + $0x138] sm:$0xff]
          %v851 = vld [vmem:[#allocation10 + $0x140] sm:$0xff]
          %v852 = vld [vmem:[#allocation10 + $0x148] sm:$0xff]
          %v853 = vld [vmem:[#allocation10 + $0x150] sm:$0xff]
          %v854 = vld [vmem:[#allocation10 + $0x158] sm:$0xff]
          %v855 = vld [vmem:[#allocation10 + $0x160] sm:$0xff]
          %v856 = vld [vmem:[#allocation10 + $0x168] sm:$0xff]
          %v857 = vld [vmem:[#allocation10 + $0x170] sm:$0xff]
          %v858 = vld [vmem:[#allocation10 + $0x178] sm:$0xff]
          %v859 = vld [vmem:[#allocation10 + $0x180] sm:$0xff]
          %v860 = vld [vmem:[#allocation10 + $0x188] sm:$0xff]
          %v861 = vld [vmem:[#allocation10 + $0x190] sm:$0xff]
          %v862 = vld [vmem:[#allocation10 + $0x198] sm:$0xff]
          %v863 = vld [vmem:[#allocation10 + $0x1a0] sm:$0xff]
          %v864 = vld [vmem:[#allocation10 + $0x1a8] sm:$0xff]
          %v865 = vld [vmem:[#allocation10 + $0x1b0] sm:$0xff]
          %v866 = vld [vmem:[#allocation10 + $0x1b8] sm:$0xff]
          %v867 = vld [vmem:[#allocation10 + $0x1c0] sm:$0xff]
          %v868 = vld [vmem:[#allocation10 + $0x1c8] sm:$0xff]
          %v869 = vld [vmem:[#allocation10 + $0x1d0] sm:$0xff]
          %v870 = vld [vmem:[#allocation10 + $0x1d8] sm:$0xff]
          %v871 = vld [vmem:[#allocation10 + $0x1e0] sm:$0xff]
          %v872 = vld [vmem:[#allocation10 + $0x1e8] sm:$0xff]
          %v873 = vld [vmem:[#allocation10 + $0x1f0] sm:$0xff]
          %v874 = vld [vmem:[#allocation10 + $0x1f8] sm:$0xff]
          %875 = vmatprep.subr.mxu0 %v812
          %876 = vmatpush1.msra.mxu0 %v811
          %877 = vmatprep.subr.mxu0 %v816
          %878 = vmatpush1.msra.mxu0 %v815
          %879 = vmatprep.subr.mxu0 %v820
          %880 = vmatpush1.msra.mxu0 %v819
          %881 = vmatprep.subr.mxu0 %v824
          %882 = vmatpush1.msra.mxu0 %v823
          %883 = vmatprep.subr.mxu0 %v828
          %884 = vmatpush1.msra.mxu0 %v827
          %885 = vmatprep.subr.mxu0 %v832
          %886 = vmatpush1.msra.mxu0 %v831
          %887 = vmatprep.subr.mxu0 %v836
          %888 = vmatpush1.msra.mxu0 %v835
          %889 = vmatprep.subr.mxu0 %v840
          %890 = vmatpush1.msra.mxu0 %v839
          %891 = vmatprep.subr.mxu0 %v844
          %892 = vmatpush1.msra.mxu0 %v843
          %893 = vmatprep.subr.mxu0 %v848
          %894 = vmatpush1.msra.mxu0 %v847
          %895 = vmatprep.subr.mxu0 %v852
          %896 = vmatpush1.msra.mxu0 %v851
          %897 = vmatprep.subr.mxu0 %v856
          %898 = vmatpush1.msra.mxu0 %v855
          %899 = vmatprep.subr.mxu0 %v860
          %900 = vmatpush1.msra.mxu0 %v859
          %901 = vmatprep.subr.mxu0 %v864
          %902 = vmatpush1.msra.mxu0 %v863
          %903 = vmatprep.subr.mxu0 %v868
          %904 = vmatpush1.msra.mxu0 %v867
          %905 = vmatprep.subr.mxu0 %v872
          %906 = vmatpush1.msra.mxu0 %v871
          %907 = vmatprep.subr.mxu0 0.0
          %908 = vmatpush1.msra.mxu0 0.0
          %909 = vmatprep.subr.mxu0 0.0
          %910 = vmatpush1.msra.mxu0 0.0
          %911 = vmatprep.subr.mxu0 0.0
          %912 = vmatpush1.msra.mxu0 0.0
          %913 = vmatprep.subr.mxu0 0.0
          %914 = vmatpush1.msra.mxu0 0.0
          %915 = vmatprep.subr.mxu0 0.0
          %916 = vmatpush1.msra.mxu0 0.0
          %917 = vmatprep.subr.mxu0 0.0
          %918 = vmatpush1.msra.mxu0 0.0
          %919 = vmatprep.subr.mxu0 0.0
          %920 = vmatpush1.msra.mxu0 0.0
          %921 = vmatprep.subr.mxu0 0.0
          %922 = vmatpush1.msra.mxu0 0.0
          %923 = vmatprep.subr.mxu0 0.0
          %924 = vmatpush1.msra.mxu0 0.0
          %925 = vmatprep.subr.mxu0 0.0
          %926 = vmatpush1.msra.mxu0 0.0
          %927 = vmatprep.subr.mxu0 0.0
          %928 = vmatpush1.msra.mxu0 0.0
          %929 = vmatprep.subr.mxu0 0.0
          %930 = vmatpush1.msra.mxu0 0.0
          %931 = vmatprep.subr.mxu0 0.0
          %932 = vmatpush1.msra.mxu0 0.0
          %933 = vmatprep.subr.mxu0 0.0
          %934 = vmatpush1.msra.mxu0 0.0
          %935 = vmatprep.subr.mxu0 0.0
          %936 = vmatpush1.msra.mxu0 0.0
          %937 = vmatprep.subr.mxu0 0.0
          %938 = vmatpush1.msra.mxu0 0.0
          %939 = vmatprep.mubr.f32.mxu0 0.0
          %940 = vmatmul.mubr.f32.gmra.mrb[0].mxu0 %v802
          %v941 = vpop.f32.mrb[0].mxu0
          %v942 = vadd.f32 0.0, %v941
          %v943 = vpop.f32.mrb[0].mxu0
          %v944 = vadd.f32 0.0, %v943
          %945 = vdwg.mxu0
          %946 = vmatprep.subr.mxu0 %v814
          %947 = vmatpush1.msra.mxu0 %v813
          %948 = vmatprep.subr.mxu0 %v818
          %949 = vmatpush1.msra.mxu0 %v817
          %950 = vmatprep.subr.mxu0 %v822
          %951 = vmatpush1.msra.mxu0 %v821
          %952 = vmatprep.subr.mxu0 %v826
          %953 = vmatpush1.msra.mxu0 %v825
          %954 = vmatprep.subr.mxu0 %v830
          %955 = vmatpush1.msra.mxu0 %v829
          %956 = vmatprep.subr.mxu0 %v834
          %957 = vmatpush1.msra.mxu0 %v833
          %958 = vmatprep.subr.mxu0 %v838
          %959 = vmatpush1.msra.mxu0 %v837
          %960 = vmatprep.subr.mxu0 %v842
          %961 = vmatpush1.msra.mxu0 %v841
          %962 = vmatprep.subr.mxu0 %v846
          %963 = vmatpush1.msra.mxu0 %v845
          %964 = vmatprep.subr.mxu0 %v850
          %965 = vmatpush1.msra.mxu0 %v849
          %966 = vmatprep.subr.mxu0 %v854
          %967 = vmatpush1.msra.mxu0 %v853
          %968 = vmatprep.subr.mxu0 %v858
          %969 = vmatpush1.msra.mxu0 %v857
          %970 = vmatprep.subr.mxu0 %v862
          %971 = vmatpush1.msra.mxu0 %v861
          %972 = vmatprep.subr.mxu0 %v866
          %973 = vmatpush1.msra.mxu0 %v865
          %974 = vmatprep.subr.mxu0 %v870
          %975 = vmatpush1.msra.mxu0 %v869
          %976 = vmatprep.subr.mxu0 %v874
          %977 = vmatpush1.msra.mxu0 %v873
          %978 = vmatprep.subr.mxu0 0.0
          %979 = vmatpush1.msra.mxu0 0.0
          %980 = vmatprep.subr.mxu0 0.0
          %981 = vmatpush1.msra.mxu0 0.0
          %982 = vmatprep.subr.mxu0 0.0
          %983 = vmatpush1.msra.mxu0 0.0
          %984 = vmatprep.subr.mxu0 0.0
          %985 = vmatpush1.msra.mxu0 0.0
          %986 = vmatprep.subr.mxu0 0.0
          %987 = vmatpush1.msra.mxu0 0.0
          %988 = vmatprep.subr.mxu0 0.0
          %989 = vmatpush1.msra.mxu0 0.0
          %990 = vmatprep.subr.mxu0 0.0
          %991 = vmatpush1.msra.mxu0 0.0
          %992 = vmatprep.subr.mxu0 0.0
          %993 = vmatpush1.msra.mxu0 0.0
          %994 = vmatprep.subr.mxu0 0.0
          %995 = vmatpush1.msra.mxu0 0.0
          %996 = vmatprep.subr.mxu0 0.0
          %997 = vmatpush1.msra.mxu0 0.0
          %998 = vmatprep.subr.mxu0 0.0
          %999 = vmatpush1.msra.mxu0 0.0
          %1000 = vmatprep.subr.mxu0 0.0
          %1001 = vmatpush1.msra.mxu0 0.0
          %1002 = vmatprep.subr.mxu0 0.0
          %1003 = vmatpush1.msra.mxu0 0.0
          %1004 = vmatprep.subr.mxu0 0.0
          %1005 = vmatpush1.msra.mxu0 0.0
          %1006 = vmatprep.subr.mxu0 0.0
          %1007 = vmatpush1.msra.mxu0 0.0
          %1008 = vmatprep.subr.mxu0 0.0
          %1009 = vmatpush1.msra.mxu0 0.0
          %1010 = vmatprep.mubr.f32.mxu0 0.0
          %1011 = vmatmul.mubr.f32.gmra.mrb[0].mxu0 %v802
          %v1012 = vpop.f32.mrb[0].mxu0
          %v1013 = vadd.f32 0.0, %v1012
          %v1014 = vpop.f32.mrb[0].mxu0
          %v1015 = vadd.f32 0.0, %v1014
          %1016 = vdwg.mxu0
          %v1017 = vadd.f32 %v807, %v942
          %v1018 = vadd.f32 %v808, %v944
          %v1019 = vadd.f32 %v809, %v1013
          %v1020 = vadd.f32 %v810, %v1015
          %v1021 = vxor.u32 %v1017, 2147483648
          %v1022 = vxor.u32 %v1018, 2147483648
          %v1023 = vxor.u32 %v1019, 2147483648
          %v1024 = vmul.f32 %v1021, 1.442695
          %v1025 = vpow.pop %v1024
          %v1026 = vmul.f32 %v1022, 1.442695
          %v1027 = vpow.pop %v1026
          %v1028 = vmul.f32 %v1023, 1.442695
          %v1029 = vpow.pop %v1028
          %v1030 = vadd.f32 %v1025, 1.0
          %v1031 = vadd.f32 %v1027, 1.0
          %v1032 = vadd.f32 %v1029, 1.0
          %v1033 = vrcp.pop %v1030
          %v1034 = vmul.f32 1.0, %v1033
          %v1035 = vrcp.pop %v1031
          %v1036 = vmul.f32 1.0, %v1035
          %v1037 = vrcp.pop %v1032
          %v1038 = vmul.f32 1.0, %v1037
          %v1039 = vtanh.pop %v1020
          %v1040 = vmul.f32 %v1036, %v803
          %v1041 = vmul.f32 %v1034, %v1039
          %v1042 = vadd.f32 %v1040, %v1041
          %v1043 = vtanh.pop %v1042
          %v1044 = vmul.f32 %v1038, %v1043
          %s1045 = smul.u32 1, 4
          %s1046 = smul.addr %s1045, 8
          %s1047 = scalar_lea.vmem [#allocation4], %s1046
          %v1048 = vld [vmem:[%s1047] sm:$0xff]
          %v1049 = vld [vmem:[%s1047 + $0x8] sm:$0xff]
          %v1050 = vld [vmem:[%s1047 + $0x10] sm:$0xff]
          %v1051 = vld [vmem:[%s1047 + $0x18] sm:$0xff]
          %1052 = vmatprep.subr.mxu0 %v812
          %1053 = vmatpush1.msra.mxu0 %v811
          %1054 = vmatprep.subr.mxu0 %v816
          %1055 = vmatpush1.msra.mxu0 %v815
          %1056 = vmatprep.subr.mxu0 %v820
          %1057 = vmatpush1.msra.mxu0 %v819
          %1058 = vmatprep.subr.mxu0 %v824
          %1059 = vmatpush1.msra.mxu0 %v823
          %1060 = vmatprep.subr.mxu0 %v828
          %1061 = vmatpush1.msra.mxu0 %v827
          %1062 = vmatprep.subr.mxu0 %v832
          %1063 = vmatpush1.msra.mxu0 %v831
          %1064 = vmatprep.subr.mxu0 %v836
          %1065 = vmatpush1.msra.mxu0 %v835
          %1066 = vmatprep.subr.mxu0 %v840
          %1067 = vmatpush1.msra.mxu0 %v839
          %1068 = vmatprep.subr.mxu0 %v844
          %1069 = vmatpush1.msra.mxu0 %v843
          %1070 = vmatprep.subr.mxu0 %v848
          %1071 = vmatpush1.msra.mxu0 %v847
          %1072 = vmatprep.subr.mxu0 %v852
          %1073 = vmatpush1.msra.mxu0 %v851
          %1074 = vmatprep.subr.mxu0 %v856
          %1075 = vmatpush1.msra.mxu0 %v855
          %1076 = vmatprep.subr.mxu0 %v860
          %1077 = vmatpush1.msra.mxu0 %v859
          %1078 = vmatprep.subr.mxu0 %v864
          %1079 = vmatpush1.msra.mxu0 %v863
          %1080 = vmatprep.subr.mxu0 %v868
          %1081 = vmatpush1.msra.mxu0 %v867
          %1082 = vmatprep.subr.mxu0 %v872
          %1083 = vmatpush1.msra.mxu0 %v871
          %1084 = vmatprep.subr.mxu0 0.0
          %1085 = vmatpush1.msra.mxu0 0.0
          %1086 = vmatprep.subr.mxu0 0.0
          %1087 = vmatpush1.msra.mxu0 0.0
          %1088 = vmatprep.subr.mxu0 0.0
          %1089 = vmatpush1.msra.mxu0 0.0
          %1090 = vmatprep.subr.mxu0 0.0
          %1091 = vmatpush1.msra.mxu0 0.0
          %1092 = vmatprep.subr.mxu0 0.0
          %1093 = vmatpush1.msra.mxu0 0.0
          %1094 = vmatprep.subr.mxu0 0.0
          %1095 = vmatpush1.msra.mxu0 0.0
          %1096 = vmatprep.subr.mxu0 0.0
          %1097 = vmatpush1.msra.mxu0 0.0
          %1098 = vmatprep.subr.mxu0 0.0
          %1099 = vmatpush1.msra.mxu0 0.0
          %1100 = vmatprep.subr.mxu0 0.0
          %1101 = vmatpush1.msra.mxu0 0.0
          %1102 = vmatprep.subr.mxu0 0.0
          %1103 = vmatpush1.msra.mxu0 0.0
          %1104 = vmatprep.subr.mxu0 0.0
          %1105 = vmatpush1.msra.mxu0 0.0
          %1106 = vmatprep.subr.mxu0 0.0
          %1107 = vmatpush1.msra.mxu0 0.0
          %1108 = vmatprep.subr.mxu0 0.0
          %1109 = vmatpush1.msra.mxu0 0.0
          %1110 = vmatprep.subr.mxu0 0.0
          %1111 = vmatpush1.msra.mxu0 0.0
          %1112 = vmatprep.subr.mxu0 0.0
          %1113 = vmatpush1.msra.mxu0 0.0
          %1114 = vmatprep.subr.mxu0 0.0
          %1115 = vmatpush1.msra.mxu0 0.0
          %1116 = vmatprep.mubr.f32.mxu0 0.0
          %1117 = vmatmul.mubr.f32.gmra.mrb[0].mxu0 %v1044
          %v1118 = vpop.f32.mrb[0].mxu0
          %v1119 = vadd.f32 0.0, %v1118
          %v1120 = vpop.f32.mrb[0].mxu0
          %v1121 = vadd.f32 0.0, %v1120
          %1122 = vdwg.mxu0
          %1123 = vmatprep.subr.mxu0 %v814
          %1124 = vmatpush1.msra.mxu0 %v813
          %1125 = vmatprep.subr.mxu0 %v818
          %1126 = vmatpush1.msra.mxu0 %v817
          %1127 = vmatprep.subr.mxu0 %v822
          %1128 = vmatpush1.msra.mxu0 %v821
          %1129 = vmatprep.subr.mxu0 %v826
          %1130 = vmatpush1.msra.mxu0 %v825
          %1131 = vmatprep.subr.mxu0 %v830
          %1132 = vmatpush1.msra.mxu0 %v829
          %1133 = vmatprep.subr.mxu0 %v834
          %1134 = vmatpush1.msra.mxu0 %v833
          %1135 = vmatprep.subr.mxu0 %v838
          %1136 = vmatpush1.msra.mxu0 %v837
          %1137 = vmatprep.subr.mxu0 %v842
          %1138 = vmatpush1.msra.mxu0 %v841
          %1139 = vmatprep.subr.mxu0 %v846
          %1140 = vmatpush1.msra.mxu0 %v845
          %1141 = vmatprep.subr.mxu0 %v850
          %1142 = vmatpush1.msra.mxu0 %v849
          %1143 = vmatprep.subr.mxu0 %v854
          %1144 = vmatpush1.msra.mxu0 %v853
          %1145 = vmatprep.subr.mxu0 %v858
          %1146 = vmatpush1.msra.mxu0 %v857
          %1147 = vmatprep.subr.mxu0 %v862
          %1148 = vmatpush1.msra.mxu0 %v861
          %1149 = vmatprep.subr.mxu0 %v866
          %1150 = vmatpush1.msra.mxu0 %v865
          %1151 = vmatprep.subr.mxu0 %v870
          %1152 = vmatpush1.msra.mxu0 %v869
          %1153 = vmatprep.subr.mxu0 %v874
          %1154 = vmatpush1.msra.mxu0 %v873
          %1155 = vmatprep.subr.mxu0 0.0
          %1156 = vmatpush1.msra.mxu0 0.0
          %1157 = vmatprep.subr.mxu0 0.0
          %1158 = vmatpush1.msra.mxu0 0.0
          %1159 = vmatprep.subr.mxu0 0.0
          %1160 = vmatpush1.msra.mxu0 0.0
          %1161 = vmatprep.subr.mxu0 0.0
          %1162 = vmatpush1.msra.mxu0 0.0
          %1163 = vmatprep.subr.mxu0 0.0
          %1164 = vmatpush1.msra.mxu0 0.0
          %1165 = vmatprep.subr.mxu0 0.0
          %1166 = vmatpush1.msra.mxu0 0.0
          %1167 = vmatprep.subr.mxu0 0.0
          %1168 = vmatpush1.msra.mxu0 0.0
          %1169 = vmatprep.subr.mxu0 0.0
          %1170 = vmatpush1.msra.mxu0 0.0
          %1171 = vmatprep.subr.mxu0 0.0
          %1172 = vmatpush1.msra.mxu0 0.0
          %1173 = vmatprep.subr.mxu0 0.0
          %1174 = vmatpush1.msra.mxu0 0.0
          %1175 = vmatprep.subr.mxu0 0.0
          %1176 = vmatpush1.msra.mxu0 0.0
          %1177 = vmatprep.subr.mxu0 0.0
          %1178 = vmatpush1.msra.mxu0 0.0
          %1179 = vmatprep.subr.mxu0 0.0
          %1180 = vmatpush1.msra.mxu0 0.0
          %1181 = vmatprep.subr.mxu0 0.0
          %1182 = vmatpush1.msra.mxu0 0.0
          %1183 = vmatprep.subr.mxu0 0.0
          %1184 = vmatpush1.msra.mxu0 0.0
          %1185 = vmatprep.subr.mxu0 0.0
          %1186 = vmatpush1.msra.mxu0 0.0
          %1187 = vmatprep.mubr.f32.mxu0 0.0
          %1188 = vmatmul.mubr.f32.gmra.mrb[0].mxu0 %v1044
          %v1189 = vpop.f32.mrb[0].mxu0
          %v1190 = vadd.f32 0.0, %v1189
          %v1191 = vpop.f32.mrb[0].mxu0
          %v1192 = vadd.f32 0.0, %v1191
          %1193 = vdwg.mxu0
          %v1194 = vadd.f32 %v1048, %v1119
          %v1195 = vadd.f32 %v1049, %v1121
          %v1196 = vadd.f32 %v1050, %v1190
          %v1197 = vadd.f32 %v1051, %v1192
          %v1198 = vxor.u32 %v1194, 2147483648
          %v1199 = vxor.u32 %v1195, 2147483648
          %v1200 = vxor.u32 %v1196, 2147483648
          %v1201 = vmul.f32 %v1198, 1.442695
          %v1202 = vpow.pop %v1201
          %v1203 = vmul.f32 %v1199, 1.442695
          %v1204 = vpow.pop %v1203
          %v1205 = vmul.f32 %v1200, 1.442695
          %v1206 = vpow.pop %v1205
          %v1207 = vadd.f32 %v1202, 1.0
          %v1208 = vadd.f32 %v1204, 1.0
          %v1209 = vadd.f32 %v1206, 1.0
          %v1210 = vrcp.pop %v1207
          %v1211 = vmul.f32 1.0, %v1210
          %v1212 = vrcp.pop %v1208
          %v1213 = vmul.f32 1.0, %v1212
          %v1214 = vrcp.pop %v1209
          %v1215 = vmul.f32 1.0, %v1214
          %v1216 = vtanh.pop %v1197
          %v1217 = vmul.f32 %v1213, %v1042
          %v1218 = vmul.f32 %v1211, %v1216
          %v1219 = vadd.f32 %v1217, %v1218
          %v1220 = vtanh.pop %v1219
          %v1221 = vmul.f32 %v1215, %v1220
          %s1222 = smul.u32 2, 4
          %s1223 = smul.addr %s1222, 8
          %s1224 = scalar_lea.vmem [#allocation4], %s1223
          %v1225 = vld [vmem:[%s1224] sm:$0xff]
          %v1226 = vld [vmem:[%s1224 + $0x8] sm:$0xff]
          %v1227 = vld [vmem:[%s1224 + $0x10] sm:$0xff]
          %v1228 = vld [vmem:[%s1224 + $0x18] sm:$0xff]
          %1229 = vmatprep.subr.mxu0 %v812
          %1230 = vmatpush1.msra.mxu0 %v811
          %1231 = vmatprep.subr.mxu0 %v816
          %1232 = vmatpush1.msra.mxu0 %v815
          %1233 = vmatprep.subr.mxu0 %v820
          %1234 = vmatpush1.msra.mxu0 %v819
          %1235 = vmatprep.subr.mxu0 %v824
          %1236 = vmatpush1.msra.mxu0 %v823
          %1237 = vmatprep.subr.mxu0 %v828
          %1238 = vmatpush1.msra.mxu0 %v827
          %1239 = vmatprep.subr.mxu0 %v832
          %1240 = vmatpush1.msra.mxu0 %v831
          %1241 = vmatprep.subr.mxu0 %v836
          %1242 = vmatpush1.msra.mxu0 %v835
          %1243 = vmatprep.subr.mxu0 %v840
          %1244 = vmatpush1.msra.mxu0 %v839
          %1245 = vmatprep.subr.mxu0 %v844
          %1246 = vmatpush1.msra.mxu0 %v843
          %1247 = vmatprep.subr.mxu0 %v848
          %1248 = vmatpush1.msra.mxu0 %v847
          %1249 = vmatprep.subr.mxu0 %v852
          %1250 = vmatpush1.msra.mxu0 %v851
          %1251 = vmatprep.subr.mxu0 %v856
          %1252 = vmatpush1.msra.mxu0 %v855
          %1253 = vmatprep.subr.mxu0 %v860
          %1254 = vmatpush1.msra.mxu0 %v859
          %1255 = vmatprep.subr.mxu0 %v864
          %1256 = vmatpush1.msra.mxu0 %v863
          %1257 = vmatprep.subr.mxu0 %v868
          %1258 = vmatpush1.msra.mxu0 %v867
          %1259 = vmatprep.subr.mxu0 %v872
          %1260 = vmatpush1.msra.mxu0 %v871
          %1261 = vmatprep.subr.mxu0 0.0
          %1262 = vmatpush1.msra.mxu0 0.0
          %1263 = vmatprep.subr.mxu0 0.0
          %1264 = vmatpush1.msra.mxu0 0.0
          %1265 = vmatprep.subr.mxu0 0.0
          %1266 = vmatpush1.msra.mxu0 0.0
          %1267 = vmatprep.subr.mxu0 0.0
          %1268 = vmatpush1.msra.mxu0 0.0
          %1269 = vmatprep.subr.mxu0 0.0
          %1270 = vmatpush1.msra.mxu0 0.0
          %1271 = vmatprep.subr.mxu0 0.0
          %1272 = vmatpush1.msra.mxu0 0.0
          %1273 = vmatprep.subr.mxu0 0.0
          %1274 = vmatpush1.msra.mxu0 0.0
          %1275 = vmatprep.subr.mxu0 0.0
          %1276 = vmatpush1.msra.mxu0 0.0
          %1277 = vmatprep.subr.mxu0 0.0
          %1278 = vmatpush1.msra.mxu0 0.0
          %1279 = vmatprep.subr.mxu0 0.0
          %1280 = vmatpush1.msra.mxu0 0.0
          %1281 = vmatprep.subr.mxu0 0.0
          %1282 = vmatpush1.msra.mxu0 0.0
          %1283 = vmatprep.subr.mxu0 0.0
          %1284 = vmatpush1.msra.mxu0 0.0
          %1285 = vmatprep.subr.mxu0 0.0
          %1286 = vmatpush1.msra.mxu0 0.0
          %1287 = vmatprep.subr.mxu0 0.0
          %1288 = vmatpush1.msra.mxu0 0.0
          %1289 = vmatprep.subr.mxu0 0.0
          %1290 = vmatpush1.msra.mxu0 0.0
          %1291 = vmatprep.subr.mxu0 0.0
          %1292 = vmatpush1.msra.mxu0 0.0
          %1293 = vmatprep.mubr.f32.mxu0 0.0
          %1294 = vmatmul.mubr.f32.gmra.mrb[0].mxu0 %v1221
          %v1295 = vpop.f32.mrb[0].mxu0
          %v1296 = vadd.f32 0.0, %v1295
          %v1297 = vpop.f32.mrb[0].mxu0
          %v1298 = vadd.f32 0.0, %v1297
          %1299 = vdwg.mxu0
          %1300 = vmatprep.subr.mxu0 %v814
          %1301 = vmatpush1.msra.mxu0 %v813
          %1302 = vmatprep.subr.mxu0 %v818
          %1303 = vmatpush1.msra.mxu0 %v817
          %1304 = vmatprep.subr.mxu0 %v822
          %1305 = vmatpush1.msra.mxu0 %v821
          %1306 = vmatprep.subr.mxu0 %v826
          %1307 = vmatpush1.msra.mxu0 %v825
          %1308 = vmatprep.subr.mxu0 %v830
          %1309 = vmatpush1.msra.mxu0 %v829
          %1310 = vmatprep.subr.mxu0 %v834
          %1311 = vmatpush1.msra.mxu0 %v833
          %1312 = vmatprep.subr.mxu0 %v838
          %1313 = vmatpush1.msra.mxu0 %v837
          %1314 = vmatprep.subr.mxu0 %v842
          %1315 = vmatpush1.msra.mxu0 %v841
          %1316 = vmatprep.subr.mxu0 %v846
          %1317 = vmatpush1.msra.mxu0 %v845
          %1318 = vmatprep.subr.mxu0 %v850
          %1319 = vmatpush1.msra.mxu0 %v849
          %1320 = vmatprep.subr.mxu0 %v854
          %1321 = vmatpush1.msra.mxu0 %v853
          %1322 = vmatprep.subr.mxu0 %v858
          %1323 = vmatpush1.msra.mxu0 %v857
          %1324 = vmatprep.subr.mxu0 %v862
          %1325 = vmatpush1.msra.mxu0 %v861
          %1326 = vmatprep.subr.mxu0 %v866
          %1327 = vmatpush1.msra.mxu0 %v865
          %1328 = vmatprep.subr.mxu0 %v870
          %1329 = vmatpush1.msra.mxu0 %v869
          %1330 = vmatprep.subr.mxu0 %v874
          %1331 = vmatpush1.msra.mxu0 %v873
          %1332 = vmatprep.subr.mxu0 0.0
          %1333 = vmatpush1.msra.mxu0 0.0
          %1334 = vmatprep.subr.mxu0 0.0
          %1335 = vmatpush1.msra.mxu0 0.0
          %1336 = vmatprep.subr.mxu0 0.0
          %1337 = vmatpush1.msra.mxu0 0.0
          %1338 = vmatprep.subr.mxu0 0.0
          %1339 = vmatpush1.msra.mxu0 0.0
          %1340 = vmatprep.subr.mxu0 0.0
          %1341 = vmatpush1.msra.mxu0 0.0
          %1342 = vmatprep.subr.mxu0 0.0
          %1343 = vmatpush1.msra.mxu0 0.0
          %1344 = vmatprep.subr.mxu0 0.0
          %1345 = vmatpush1.msra.mxu0 0.0
          %1346 = vmatprep.subr.mxu0 0.0
          %1347 = vmatpush1.msra.mxu0 0.0
          %1348 = vmatprep.subr.mxu0 0.0
          %1349 = vmatpush1.msra.mxu0 0.0
          %1350 = vmatprep.subr.mxu0 0.0
          %1351 = vmatpush1.msra.mxu0 0.0
          %1352 = vmatprep.subr.mxu0 0.0
          %1353 = vmatpush1.msra.mxu0 0.0
          %1354 = vmatprep.subr.mxu0 0.0
          %1355 = vmatpush1.msra.mxu0 0.0
          %1356 = vmatprep.subr.mxu0 0.0
          %1357 = vmatpush1.msra.mxu0 0.0
          %1358 = vmatprep.subr.mxu0 0.0
          %1359 = vmatpush1.msra.mxu0 0.0
          %1360 = vmatprep.subr.mxu0 0.0
          %1361 = vmatpush1.msra.mxu0 0.0
          %1362 = vmatprep.subr.mxu0 0.0
          %1363 = vmatpush1.msra.mxu0 0.0
          %1364 = vmatprep.mubr.f32.mxu0 0.0
          %1365 = vmatmul.mubr.f32.gmra.mrb[0].mxu0 %v1221
          %v1366 = vpop.f32.mrb[0].mxu0
          %v1367 = vadd.f32 0.0, %v1366
          %v1368 = vpop.f32.mrb[0].mxu0
          %v1369 = vadd.f32 0.0, %v1368
          %1370 = vdwg.mxu0
          %v1371 = vadd.f32 %v1225, %v1296
          %v1372 = vadd.f32 %v1226, %v1298
          %v1373 = vadd.f32 %v1227, %v1367
          %v1374 = vadd.f32 %v1228, %v1369
          %v1375 = vxor.u32 %v1371, 2147483648
          %v1376 = vxor.u32 %v1372, 2147483648
          %v1377 = vxor.u32 %v1373, 2147483648
          %v1378 = vmul.f32 %v1375, 1.442695
          %v1379 = vpow.pop %v1378
          %v1380 = vmul.f32 %v1376, 1.442695
          %v1381 = vpow.pop %v1380
          %v1382 = vmul.f32 %v1377, 1.442695
          %v1383 = vpow.pop %v1382
          %v1384 = vadd.f32 %v1379, 1.0
          %v1385 = vadd.f32 %v1381, 1.0
          %v1386 = vadd.f32 %v1383, 1.0
          %v1387 = vrcp.pop %v1384
          %v1388 = vmul.f32 1.0, %v1387
          %v1389 = vrcp.pop %v1385
          %v1390 = vmul.f32 1.0, %v1389
          %v1391 = vrcp.pop %v1386
          %v1392 = vmul.f32 1.0, %v1391
          %v1393 = vtanh.pop %v1374
          %v1394 = vmul.f32 %v1390, %v1219
          %v1395 = vmul.f32 %v1388, %v1393
          %v1396 = vadd.f32 %v1394, %v1395
          %v1397 = vtanh.pop %v1396
          %v1398 = vmul.f32 %v1392, %v1397
          %s1399 = smul.u32 3, 4
          %s1400 = smul.addr %s1399, 8
          %s1401 = scalar_lea.vmem [#allocation4], %s1400
          %v1402 = vld [vmem:[%s1401] sm:$0xff]
          %v1403 = vld [vmem:[%s1401 + $0x8] sm:$0xff]
          %v1404 = vld [vmem:[%s1401 + $0x10] sm:$0xff]
          %v1405 = vld [vmem:[%s1401 + $0x18] sm:$0xff]
          %1406 = vmatprep.subr.mxu0 %v812
          %1407 = vmatpush1.msra.mxu0 %v811
          %1408 = vmatprep.subr.mxu0 %v816
          %1409 = vmatpush1.msra.mxu0 %v815
          %1410 = vmatprep.subr.mxu0 %v820
          %1411 = vmatpush1.msra.mxu0 %v819
          %1412 = vmatprep.subr.mxu0 %v824
          %1413 = vmatpush1.msra.mxu0 %v823
          %1414 = vmatprep.subr.mxu0 %v828
          %1415 = vmatpush1.msra.mxu0 %v827
          %1416 = vmatprep.subr.mxu0 %v832
          %1417 = vmatpush1.msra.mxu0 %v831
          %1418 = vmatprep.subr.mxu0 %v836
          %1419 = vmatpush1.msra.mxu0 %v835
          %1420 = vmatprep.subr.mxu0 %v840
          %1421 = vmatpush1.msra.mxu0 %v839
          %1422 = vmatprep.subr.mxu0 %v844
          %1423 = vmatpush1.msra.mxu0 %v843
          %1424 = vmatprep.subr.mxu0 %v848
          %1425 = vmatpush1.msra.mxu0 %v847
          %1426 = vmatprep.subr.mxu0 %v852
          %1427 = vmatpush1.msra.mxu0 %v851
          %1428 = vmatprep.subr.mxu0 %v856
          %1429 = vmatpush1.msra.mxu0 %v855
          %1430 = vmatprep.subr.mxu0 %v860
          %1431 = vmatpush1.msra.mxu0 %v859
          %1432 = vmatprep.subr.mxu0 %v864
          %1433 = vmatpush1.msra.mxu0 %v863
          %1434 = vmatprep.subr.mxu0 %v868
          %1435 = vmatpush1.msra.mxu0 %v867
          %1436 = vmatprep.subr.mxu0 %v872
          %1437 = vmatpush1.msra.mxu0 %v871
          %1438 = vmatprep.subr.mxu0 0.0
          %1439 = vmatpush1.msra.mxu0 0.0
          %1440 = vmatprep.subr.mxu0 0.0
          %1441 = vmatpush1.msra.mxu0 0.0
          %1442 = vmatprep.subr.mxu0 0.0
          %1443 = vmatpush1.msra.mxu0 0.0
          %1444 = vmatprep.subr.mxu0 0.0
          %1445 = vmatpush1.msra.mxu0 0.0
          %1446 = vmatprep.subr.mxu0 0.0
          %1447 = vmatpush1.msra.mxu0 0.0
          %1448 = vmatprep.subr.mxu0 0.0
          %1449 = vmatpush1.msra.mxu0 0.0
          %1450 = vmatprep.subr.mxu0 0.0
          %1451 = vmatpush1.msra.mxu0 0.0
          %1452 = vmatprep.subr.mxu0 0.0
          %1453 = vmatpush1.msra.mxu0 0.0
          %1454 = vmatprep.subr.mxu0 0.0
          %1455 = vmatpush1.msra.mxu0 0.0
          %1456 = vmatprep.subr.mxu0 0.0
          %1457 = vmatpush1.msra.mxu0 0.0
          %1458 = vmatprep.subr.mxu0 0.0
          %1459 = vmatpush1.msra.mxu0 0.0
          %1460 = vmatprep.subr.mxu0 0.0
          %1461 = vmatpush1.msra.mxu0 0.0
          %1462 = vmatprep.subr.mxu0 0.0
          %1463 = vmatpush1.msra.mxu0 0.0
          %1464 = vmatprep.subr.mxu0 0.0
          %1465 = vmatpush1.msra.mxu0 0.0
          %1466 = vmatprep.subr.mxu0 0.0
          %1467 = vmatpush1.msra.mxu0 0.0
          %1468 = vmatprep.subr.mxu0 0.0
          %1469 = vmatpush1.msra.mxu0 0.0
          %1470 = vmatprep.mubr.f32.mxu0 0.0
          %1471 = vmatmul.mubr.f32.gmra.mrb[0].mxu0 %v1398
          %v1472 = vpop.f32.mrb[0].mxu0
          %v1473 = vadd.f32 0.0, %v1472
          %v1474 = vpop.f32.mrb[0].mxu0
          %v1475 = vadd.f32 0.0, %v1474
          %1476 = vdwg.mxu0
          %1477 = vmatprep.subr.mxu0 %v814
          %1478 = vmatpush1.msra.mxu0 %v813
          %1479 = vmatprep.subr.mxu0 %v818
          %1480 = vmatpush1.msra.mxu0 %v817
          %1481 = vmatprep.subr.mxu0 %v822
          %1482 = vmatpush1.msra.mxu0 %v821
          %1483 = vmatprep.subr.mxu0 %v826
          %1484 = vmatpush1.msra.mxu0 %v825
          %1485 = vmatprep.subr.mxu0 %v830
          %1486 = vmatpush1.msra.mxu0 %v829
          %1487 = vmatprep.subr.mxu0 %v834
          %1488 = vmatpush1.msra.mxu0 %v833
          %1489 = vmatprep.subr.mxu0 %v838
          %1490 = vmatpush1.msra.mxu0 %v837
          %1491 = vmatprep.subr.mxu0 %v842
          %1492 = vmatpush1.msra.mxu0 %v841
          %1493 = vmatprep.subr.mxu0 %v846
          %1494 = vmatpush1.msra.mxu0 %v845
          %1495 = vmatprep.subr.mxu0 %v850
          %1496 = vmatpush1.msra.mxu0 %v849
          %1497 = vmatprep.subr.mxu0 %v854
          %1498 = vmatpush1.msra.mxu0 %v853
          %1499 = vmatprep.subr.mxu0 %v858
          %1500 = vmatpush1.msra.mxu0 %v857
          %1501 = vmatprep.subr.mxu0 %v862
          %1502 = vmatpush1.msra.mxu0 %v861
          %1503 = vmatprep.subr.mxu0 %v866
          %1504 = vmatpush1.msra.mxu0 %v865
          %1505 = vmatprep.subr.mxu0 %v870
          %1506 = vmatpush1.msra.mxu0 %v869
          %1507 = vmatprep.subr.mxu0 %v874
          %1508 = vmatpush1.msra.mxu0 %v873
          %1509 = vmatprep.subr.mxu0 0.0
          %1510 = vmatpush1.msra.mxu0 0.0
          %1511 = vmatprep.subr.mxu0 0.0
          %1512 = vmatpush1.msra.mxu0 0.0
          %1513 = vmatprep.subr.mxu0 0.0
          %1514 = vmatpush1.msra.mxu0 0.0
          %1515 = vmatprep.subr.mxu0 0.0
          %1516 = vmatpush1.msra.mxu0 0.0
          %1517 = vmatprep.subr.mxu0 0.0
          %1518 = vmatpush1.msra.mxu0 0.0
          %1519 = vmatprep.subr.mxu0 0.0
          %1520 = vmatpush1.msra.mxu0 0.0
          %1521 = vmatprep.subr.mxu0 0.0
          %1522 = vmatpush1.msra.mxu0 0.0
          %1523 = vmatprep.subr.mxu0 0.0
          %1524 = vmatpush1.msra.mxu0 0.0
          %1525 = vmatprep.subr.mxu0 0.0
          %1526 = vmatpush1.msra.mxu0 0.0
          %1527 = vmatprep.subr.mxu0 0.0
          %1528 = vmatpush1.msra.mxu0 0.0
          %1529 = vmatprep.subr.mxu0 0.0
          %1530 = vmatpush1.msra.mxu0 0.0
          %1531 = vmatprep.subr.mxu0 0.0
          %1532 = vmatpush1.msra.mxu0 0.0
          %1533 = vmatprep.subr.mxu0 0.0
          %1534 = vmatpush1.msra.mxu0 0.0
          %1535 = vmatprep.subr.mxu0 0.0
          %1536 = vmatpush1.msra.mxu0 0.0
          %1537 = vmatprep.subr.mxu0 0.0
          %1538 = vmatpush1.msra.mxu0 0.0
          %1539 = vmatprep.subr.mxu0 0.0
          %1540 = vmatpush1.msra.mxu0 0.0
          %1541 = vmatprep.mubr.f32.mxu0 0.0
          %1542 = vmatmul.mubr.f32.gmra.mrb[0].mxu0 %v1398
          %v1543 = vpop.f32.mrb[0].mxu0
          %v1544 = vadd.f32 0.0, %v1543
          %v1545 = vpop.f32.mrb[0].mxu0
          %v1546 = vadd.f32 0.0, %v1545
          %1547 = vdwg.mxu0
          %v1548 = vadd.f32 %v1402, %v1473
          %v1549 = vadd.f32 %v1403, %v1475
          %v1550 = vadd.f32 %v1404, %v1544
          %v1551 = vadd.f32 %v1405, %v1546
          %v1552 = vxor.u32 %v1548, 2147483648
          %v1553 = vxor.u32 %v1549, 2147483648
          %v1554 = vxor.u32 %v1550, 2147483648
          %v1555 = vmul.f32 %v1552, 1.442695
          %v1556 = vpow.pop %v1555
          %v1557 = vmul.f32 %v1553, 1.442695
          %v1558 = vpow.pop %v1557
          %v1559 = vmul.f32 %v1554, 1.442695
          %v1560 = vpow.pop %v1559
          %v1561 = vadd.f32 %v1556, 1.0
          %v1562 = vadd.f32 %v1558, 1.0
          %v1563 = vadd.f32 %v1560, 1.0
          %v1564 = vrcp.pop %v1561
          %v1565 = vmul.f32 1.0, %v1564
          %v1566 = vrcp.pop %v1562
          %v1567 = vmul.f32 1.0, %v1566
          %v1568 = vrcp.pop %v1563
          %v1569 = vmul.f32 1.0, %v1568
          %v1570 = vtanh.pop %v1551
          %v1571 = vmul.f32 %v1567, %v1396
          %v1572 = vmul.f32 %v1565, %v1570
          %v1573 = vadd.f32 %v1571, %v1572
          %v1574 = vtanh.pop %v1573
          %v1575 = vmul.f32 %v1569, %v1574
          %1576 = vst [vmem:[#allocation2] sm:$0xff] %v1575
          %1577 = vst [vmem:[#allocation3] sm:$0xff] %v1573
        $region104: #{tpu_custom_call.1} parent=67 // pred_fallthru
          _
        %p1578 = scmp.eq.s32.totalorder %s30, 2
        // Predicated region
        $region105: #{tpu_custom_call.1} parent=67 // pred_check
          %p1579 = pneg %p1578
        $region106: #{tpu_custom_call.1} parent=67 // pred_check_branch
          %1581 = sbr.rel (%p1579) target = $region108
        $region107: #{tpu_custom_call.1} parent=67 // pred_region
          %v1582 = vld [vmem:[#allocation2] sm:$0xff]
          %v1583 = vld [vmem:[#allocation3] sm:$0xff]
          %s1584 = smul.u32 0, 4
          %s1585 = smul.addr %s1584, 8
          %s1586 = scalar_lea.vmem [#allocation4], %s1585
          %v1587 = vld [vmem:[%s1586] sm:$0xff]
          %v1588 = vld [vmem:[%s1586 + $0x8] sm:$0xff]
          %v1589 = vld [vmem:[%s1586 + $0x10] sm:$0xff]
          %v1590 = vld [vmem:[%s1586 + $0x18] sm:$0xff]
          %v1591 = vld [vmem:[#allocation10] sm:$0xff]
          %v1592 = vld [vmem:[#allocation10 + $0x8] sm:$0xff]
          %v1593 = vld [vmem:[#allocation10 + $0x10] sm:$0xff]
          %v1594 = vld [vmem:[#allocation10 + $0x18] sm:$0xff]
          %v1595 = vld [vmem:[#allocation10 + $0x20] sm:$0xff]
          %v1596 = vld [vmem:[#allocation10 + $0x28] sm:$0xff]
          %v1597 = vld [vmem:[#allocation10 + $0x30] sm:$0xff]
          %v1598 = vld [vmem:[#allocation10 + $0x38] sm:$0xff]
          %v1599 = vld [vmem:[#allocation10 + $0x40] sm:$0xff]
          %v1600 = vld [vmem:[#allocation10 + $0x48] sm:$0xff]
          %v1601 = vld [vmem:[#allocation10 + $0x50] sm:$0xff]
          %v1602 = vld [vmem:[#allocation10 + $0x58] sm:$0xff]
          %v1603 = vld [vmem:[#allocation10 + $0x60] sm:$0xff]
          %v1604 = vld [vmem:[#allocation10 + $0x68] sm:$0xff]
          %v1605 = vld [vmem:[#allocation10 + $0x70] sm:$0xff]
          %v1606 = vld [vmem:[#allocation10 + $0x78] sm:$0xff]
          %v1607 = vld [vmem:[#allocation10 + $0x80] sm:$0xff]
          %v1608 = vld [vmem:[#allocation10 + $0x88] sm:$0xff]
          %v1609 = vld [vmem:[#allocation10 + $0x90] sm:$0xff]
          %v1610 = vld [vmem:[#allocation10 + $0x98] sm:$0xff]
          %v1611 = vld [vmem:[#allocation10 + $0xa0] sm:$0xff]
          %v1612 = vld [vmem:[#allocation10 + $0xa8] sm:$0xff]
          %v1613 = vld [vmem:[#allocation10 + $0xb0] sm:$0xff]
          %v1614 = vld [vmem:[#allocation10 + $0xb8] sm:$0xff]
          %v1615 = vld [vmem:[#allocation10 + $0xc0] sm:$0xff]
          %v1616 = vld [vmem:[#allocation10 + $0xc8] sm:$0xff]
          %v1617 = vld [vmem:[#allocation10 + $0xd0] sm:$0xff]
          %v1618 = vld [vmem:[#allocation10 + $0xd8] sm:$0xff]
          %v1619 = vld [vmem:[#allocation10 + $0xe0] sm:$0xff]
          %v1620 = vld [vmem:[#allocation10 + $0xe8] sm:$0xff]
          %v1621 = vld [vmem:[#allocation10 + $0xf0] sm:$0xff]
          %v1622 = vld [vmem:[#allocation10 + $0xf8] sm:$0xff]
          %v1623 = vld [vmem:[#allocation10 + $0x100] sm:$0xff]
          %v1624 = vld [vmem:[#allocation10 + $0x108] sm:$0xff]
          %v1625 = vld [vmem:[#allocation10 + $0x110] sm:$0xff]
          %v1626 = vld [vmem:[#allocation10 + $0x118] sm:$0xff]
          %v1627 = vld [vmem:[#allocation10 + $0x120] sm:$0xff]
          %v1628 = vld [vmem:[#allocation10 + $0x128] sm:$0xff]
          %v1629 = vld [vmem:[#allocation10 + $0x130] sm:$0xff]
          %v1630 = vld [vmem:[#allocation10 + $0x138] sm:$0xff]
          %v1631 = vld [vmem:[#allocation10 + $0x140] sm:$0xff]
          %v1632 = vld [vmem:[#allocation10 + $0x148] sm:$0xff]
          %v1633 = vld [vmem:[#allocation10 + $0x150] sm:$0xff]
          %v1634 = vld [vmem:[#allocation10 + $0x158] sm:$0xff]
          %v1635 = vld [vmem:[#allocation10 + $0x160] sm:$0xff]
          %v1636 = vld [vmem:[#allocation10 + $0x168] sm:$0xff]
          %v1637 = vld [vmem:[#allocation10 + $0x170] sm:$0xff]
          %v1638 = vld [vmem:[#allocation10 + $0x178] sm:$0xff]
          %v1639 = vld [vmem:[#allocation10 + $0x180] sm:$0xff]
          %v1640 = vld [vmem:[#allocation10 + $0x188] sm:$0xff]
          %v1641 = vld [vmem:[#allocation10 + $0x190] sm:$0xff]
          %v1642 = vld [vmem:[#allocation10 + $0x198] sm:$0xff]
          %v1643 = vld [vmem:[#allocation10 + $0x1a0] sm:$0xff]
          %v1644 = vld [vmem:[#allocation10 + $0x1a8] sm:$0xff]
          %v1645 = vld [vmem:[#allocation10 + $0x1b0] sm:$0xff]
          %v1646 = vld [vmem:[#allocation10 + $0x1b8] sm:$0xff]
          %v1647 = vld [vmem:[#allocation10 + $0x1c0] sm:$0xff]
          %v1648 = vld [vmem:[#allocation10 + $0x1c8] sm:$0xff]
          %v1649 = vld [vmem:[#allocation10 + $0x1d0] sm:$0xff]
          %v1650 = vld [vmem:[#allocation10 + $0x1d8] sm:$0xff]
          %v1651 = vld [vmem:[#allocation10 + $0x1e0] sm:$0xff]
          %v1652 = vld [vmem:[#allocation10 + $0x1e8] sm:$0xff]
          %v1653 = vld [vmem:[#allocation10 + $0x1f0] sm:$0xff]
          %v1654 = vld [vmem:[#allocation10 + $0x1f8] sm:$0xff]
          %1655 = vmatprep.subr.mxu0 %v1592
          %1656 = vmatpush1.msra.mxu0 %v1591
          %1657 = vmatprep.subr.mxu0 %v1596
          %1658 = vmatpush1.msra.mxu0 %v1595
          %1659 = vmatprep.subr.mxu0 %v1600
          %1660 = vmatpush1.msra.mxu0 %v1599
          %1661 = vmatprep.subr.mxu0 %v1604
          %1662 = vmatpush1.msra.mxu0 %v1603
          %1663 = vmatprep.subr.mxu0 %v1608
          %1664 = vmatpush1.msra.mxu0 %v1607
          %1665 = vmatprep.subr.mxu0 %v1612
          %1666 = vmatpush1.msra.mxu0 %v1611
          %1667 = vmatprep.subr.mxu0 %v1616
          %1668 = vmatpush1.msra.mxu0 %v1615
          %1669 = vmatprep.subr.mxu0 %v1620
          %1670 = vmatpush1.msra.mxu0 %v1619
          %1671 = vmatprep.subr.mxu0 %v1624
          %1672 = vmatpush1.msra.mxu0 %v1623
          %1673 = vmatprep.subr.mxu0 %v1628
          %1674 = vmatpush1.msra.mxu0 %v1627
          %1675 = vmatprep.subr.mxu0 %v1632
          %1676 = vmatpush1.msra.mxu0 %v1631
          %1677 = vmatprep.subr.mxu0 %v1636
          %1678 = vmatpush1.msra.mxu0 %v1635
          %1679 = vmatprep.subr.mxu0 %v1640
          %1680 = vmatpush1.msra.mxu0 %v1639
          %1681 = vmatprep.subr.mxu0 %v1644
          %1682 = vmatpush1.msra.mxu0 %v1643
          %1683 = vmatprep.subr.mxu0 %v1648
          %1684 = vmatpush1.msra.mxu0 %v1647
          %1685 = vmatprep.subr.mxu0 %v1652
          %1686 = vmatpush1.msra.mxu0 %v1651
          %1687 = vmatprep.subr.mxu0 0.0
          %1688 = vmatpush1.msra.mxu0 0.0
          %1689 = vmatprep.subr.mxu0 0.0
          %1690 = vmatpush1.msra.mxu0 0.0
          %1691 = vmatprep.subr.mxu0 0.0
          %1692 = vmatpush1.msra.mxu0 0.0
          %1693 = vmatprep.subr.mxu0 0.0
          %1694 = vmatpush1.msra.mxu0 0.0
          %1695 = vmatprep.subr.mxu0 0.0
          %1696 = vmatpush1.msra.mxu0 0.0
          %1697 = vmatprep.subr.mxu0 0.0
          %1698 = vmatpush1.msra.mxu0 0.0
          %1699 = vmatprep.subr.mxu0 0.0
          %1700 = vmatpush1.msra.mxu0 0.0
          %1701 = vmatprep.subr.mxu0 0.0
          %1702 = vmatpush1.msra.mxu0 0.0
          %1703 = vmatprep.subr.mxu0 0.0
          %1704 = vmatpush1.msra.mxu0 0.0
          %1705 = vmatprep.subr.mxu0 0.0
          %1706 = vmatpush1.msra.mxu0 0.0
          %1707 = vmatprep.subr.mxu0 0.0
          %1708 = vmatpush1.msra.mxu0 0.0
          %1709 = vmatprep.subr.mxu0 0.0
          %1710 = vmatpush1.msra.mxu0 0.0
          %1711 = vmatprep.subr.mxu0 0.0
          %1712 = vmatpush1.msra.mxu0 0.0
          %1713 = vmatprep.subr.mxu0 0.0
          %1714 = vmatpush1.msra.mxu0 0.0
          %1715 = vmatprep.subr.mxu0 0.0
          %1716 = vmatpush1.msra.mxu0 0.0
          %1717 = vmatprep.subr.mxu0 0.0
          %1718 = vmatpush1.msra.mxu0 0.0
          %1719 = vmatprep.mubr.f32.mxu0 0.0
          %1720 = vmatmul.mubr.f32.gmra.mrb[0].mxu0 %v1582
          %v1721 = vpop.f32.mrb[0].mxu0
          %v1722 = vadd.f32 0.0, %v1721
          %v1723 = vpop.f32.mrb[0].mxu0
          %v1724 = vadd.f32 0.0, %v1723
          %1725 = vdwg.mxu0
          %1726 = vmatprep.subr.mxu0 %v1594
          %1727 = vmatpush1.msra.mxu0 %v1593
          %1728 = vmatprep.subr.mxu0 %v1598
          %1729 = vmatpush1.msra.mxu0 %v1597
          %1730 = vmatprep.subr.mxu0 %v1602
          %1731 = vmatpush1.msra.mxu0 %v1601
          %1732 = vmatprep.subr.mxu0 %v1606
          %1733 = vmatpush1.msra.mxu0 %v1605
          %1734 = vmatprep.subr.mxu0 %v1610
          %1735 = vmatpush1.msra.mxu0 %v1609
          %1736 = vmatprep.subr.mxu0 %v1614
          %1737 = vmatpush1.msra.mxu0 %v1613
          %1738 = vmatprep.subr.mxu0 %v1618
          %1739 = vmatpush1.msra.mxu0 %v1617
          %1740 = vmatprep.subr.mxu0 %v1622
          %1741 = vmatpush1.msra.mxu0 %v1621
          %1742 = vmatprep.subr.mxu0 %v1626
          %1743 = vmatpush1.msra.mxu0 %v1625
          %1744 = vmatprep.subr.mxu0 %v1630
          %1745 = vmatpush1.msra.mxu0 %v1629
          %1746 = vmatprep.subr.mxu0 %v1634
          %1747 = vmatpush1.msra.mxu0 %v1633
          %1748 = vmatprep.subr.mxu0 %v1638
          %1749 = vmatpush1.msra.mxu0 %v1637
          %1750 = vmatprep.subr.mxu0 %v1642
          %1751 = vmatpush1.msra.mxu0 %v1641
          %1752 = vmatprep.subr.mxu0 %v1646
          %1753 = vmatpush1.msra.mxu0 %v1645
          %1754 = vmatprep.subr.mxu0 %v1650
          %1755 = vmatpush1.msra.mxu0 %v1649
          %1756 = vmatprep.subr.mxu0 %v1654
          %1757 = vmatpush1.msra.mxu0 %v1653
          %1758 = vmatprep.subr.mxu0 0.0
          %1759 = vmatpush1.msra.mxu0 0.0
          %1760 = vmatprep.subr.mxu0 0.0
          %1761 = vmatpush1.msra.mxu0 0.0
          %1762 = vmatprep.subr.mxu0 0.0
          %1763 = vmatpush1.msra.mxu0 0.0
          %1764 = vmatprep.subr.mxu0 0.0
          %1765 = vmatpush1.msra.mxu0 0.0
          %1766 = vmatprep.subr.mxu0 0.0
          %1767 = vmatpush1.msra.mxu0 0.0
          %1768 = vmatprep.subr.mxu0 0.0
          %1769 = vmatpush1.msra.mxu0 0.0
          %1770 = vmatprep.subr.mxu0 0.0
          %1771 = vmatpush1.msra.mxu0 0.0
          %1772 = vmatprep.subr.mxu0 0.0
          %1773 = vmatpush1.msra.mxu0 0.0
          %1774 = vmatprep.subr.mxu0 0.0
          %1775 = vmatpush1.msra.mxu0 0.0
          %1776 = vmatprep.subr.mxu0 0.0
          %1777 = vmatpush1.msra.mxu0 0.0
          %1778 = vmatprep.subr.mxu0 0.0
          %1779 = vmatpush1.msra.mxu0 0.0
          %1780 = vmatprep.subr.mxu0 0.0
          %1781 = vmatpush1.msra.mxu0 0.0
          %1782 = vmatprep.subr.mxu0 0.0
          %1783 = vmatpush1.msra.mxu0 0.0
          %1784 = vmatprep.subr.mxu0 0.0
          %1785 = vmatpush1.msra.mxu0 0.0
          %1786 = vmatprep.subr.mxu0 0.0
          %1787 = vmatpush1.msra.mxu0 0.0
          %1788 = vmatprep.subr.mxu0 0.0
          %1789 = vmatpush1.msra.mxu0 0.0
          %1790 = vmatprep.mubr.f32.mxu0 0.0
          %1791 = vmatmul.mubr.f32.gmra.mrb[0].mxu0 %v1582
          %v1792 = vpop.f32.mrb[0].mxu0
          %v1793 = vadd.f32 0.0, %v1792
          %v1794 = vpop.f32.mrb[0].mxu0
          %v1795 = vadd.f32 0.0, %v1794
          %1796 = vdwg.mxu0
          %v1797 = vadd.f32 %v1587, %v1722
          %v1798 = vadd.f32 %v1588, %v1724
          %v1799 = vadd.f32 %v1589, %v1793
          %v1800 = vadd.f32 %v1590, %v1795
          %v1801 = vxor.u32 %v1797, 2147483648
          %v1802 = vxor.u32 %v1798, 2147483648
          %v1803 = vxor.u32 %v1799, 2147483648
          %v1804 = vmul.f32 %v1801, 1.442695
          %v1805 = vpow.pop %v1804
          %v1806 = vmul.f32 %v1802, 1.442695
          %v1807 = vpow.pop %v1806
          %v1808 = vmul.f32 %v1803, 1.442695
          %v1809 = vpow.pop %v1808
          %v1810 = vadd.f32 %v1805, 1.0
          %v1811 = vadd.f32 %v1807, 1.0
          %v1812 = vadd.f32 %v1809, 1.0
          %v1813 = vrcp.pop %v1810
          %v1814 = vmul.f32 1.0, %v1813
          %v1815 = vrcp.pop %v1811
          %v1816 = vmul.f32 1.0, %v1815
          %v1817 = vrcp.pop %v1812
          %v1818 = vmul.f32 1.0, %v1817
          %v1819 = vtanh.pop %v1800
          %v1820 = vmul.f32 %v1816, %v1583
          %v1821 = vmul.f32 %v1814, %v1819
          %v1822 = vadd.f32 %v1820, %v1821
          %v1823 = vtanh.pop %v1822
          %v1824 = vmul.f32 %v1818, %v1823
          %s1825 = smul.u32 %s30, 4
          %p1826 = scmp.lt.s32.totalorder %s1825, 10
          %s1827 = scalar_select %p1826, 1, 0
          %v1828 = vstv %s1827
          %vm1829 = vcmp.eq.s32.totalorder %v1828, 1
          %v1830 = vsel %vm1829, %v1824, %v1582
          %v1831 = vsel %vm1829, %v1822, %v1583
          %s1832 = smul.u32 1, 4
          %s1833 = smul.addr %s1832, 8
          %s1834 = scalar_lea.vmem [#allocation4], %s1833
          %v1835 = vld [vmem:[%s1834] sm:$0xff]
          %v1836 = vld [vmem:[%s1834 + $0x8] sm:$0xff]
          %v1837 = vld [vmem:[%s1834 + $0x10] sm:$0xff]
          %v1838 = vld [vmem:[%s1834 + $0x18] sm:$0xff]
          %1839 = vmatprep.subr.mxu0 %v1592
          %1840 = vmatpush1.msra.mxu0 %v1591
          %1841 = vmatprep.subr.mxu0 %v1596
          %1842 = vmatpush1.msra.mxu0 %v1595
          %1843 = vmatprep.subr.mxu0 %v1600
          %1844 = vmatpush1.msra.mxu0 %v1599
          %1845 = vmatprep.subr.mxu0 %v1604
          %1846 = vmatpush1.msra.mxu0 %v1603
          %1847 = vmatprep.subr.mxu0 %v1608
          %1848 = vmatpush1.msra.mxu0 %v1607
          %1849 = vmatprep.subr.mxu0 %v1612
          %1850 = vmatpush1.msra.mxu0 %v1611
          %1851 = vmatprep.subr.mxu0 %v1616
          %1852 = vmatpush1.msra.mxu0 %v1615
          %1853 = vmatprep.subr.mxu0 %v1620
          %1854 = vmatpush1.msra.mxu0 %v1619
          %1855 = vmatprep.subr.mxu0 %v1624
          %1856 = vmatpush1.msra.mxu0 %v1623
          %1857 = vmatprep.subr.mxu0 %v1628
          %1858 = vmatpush1.msra.mxu0 %v1627
          %1859 = vmatprep.subr.mxu0 %v1632
          %1860 = vmatpush1.msra.mxu0 %v1631
          %1861 = vmatprep.subr.mxu0 %v1636
          %1862 = vmatpush1.msra.mxu0 %v1635
          %1863 = vmatprep.subr.mxu0 %v1640
          %1864 = vmatpush1.msra.mxu0 %v1639
          %1865 = vmatprep.subr.mxu0 %v1644
          %1866 = vmatpush1.msra.mxu0 %v1643
          %1867 = vmatprep.subr.mxu0 %v1648
          %1868 = vmatpush1.msra.mxu0 %v1647
          %1869 = vmatprep.subr.mxu0 %v1652
          %1870 = vmatpush1.msra.mxu0 %v1651
          %1871 = vmatprep.subr.mxu0 0.0
          %1872 = vmatpush1.msra.mxu0 0.0
          %1873 = vmatprep.subr.mxu0 0.0
          %1874 = vmatpush1.msra.mxu0 0.0
          %1875 = vmatprep.subr.mxu0 0.0
          %1876 = vmatpush1.msra.mxu0 0.0
          %1877 = vmatprep.subr.mxu0 0.0
          %1878 = vmatpush1.msra.mxu0 0.0
          %1879 = vmatprep.subr.mxu0 0.0
          %1880 = vmatpush1.msra.mxu0 0.0
          %1881 = vmatprep.subr.mxu0 0.0
          %1882 = vmatpush1.msra.mxu0 0.0
          %1883 = vmatprep.subr.mxu0 0.0
          %1884 = vmatpush1.msra.mxu0 0.0
          %1885 = vmatprep.subr.mxu0 0.0
          %1886 = vmatpush1.msra.mxu0 0.0
          %1887 = vmatprep.subr.mxu0 0.0
          %1888 = vmatpush1.msra.mxu0 0.0
          %1889 = vmatprep.subr.mxu0 0.0
          %1890 = vmatpush1.msra.mxu0 0.0
          %1891 = vmatprep.subr.mxu0 0.0
          %1892 = vmatpush1.msra.mxu0 0.0
          %1893 = vmatprep.subr.mxu0 0.0
          %1894 = vmatpush1.msra.mxu0 0.0
          %1895 = vmatprep.subr.mxu0 0.0
          %1896 = vmatpush1.msra.mxu0 0.0
          %1897 = vmatprep.subr.mxu0 0.0
          %1898 = vmatpush1.msra.mxu0 0.0
          %1899 = vmatprep.subr.mxu0 0.0
          %1900 = vmatpush1.msra.mxu0 0.0
          %1901 = vmatprep.subr.mxu0 0.0
          %1902 = vmatpush1.msra.mxu0 0.0
          %1903 = vmatprep.mubr.f32.mxu0 0.0
          %1904 = vmatmul.mubr.f32.gmra.mrb[0].mxu0 %v1830
          %v1905 = vpop.f32.mrb[0].mxu0
          %v1906 = vadd.f32 0.0, %v1905
          %v1907 = vpop.f32.mrb[0].mxu0
          %v1908 = vadd.f32 0.0, %v1907
          %1909 = vdwg.mxu0
          %1910 = vmatprep.subr.mxu0 %v1594
          %1911 = vmatpush1.msra.mxu0 %v1593
          %1912 = vmatprep.subr.mxu0 %v1598
          %1913 = vmatpush1.msra.mxu0 %v1597
          %1914 = vmatprep.subr.mxu0 %v1602
          %1915 = vmatpush1.msra.mxu0 %v1601
          %1916 = vmatprep.subr.mxu0 %v1606
          %1917 = vmatpush1.msra.mxu0 %v1605
          %1918 = vmatprep.subr.mxu0 %v1610
          %1919 = vmatpush1.msra.mxu0 %v1609
          %1920 = vmatprep.subr.mxu0 %v1614
          %1921 = vmatpush1.msra.mxu0 %v1613
          %1922 = vmatprep.subr.mxu0 %v1618
          %1923 = vmatpush1.msra.mxu0 %v1617
          %1924 = vmatprep.subr.mxu0 %v1622
          %1925 = vmatpush1.msra.mxu0 %v1621
          %1926 = vmatprep.subr.mxu0 %v1626
          %1927 = vmatpush1.msra.mxu0 %v1625
          %1928 = vmatprep.subr.mxu0 %v1630
          %1929 = vmatpush1.msra.mxu0 %v1629
          %1930 = vmatprep.subr.mxu0 %v1634
          %1931 = vmatpush1.msra.mxu0 %v1633
          %1932 = vmatprep.subr.mxu0 %v1638
          %1933 = vmatpush1.msra.mxu0 %v1637
          %1934 = vmatprep.subr.mxu0 %v1642
          %1935 = vmatpush1.msra.mxu0 %v1641
          %1936 = vmatprep.subr.mxu0 %v1646
          %1937 = vmatpush1.msra.mxu0 %v1645
          %1938 = vmatprep.subr.mxu0 %v1650
          %1939 = vmatpush1.msra.mxu0 %v1649
          %1940 = vmatprep.subr.mxu0 %v1654
          %1941 = vmatpush1.msra.mxu0 %v1653
          %1942 = vmatprep.subr.mxu0 0.0
          %1943 = vmatpush1.msra.mxu0 0.0
          %1944 = vmatprep.subr.mxu0 0.0
          %1945 = vmatpush1.msra.mxu0 0.0
          %1946 = vmatprep.subr.mxu0 0.0
          %1947 = vmatpush1.msra.mxu0 0.0
          %1948 = vmatprep.subr.mxu0 0.0
          %1949 = vmatpush1.msra.mxu0 0.0
          %1950 = vmatprep.subr.mxu0 0.0
          %1951 = vmatpush1.msra.mxu0 0.0
          %1952 = vmatprep.subr.mxu0 0.0
          %1953 = vmatpush1.msra.mxu0 0.0
          %1954 = vmatprep.subr.mxu0 0.0
          %1955 = vmatpush1.msra.mxu0 0.0
          %1956 = vmatprep.subr.mxu0 0.0
          %1957 = vmatpush1.msra.mxu0 0.0
          %1958 = vmatprep.subr.mxu0 0.0
          %1959 = vmatpush1.msra.mxu0 0.0
          %1960 = vmatprep.subr.mxu0 0.0
          %1961 = vmatpush1.msra.mxu0 0.0
          %1962 = vmatprep.subr.mxu0 0.0
          %1963 = vmatpush1.msra.mxu0 0.0
          %1964 = vmatprep.subr.mxu0 0.0
          %1965 = vmatpush1.msra.mxu0 0.0
          %1966 = vmatprep.subr.mxu0 0.0
          %1967 = vmatpush1.msra.mxu0 0.0
          %1968 = vmatprep.subr.mxu0 0.0
          %1969 = vmatpush1.msra.mxu0 0.0
          %1970 = vmatprep.subr.mxu0 0.0
          %1971 = vmatpush1.msra.mxu0 0.0
          %1972 = vmatprep.subr.mxu0 0.0
          %1973 = vmatpush1.msra.mxu0 0.0
          %1974 = vmatprep.mubr.f32.mxu0 0.0
          %1975 = vmatmul.mubr.f32.gmra.mrb[0].mxu0 %v1830
          %v1976 = vpop.f32.mrb[0].mxu0
          %v1977 = vadd.f32 0.0, %v1976
          %v1978 = vpop.f32.mrb[0].mxu0
          %v1979 = vadd.f32 0.0, %v1978
          %1980 = vdwg.mxu0
          %v1981 = vadd.f32 %v1835, %v1906
          %v1982 = vadd.f32 %v1836, %v1908
          %v1983 = vadd.f32 %v1837, %v1977
          %v1984 = vadd.f32 %v1838, %v1979
          %v1985 = vxor.u32 %v1981, 2147483648
          %v1986 = vxor.u32 %v1982, 2147483648
          %v1987 = vxor.u32 %v1983, 2147483648
          %v1988 = vmul.f32 %v1985, 1.442695
          %v1989 = vpow.pop %v1988
          %v1990 = vmul.f32 %v1986, 1.442695
          %v1991 = vpow.pop %v1990
          %v1992 = vmul.f32 %v1987, 1.442695
          %v1993 = vpow.pop %v1992
          %v1994 = vadd.f32 %v1989, 1.0
          %v1995 = vadd.f32 %v1991, 1.0
          %v1996 = vadd.f32 %v1993, 1.0
          %v1997 = vrcp.pop %v1994
          %v1998 = vmul.f32 1.0, %v1997
          %v1999 = vrcp.pop %v1995
          %v2000 = vmul.f32 1.0, %v1999
          %v2001 = vrcp.pop %v1996
          %v2002 = vmul.f32 1.0, %v2001
          %v2003 = vtanh.pop %v1984
          %v2004 = vmul.f32 %v2000, %v1831
          %v2005 = vmul.f32 %v1998, %v2003
          %v2006 = vadd.f32 %v2004, %v2005
          %v2007 = vtanh.pop %v2006
          %v2008 = vmul.f32 %v2002, %v2007
          %s2009 = sadd.s32 %s1825, 1
          %p2010 = scmp.lt.s32.totalorder %s2009, 10
          %s2011 = scalar_select %p2010, 1, 0
          %v2012 = vstv %s2011
          %vm2013 = vcmp.eq.s32.totalorder %v2012, 1
          %v2014 = vsel %vm2013, %v2008, %v1830
          %v2015 = vsel %vm2013, %v2006, %v1831
          %s2016 = smul.u32 2, 4
          %s2017 = smul.addr %s2016, 8
          %s2018 = scalar_lea.vmem [#allocation4], %s2017
          %v2019 = vld [vmem:[%s2018] sm:$0xff]
          %v2020 = vld [vmem:[%s2018 + $0x8] sm:$0xff]
          %v2021 = vld [vmem:[%s2018 + $0x10] sm:$0xff]
          %v2022 = vld [vmem:[%s2018 + $0x18] sm:$0xff]
          %2023 = vmatprep.subr.mxu0 %v1592
          %2024 = vmatpush1.msra.mxu0 %v1591
          %2025 = vmatprep.subr.mxu0 %v1596
          %2026 = vmatpush1.msra.mxu0 %v1595
          %2027 = vmatprep.subr.mxu0 %v1600
          %2028 = vmatpush1.msra.mxu0 %v1599
          %2029 = vmatprep.subr.mxu0 %v1604
          %2030 = vmatpush1.msra.mxu0 %v1603
          %2031 = vmatprep.subr.mxu0 %v1608
          %2032 = vmatpush1.msra.mxu0 %v1607
          %2033 = vmatprep.subr.mxu0 %v1612
          %2034 = vmatpush1.msra.mxu0 %v1611
          %2035 = vmatprep.subr.mxu0 %v1616
          %2036 = vmatpush1.msra.mxu0 %v1615
          %2037 = vmatprep.subr.mxu0 %v1620
          %2038 = vmatpush1.msra.mxu0 %v1619
          %2039 = vmatprep.subr.mxu0 %v1624
          %2040 = vmatpush1.msra.mxu0 %v1623
          %2041 = vmatprep.subr.mxu0 %v1628
          %2042 = vmatpush1.msra.mxu0 %v1627
          %2043 = vmatprep.subr.mxu0 %v1632
          %2044 = vmatpush1.msra.mxu0 %v1631
          %2045 = vmatprep.subr.mxu0 %v1636
          %2046 = vmatpush1.msra.mxu0 %v1635
          %2047 = vmatprep.subr.mxu0 %v1640
          %2048 = vmatpush1.msra.mxu0 %v1639
          %2049 = vmatprep.subr.mxu0 %v1644
          %2050 = vmatpush1.msra.mxu0 %v1643
          %2051 = vmatprep.subr.mxu0 %v1648
          %2052 = vmatpush1.msra.mxu0 %v1647
          %2053 = vmatprep.subr.mxu0 %v1652
          %2054 = vmatpush1.msra.mxu0 %v1651
          %2055 = vmatprep.subr.mxu0 0.0
          %2056 = vmatpush1.msra.mxu0 0.0
          %2057 = vmatprep.subr.mxu0 0.0
          %2058 = vmatpush1.msra.mxu0 0.0
          %2059 = vmatprep.subr.mxu0 0.0
          %2060 = vmatpush1.msra.mxu0 0.0
          %2061 = vmatprep.subr.mxu0 0.0
          %2062 = vmatpush1.msra.mxu0 0.0
          %2063 = vmatprep.subr.mxu0 0.0
          %2064 = vmatpush1.msra.mxu0 0.0
          %2065 = vmatprep.subr.mxu0 0.0
          %2066 = vmatpush1.msra.mxu0 0.0
          %2067 = vmatprep.subr.mxu0 0.0
          %2068 = vmatpush1.msra.mxu0 0.0
          %2069 = vmatprep.subr.mxu0 0.0
          %2070 = vmatpush1.msra.mxu0 0.0
          %2071 = vmatprep.subr.mxu0 0.0
          %2072 = vmatpush1.msra.mxu0 0.0
          %2073 = vmatprep.subr.mxu0 0.0
          %2074 = vmatpush1.msra.mxu0 0.0
          %2075 = vmatprep.subr.mxu0 0.0
          %2076 = vmatpush1.msra.mxu0 0.0
          %2077 = vmatprep.subr.mxu0 0.0
          %2078 = vmatpush1.msra.mxu0 0.0
          %2079 = vmatprep.subr.mxu0 0.0
          %2080 = vmatpush1.msra.mxu0 0.0
          %2081 = vmatprep.subr.mxu0 0.0
          %2082 = vmatpush1.msra.mxu0 0.0
          %2083 = vmatprep.subr.mxu0 0.0
          %2084 = vmatpush1.msra.mxu0 0.0
          %2085 = vmatprep.subr.mxu0 0.0
          %2086 = vmatpush1.msra.mxu0 0.0
          %2087 = vmatprep.mubr.f32.mxu0 0.0
          %2088 = vmatmul.mubr.f32.gmra.mrb[0].mxu0 %v2014
          %v2089 = vpop.f32.mrb[0].mxu0
          %v2090 = vadd.f32 0.0, %v2089
          %v2091 = vpop.f32.mrb[0].mxu0
          %v2092 = vadd.f32 0.0, %v2091
          %2093 = vdwg.mxu0
          %2094 = vmatprep.subr.mxu0 %v1594
          %2095 = vmatpush1.msra.mxu0 %v1593
          %2096 = vmatprep.subr.mxu0 %v1598
          %2097 = vmatpush1.msra.mxu0 %v1597
          %2098 = vmatprep.subr.mxu0 %v1602
          %2099 = vmatpush1.msra.mxu0 %v1601
          %2100 = vmatprep.subr.mxu0 %v1606
          %2101 = vmatpush1.msra.mxu0 %v1605
          %2102 = vmatprep.subr.mxu0 %v1610
          %2103 = vmatpush1.msra.mxu0 %v1609
          %2104 = vmatprep.subr.mxu0 %v1614
          %2105 = vmatpush1.msra.mxu0 %v1613
          %2106 = vmatprep.subr.mxu0 %v1618
          %2107 = vmatpush1.msra.mxu0 %v1617
          %2108 = vmatprep.subr.mxu0 %v1622
          %2109 = vmatpush1.msra.mxu0 %v1621
          %2110 = vmatprep.subr.mxu0 %v1626
          %2111 = vmatpush1.msra.mxu0 %v1625
          %2112 = vmatprep.subr.mxu0 %v1630
          %2113 = vmatpush1.msra.mxu0 %v1629
          %2114 = vmatprep.subr.mxu0 %v1634
          %2115 = vmatpush1.msra.mxu0 %v1633
          %2116 = vmatprep.subr.mxu0 %v1638
          %2117 = vmatpush1.msra.mxu0 %v1637
          %2118 = vmatprep.subr.mxu0 %v1642
          %2119 = vmatpush1.msra.mxu0 %v1641
          %2120 = vmatprep.subr.mxu0 %v1646
          %2121 = vmatpush1.msra.mxu0 %v1645
          %2122 = vmatprep.subr.mxu0 %v1650
          %2123 = vmatpush1.msra.mxu0 %v1649
          %2124 = vmatprep.subr.mxu0 %v1654
          %2125 = vmatpush1.msra.mxu0 %v1653
          %2126 = vmatprep.subr.mxu0 0.0
          %2127 = vmatpush1.msra.mxu0 0.0
          %2128 = vmatprep.subr.mxu0 0.0
          %2129 = vmatpush1.msra.mxu0 0.0
          %2130 = vmatprep.subr.mxu0 0.0
          %2131 = vmatpush1.msra.mxu0 0.0
          %2132 = vmatprep.subr.mxu0 0.0
          %2133 = vmatpush1.msra.mxu0 0.0
          %2134 = vmatprep.subr.mxu0 0.0
          %2135 = vmatpush1.msra.mxu0 0.0
          %2136 = vmatprep.subr.mxu0 0.0
          %2137 = vmatpush1.msra.mxu0 0.0
          %2138 = vmatprep.subr.mxu0 0.0
          %2139 = vmatpush1.msra.mxu0 0.0
          %2140 = vmatprep.subr.mxu0 0.0
          %2141 = vmatpush1.msra.mxu0 0.0
          %2142 = vmatprep.subr.mxu0 0.0
          %2143 = vmatpush1.msra.mxu0 0.0
          %2144 = vmatprep.subr.mxu0 0.0
          %2145 = vmatpush1.msra.mxu0 0.0
          %2146 = vmatprep.subr.mxu0 0.0
          %2147 = vmatpush1.msra.mxu0 0.0
          %2148 = vmatprep.subr.mxu0 0.0
          %2149 = vmatpush1.msra.mxu0 0.0
          %2150 = vmatprep.subr.mxu0 0.0
          %2151 = vmatpush1.msra.mxu0 0.0
          %2152 = vmatprep.subr.mxu0 0.0
          %2153 = vmatpush1.msra.mxu0 0.0
          %2154 = vmatprep.subr.mxu0 0.0
          %2155 = vmatpush1.msra.mxu0 0.0
          %2156 = vmatprep.subr.mxu0 0.0
          %2157 = vmatpush1.msra.mxu0 0.0
          %2158 = vmatprep.mubr.f32.mxu0 0.0
          %2159 = vmatmul.mubr.f32.gmra.mrb[0].mxu0 %v2014
          %v2160 = vpop.f32.mrb[0].mxu0
          %v2161 = vadd.f32 0.0, %v2160
          %v2162 = vpop.f32.mrb[0].mxu0
          %v2163 = vadd.f32 0.0, %v2162
          %2164 = vdwg.mxu0
          %v2165 = vadd.f32 %v2019, %v2090
          %v2166 = vadd.f32 %v2020, %v2092
          %v2167 = vadd.f32 %v2021, %v2161
          %v2168 = vadd.f32 %v2022, %v2163
          %v2169 = vxor.u32 %v2165, 2147483648
          %v2170 = vxor.u32 %v2166, 2147483648
          %v2171 = vxor.u32 %v2167, 2147483648
          %v2172 = vmul.f32 %v2169, 1.442695
          %v2173 = vpow.pop %v2172
          %v2174 = vmul.f32 %v2170, 1.442695
          %v2175 = vpow.pop %v2174
          %v2176 = vmul.f32 %v2171, 1.442695
          %v2177 = vpow.pop %v2176
          %v2178 = vadd.f32 %v2173, 1.0
          %v2179 = vadd.f32 %v2175, 1.0
          %v2180 = vadd.f32 %v2177, 1.0
          %v2181 = vrcp.pop %v2178
          %v2182 = vmul.f32 1.0, %v2181
          %v2183 = vrcp.pop %v2179
          %v2184 = vmul.f32 1.0, %v2183
          %v2185 = vrcp.pop %v2180
          %v2186 = vmul.f32 1.0, %v2185
          %v2187 = vtanh.pop %v2168
          %v2188 = vmul.f32 %v2184, %v2015
          %v2189 = vmul.f32 %v2182, %v2187
          %v2190 = vadd.f32 %v2188, %v2189
          %v2191 = vtanh.pop %v2190
          %v2192 = vmul.f32 %v2186, %v2191
          %s2193 = sadd.s32 %s1825, 2
          %p2194 = scmp.lt.s32.totalorder %s2193, 10
          %s2195 = scalar_select %p2194, 1, 0
          %v2196 = vstv %s2195
          %vm2197 = vcmp.eq.s32.totalorder %v2196, 1
          %v2198 = vsel %vm2197, %v2192, %v2014
          %v2199 = vsel %vm2197, %v2190, %v2015
          %s2200 = smul.u32 3, 4
          %s2201 = smul.addr %s2200, 8
          %s2202 = scalar_lea.vmem [#allocation4], %s2201
          %v2203 = vld [vmem:[%s2202] sm:$0xff]
          %v2204 = vld [vmem:[%s2202 + $0x8] sm:$0xff]
          %v2205 = vld [vmem:[%s2202 + $0x10] sm:$0xff]
          %v2206 = vld [vmem:[%s2202 + $0x18] sm:$0xff]
          %2207 = vmatprep.subr.mxu0 %v1592
          %2208 = vmatpush1.msra.mxu0 %v1591
          %2209 = vmatprep.subr.mxu0 %v1596
          %2210 = vmatpush1.msra.mxu0 %v1595
          %2211 = vmatprep.subr.mxu0 %v1600
          %2212 = vmatpush1.msra.mxu0 %v1599
          %2213 = vmatprep.subr.mxu0 %v1604
          %2214 = vmatpush1.msra.mxu0 %v1603
          %2215 = vmatprep.subr.mxu0 %v1608
          %2216 = vmatpush1.msra.mxu0 %v1607
          %2217 = vmatprep.subr.mxu0 %v1612
          %2218 = vmatpush1.msra.mxu0 %v1611
          %2219 = vmatprep.subr.mxu0 %v1616
          %2220 = vmatpush1.msra.mxu0 %v1615
          %2221 = vmatprep.subr.mxu0 %v1620
          %2222 = vmatpush1.msra.mxu0 %v1619
          %2223 = vmatprep.subr.mxu0 %v1624
          %2224 = vmatpush1.msra.mxu0 %v1623
          %2225 = vmatprep.subr.mxu0 %v1628
          %2226 = vmatpush1.msra.mxu0 %v1627
          %2227 = vmatprep.subr.mxu0 %v1632
          %2228 = vmatpush1.msra.mxu0 %v1631
          %2229 = vmatprep.subr.mxu0 %v1636
          %2230 = vmatpush1.msra.mxu0 %v1635
          %2231 = vmatprep.subr.mxu0 %v1640
          %2232 = vmatpush1.msra.mxu0 %v1639
          %2233 = vmatprep.subr.mxu0 %v1644
          %2234 = vmatpush1.msra.mxu0 %v1643
          %2235 = vmatprep.subr.mxu0 %v1648
          %2236 = vmatpush1.msra.mxu0 %v1647
          %2237 = vmatprep.subr.mxu0 %v1652
          %2238 = vmatpush1.msra.mxu0 %v1651
          %2239 = vmatprep.subr.mxu0 0.0
          %2240 = vmatpush1.msra.mxu0 0.0
          %2241 = vmatprep.subr.mxu0 0.0
          %2242 = vmatpush1.msra.mxu0 0.0
          %2243 = vmatprep.subr.mxu0 0.0
          %2244 = vmatpush1.msra.mxu0 0.0
          %2245 = vmatprep.subr.mxu0 0.0
          %2246 = vmatpush1.msra.mxu0 0.0
          %2247 = vmatprep.subr.mxu0 0.0
          %2248 = vmatpush1.msra.mxu0 0.0
          %2249 = vmatprep.subr.mxu0 0.0
          %2250 = vmatpush1.msra.mxu0 0.0
          %2251 = vmatprep.subr.mxu0 0.0
          %2252 = vmatpush1.msra.mxu0 0.0
          %2253 = vmatprep.subr.mxu0 0.0
          %2254 = vmatpush1.msra.mxu0 0.0
          %2255 = vmatprep.subr.mxu0 0.0
          %2256 = vmatpush1.msra.mxu0 0.0
          %2257 = vmatprep.subr.mxu0 0.0
          %2258 = vmatpush1.msra.mxu0 0.0
          %2259 = vmatprep.subr.mxu0 0.0
          %2260 = vmatpush1.msra.mxu0 0.0
          %2261 = vmatprep.subr.mxu0 0.0
          %2262 = vmatpush1.msra.mxu0 0.0
          %2263 = vmatprep.subr.mxu0 0.0
          %2264 = vmatpush1.msra.mxu0 0.0
          %2265 = vmatprep.subr.mxu0 0.0
          %2266 = vmatpush1.msra.mxu0 0.0
          %2267 = vmatprep.subr.mxu0 0.0
          %2268 = vmatpush1.msra.mxu0 0.0
          %2269 = vmatprep.subr.mxu0 0.0
          %2270 = vmatpush1.msra.mxu0 0.0
          %2271 = vmatprep.mubr.f32.mxu0 0.0
          %2272 = vmatmul.mubr.f32.gmra.mrb[0].mxu0 %v2198
          %v2273 = vpop.f32.mrb[0].mxu0
          %v2274 = vadd.f32 0.0, %v2273
          %v2275 = vpop.f32.mrb[0].mxu0
          %v2276 = vadd.f32 0.0, %v2275
          %2277 = vdwg.mxu0
          %2278 = vmatprep.subr.mxu0 %v1594
          %2279 = vmatpush1.msra.mxu0 %v1593
          %2280 = vmatprep.subr.mxu0 %v1598
          %2281 = vmatpush1.msra.mxu0 %v1597
          %2282 = vmatprep.subr.mxu0 %v1602
          %2283 = vmatpush1.msra.mxu0 %v1601
          %2284 = vmatprep.subr.mxu0 %v1606
          %2285 = vmatpush1.msra.mxu0 %v1605
          %2286 = vmatprep.subr.mxu0 %v1610
          %2287 = vmatpush1.msra.mxu0 %v1609
          %2288 = vmatprep.subr.mxu0 %v1614
          %2289 = vmatpush1.msra.mxu0 %v1613
          %2290 = vmatprep.subr.mxu0 %v1618
          %2291 = vmatpush1.msra.mxu0 %v1617
          %2292 = vmatprep.subr.mxu0 %v1622
          %2293 = vmatpush1.msra.mxu0 %v1621
          %2294 = vmatprep.subr.mxu0 %v1626
          %2295 = vmatpush1.msra.mxu0 %v1625
          %2296 = vmatprep.subr.mxu0 %v1630
          %2297 = vmatpush1.msra.mxu0 %v1629
          %2298 = vmatprep.subr.mxu0 %v1634
          %2299 = vmatpush1.msra.mxu0 %v1633
          %2300 = vmatprep.subr.mxu0 %v1638
          %2301 = vmatpush1.msra.mxu0 %v1637
          %2302 = vmatprep.subr.mxu0 %v1642
          %2303 = vmatpush1.msra.mxu0 %v1641
          %2304 = vmatprep.subr.mxu0 %v1646
          %2305 = vmatpush1.msra.mxu0 %v1645
          %2306 = vmatprep.subr.mxu0 %v1650
          %2307 = vmatpush1.msra.mxu0 %v1649
          %2308 = vmatprep.subr.mxu0 %v1654
          %2309 = vmatpush1.msra.mxu0 %v1653
          %2310 = vmatprep.subr.mxu0 0.0
          %2311 = vmatpush1.msra.mxu0 0.0
          %2312 = vmatprep.subr.mxu0 0.0
          %2313 = vmatpush1.msra.mxu0 0.0
          %2314 = vmatprep.subr.mxu0 0.0
          %2315 = vmatpush1.msra.mxu0 0.0
          %2316 = vmatprep.subr.mxu0 0.0
          %2317 = vmatpush1.msra.mxu0 0.0
          %2318 = vmatprep.subr.mxu0 0.0
          %2319 = vmatpush1.msra.mxu0 0.0
          %2320 = vmatprep.subr.mxu0 0.0
          %2321 = vmatpush1.msra.mxu0 0.0
          %2322 = vmatprep.subr.mxu0 0.0
          %2323 = vmatpush1.msra.mxu0 0.0
          %2324 = vmatprep.subr.mxu0 0.0
          %2325 = vmatpush1.msra.mxu0 0.0
          %2326 = vmatprep.subr.mxu0 0.0
          %2327 = vmatpush1.msra.mxu0 0.0
          %2328 = vmatprep.subr.mxu0 0.0
          %2329 = vmatpush1.msra.mxu0 0.0
          %2330 = vmatprep.subr.mxu0 0.0
          %2331 = vmatpush1.msra.mxu0 0.0
          %2332 = vmatprep.subr.mxu0 0.0
          %2333 = vmatpush1.msra.mxu0 0.0
          %2334 = vmatprep.subr.mxu0 0.0
          %2335 = vmatpush1.msra.mxu0 0.0
          %2336 = vmatprep.subr.mxu0 0.0
          %2337 = vmatpush1.msra.mxu0 0.0
          %2338 = vmatprep.subr.mxu0 0.0
          %2339 = vmatpush1.msra.mxu0 0.0
          %2340 = vmatprep.subr.mxu0 0.0
          %2341 = vmatpush1.msra.mxu0 0.0
          %2342 = vmatprep.mubr.f32.mxu0 0.0
          %2343 = vmatmul.mubr.f32.gmra.mrb[0].mxu0 %v2198
          %v2344 = vpop.f32.mrb[0].mxu0
          %v2345 = vadd.f32 0.0, %v2344
          %v2346 = vpop.f32.mrb[0].mxu0
          %v2347 = vadd.f32 0.0, %v2346
          %2348 = vdwg.mxu0
          %v2349 = vadd.f32 %v2203, %v2274
          %v2350 = vadd.f32 %v2204, %v2276
          %v2351 = vadd.f32 %v2205, %v2345
          %v2352 = vadd.f32 %v2206, %v2347
          %v2353 = vxor.u32 %v2349, 2147483648
          %v2354 = vxor.u32 %v2350, 2147483648
          %v2355 = vxor.u32 %v2351, 2147483648
          %v2356 = vmul.f32 %v2353, 1.442695
          %v2357 = vpow.pop %v2356
          %v2358 = vmul.f32 %v2354, 1.442695
          %v2359 = vpow.pop %v2358
          %v2360 = vmul.f32 %v2355, 1.442695
          %v2361 = vpow.pop %v2360
          %v2362 = vadd.f32 %v2357, 1.0
          %v2363 = vadd.f32 %v2359, 1.0
          %v2364 = vadd.f32 %v2361, 1.0
          %v2365 = vrcp.pop %v2362
          %v2366 = vmul.f32 1.0, %v2365
          %v2367 = vrcp.pop %v2363
          %v2368 = vmul.f32 1.0, %v2367
          %v2369 = vrcp.pop %v2364
          %v2370 = vmul.f32 1.0, %v2369
          %v2371 = vtanh.pop %v2352
          %v2372 = vmul.f32 %v2368, %v2199
          %v2373 = vmul.f32 %v2366, %v2371
          %v2374 = vadd.f32 %v2372, %v2373
          %v2375 = vtanh.pop %v2374
          %v2376 = vmul.f32 %v2370, %v2375
          %s2377 = sadd.s32 %s1825, 3
          %p2378 = scmp.lt.s32.totalorder %s2377, 10
          %s2379 = scalar_select %p2378, 1, 0
          %v2380 = vstv %s2379
          %vm2381 = vcmp.eq.s32.totalorder %v2380, 1
          %v2382 = vsel %vm2381, %v2376, %v2198
          %v2383 = vsel %vm2381, %v2374, %v2199
          %2384 = vst [vmem:[#allocation2] sm:$0xff] %v2382
          %2385 = vst [vmem:[#allocation3] sm:$0xff] %v2383
          %v2386 = vld [vmem:[#allocation2] sm:$0xff]
          %v2387 = vld [vmem:[#allocation11] sm:$0xff]
          %v2388 = vld [vmem:[#allocation11 + $0x8] sm:$0xff]
          %v2389 = vld [vmem:[#allocation11 + $0x10] sm:$0xff]
          %v2390 = vld [vmem:[#allocation11 + $0x18] sm:$0xff]
          %v2391 = vld [vmem:[#allocation11 + $0x20] sm:$0xff]
          %v2392 = vld [vmem:[#allocation11 + $0x28] sm:$0xff]
          %v2393 = vld [vmem:[#allocation11 + $0x30] sm:$0xff]
          %v2394 = vld [vmem:[#allocation11 + $0x38] sm:$0xff]
          %v2395 = vld [vmem:[#allocation11 + $0x40] sm:$0xff]
          %v2396 = vld [vmem:[#allocation11 + $0x48] sm:$0xff]
          %v2397 = vld [vmem:[#allocation11 + $0x50] sm:$0xff]
          %v2398 = vld [vmem:[#allocation11 + $0x58] sm:$0xff]
          %v2399 = vld [vmem:[#allocation11 + $0x60] sm:$0xff]
          %v2400 = vld [vmem:[#allocation11 + $0x68] sm:$0xff]
          %v2401 = vld [vmem:[#allocation11 + $0x70] sm:$0xff]
          %v2402 = vld [vmem:[#allocation11 + $0x78] sm:$0xff]
          %v2403 = vld [vmem:[%s5] sm:$0x1]
          %v2405 = vlaneseq
          %v2406 = vshrl.u32 %v2405, 7
          %v2407 = vsub.s32 0, %v2406
          %v2408 = vrot.slane %v2403, %v2407
          %2410 = vmatprep.subr.mxu0 0.0
          %2411 = vmatpush1.msra.mxu0 %v2387
          %2412 = vmatprep.subr.mxu0 0.0
          %2413 = vmatpush1.msra.mxu0 %v2388
          %2414 = vmatprep.subr.mxu0 0.0
          %2415 = vmatpush1.msra.mxu0 %v2389
          %2416 = vmatprep.subr.mxu0 0.0
          %2417 = vmatpush1.msra.mxu0 %v2390
          %2418 = vmatprep.subr.mxu0 0.0
          %2419 = vmatpush1.msra.mxu0 %v2391
          %2420 = vmatprep.subr.mxu0 0.0
          %2421 = vmatpush1.msra.mxu0 %v2392
          %2422 = vmatprep.subr.mxu0 0.0
          %2423 = vmatpush1.msra.mxu0 %v2393
          %2424 = vmatprep.subr.mxu0 0.0
          %2425 = vmatpush1.msra.mxu0 %v2394
          %2426 = vmatprep.subr.mxu0 0.0
          %2427 = vmatpush1.msra.mxu0 %v2395
          %2428 = vmatprep.subr.mxu0 0.0
          %2429 = vmatpush1.msra.mxu0 %v2396
          %2430 = vmatprep.subr.mxu0 0.0
          %2431 = vmatpush1.msra.mxu0 %v2397
          %2432 = vmatprep.subr.mxu0 0.0
          %2433 = vmatpush1.msra.mxu0 %v2398
          %2434 = vmatprep.subr.mxu0 0.0
          %2435 = vmatpush1.msra.mxu0 %v2399
          %2436 = vmatprep.subr.mxu0 0.0
          %2437 = vmatpush1.msra.mxu0 %v2400
          %2438 = vmatprep.subr.mxu0 0.0
          %2439 = vmatpush1.msra.mxu0 %v2401
          %2440 = vmatprep.subr.mxu0 0.0
          %2441 = vmatpush1.msra.mxu0 %v2402
          %2442 = vmatprep.subr.mxu0 0.0
          %2443 = vmatpush1.msra.mxu0 0.0
          %2444 = vmatprep.subr.mxu0 0.0
          %2445 = vmatpush1.msra.mxu0 0.0
          %2446 = vmatprep.subr.mxu0 0.0
          %2447 = vmatpush1.msra.mxu0 0.0
          %2448 = vmatprep.subr.mxu0 0.0
          %2449 = vmatpush1.msra.mxu0 0.0
          %2450 = vmatprep.subr.mxu0 0.0
          %2451 = vmatpush1.msra.mxu0 0.0
          %2452 = vmatprep.subr.mxu0 0.0
          %2453 = vmatpush1.msra.mxu0 0.0
          %2454 = vmatprep.subr.mxu0 0.0
          %2455 = vmatpush1.msra.mxu0 0.0
          %2456 = vmatprep.subr.mxu0 0.0
          %2457 = vmatpush1.msra.mxu0 0.0
          %2458 = vmatprep.subr.mxu0 0.0
          %2459 = vmatpush1.msra.mxu0 0.0
          %2460 = vmatprep.subr.mxu0 0.0
          %2461 = vmatpush1.msra.mxu0 0.0
          %2462 = vmatprep.subr.mxu0 0.0
          %2463 = vmatpush1.msra.mxu0 0.0
          %2464 = vmatprep.subr.mxu0 0.0
          %2465 = vmatpush1.msra.mxu0 0.0
          %2466 = vmatprep.subr.mxu0 0.0
          %2467 = vmatpush1.msra.mxu0 0.0
          %2468 = vmatprep.subr.mxu0 0.0
          %2469 = vmatpush1.msra.mxu0 0.0
          %2470 = vmatprep.subr.mxu0 0.0
          %2471 = vmatpush1.msra.mxu0 0.0
          %2472 = vmatprep.subr.mxu0 0.0
          %2473 = vmatpush1.msra.mxu0 0.0
          %2474 = vmatprep.mubr.f32.mxu0 0.0
          %2475 = vmatmul.mubr.f32.gmra.mrb[0].mxu0 %v2386
          %v2476 = vpop.f32.mrb[0].mxu0
          %v2477 = vadd.f32 %v2408, %v2476
          %v2478 = vpop.f32.mrb[0].mxu0
          %2479 = vdwg.mxu0
          %v2480 = vmax.f32 %v2477, 0.0
          %v2481 = vld [vmem:[#allocation13] sm:$0xff]
          %v2482 = vld [vmem:[#allocation13 + $0x8] sm:$0xff]
          %v2483 = vld [vmem:[#allocation13 + $0x10] sm:$0xff]
          %v2484 = vld [vmem:[#allocation13 + $0x18] sm:$0xff]
          %v2485 = vld [vmem:[#allocation13 + $0x20] sm:$0xff]
          %v2486 = vld [vmem:[#allocation13 + $0x28] sm:$0xff]
          %v2487 = vld [vmem:[#allocation13 + $0x30] sm:$0xff]
          %v2488 = vld [vmem:[#allocation13 + $0x38] sm:$0xff]
          %v2489 = vld [vmem:[#allocation13 + $0x40] sm:$0xff]
          %v2490 = vld [vmem:[#allocation13 + $0x48] sm:$0xff]
          %v2491 = vld [vmem:[#allocation13 + $0x50] sm:$0xff]
          %v2492 = vld [vmem:[#allocation13 + $0x58] sm:$0xff]
          %v2493 = vld [vmem:[#allocation13 + $0x60] sm:$0xff]
          %v2494 = vld [vmem:[#allocation13 + $0x68] sm:$0xff]
          %v2495 = vld [vmem:[#allocation13 + $0x70] sm:$0xff]
          %v2496 = vld [vmem:[#allocation13 + $0x78] sm:$0xff]
          %v2497 = vld [vmem:[%s7] sm:$0x1]
          %v2499 = vlaneseq
          %v2500 = vshrl.u32 %v2499, 7
          %v2501 = vsub.s32 0, %v2500
          %v2502 = vrot.slane %v2497, %v2501
          %2504 = vmatprep.subr.mxu0 0.0
          %2505 = vmatpush1.msra.mxu0 %v2481
          %2506 = vmatprep.subr.mxu0 0.0
          %2507 = vmatpush1.msra.mxu0 %v2482
          %2508 = vmatprep.subr.mxu0 0.0
          %2509 = vmatpush1.msra.mxu0 %v2483
          %2510 = vmatprep.subr.mxu0 0.0
          %2511 = vmatpush1.msra.mxu0 %v2484
          %2512 = vmatprep.subr.mxu0 0.0
          %2513 = vmatpush1.msra.mxu0 %v2485
          %2514 = vmatprep.subr.mxu0 0.0
          %2515 = vmatpush1.msra.mxu0 %v2486
          %2516 = vmatprep.subr.mxu0 0.0
          %2517 = vmatpush1.msra.mxu0 %v2487
          %2518 = vmatprep.subr.mxu0 0.0
          %2519 = vmatpush1.msra.mxu0 %v2488
          %2520 = vmatprep.subr.mxu0 0.0
          %2521 = vmatpush1.msra.mxu0 %v2489
          %2522 = vmatprep.subr.mxu0 0.0
          %2523 = vmatpush1.msra.mxu0 %v2490
          %2524 = vmatprep.subr.mxu0 0.0
          %2525 = vmatpush1.msra.mxu0 %v2491
          %2526 = vmatprep.subr.mxu0 0.0
          %2527 = vmatpush1.msra.mxu0 %v2492
          %2528 = vmatprep.subr.mxu0 0.0
          %2529 = vmatpush1.msra.mxu0 %v2493
          %2530 = vmatprep.subr.mxu0 0.0
          %2531 = vmatpush1.msra.mxu0 %v2494
          %2532 = vmatprep.subr.mxu0 0.0
          %2533 = vmatpush1.msra.mxu0 %v2495
          %2534 = vmatprep.subr.mxu0 0.0
          %2535 = vmatpush1.msra.mxu0 %v2496
          %2536 = vmatprep.subr.mxu0 0.0
          %2537 = vmatpush1.msra.mxu0 0.0
          %2538 = vmatprep.subr.mxu0 0.0
          %2539 = vmatpush1.msra.mxu0 0.0
          %2540 = vmatprep.subr.mxu0 0.0
          %2541 = vmatpush1.msra.mxu0 0.0
          %2542 = vmatprep.subr.mxu0 0.0
          %2543 = vmatpush1.msra.mxu0 0.0
          %2544 = vmatprep.subr.mxu0 0.0
          %2545 = vmatpush1.msra.mxu0 0.0
          %2546 = vmatprep.subr.mxu0 0.0
          %2547 = vmatpush1.msra.mxu0 0.0
          %2548 = vmatprep.subr.mxu0 0.0
          %2549 = vmatpush1.msra.mxu0 0.0
          %2550 = vmatprep.subr.mxu0 0.0
          %2551 = vmatpush1.msra.mxu0 0.0
          %2552 = vmatprep.subr.mxu0 0.0
          %2553 = vmatpush1.msra.mxu0 0.0
          %2554 = vmatprep.subr.mxu0 0.0
          %2555 = vmatpush1.msra.mxu0 0.0
          %2556 = vmatprep.subr.mxu0 0.0
          %2557 = vmatpush1.msra.mxu0 0.0
          %2558 = vmatprep.subr.mxu0 0.0
          %2559 = vmatpush1.msra.mxu0 0.0
          %2560 = vmatprep.subr.mxu0 0.0
          %2561 = vmatpush1.msra.mxu0 0.0
          %2562 = vmatprep.subr.mxu0 0.0
          %2563 = vmatpush1.msra.mxu0 0.0
          %2564 = vmatprep.subr.mxu0 0.0
          %2565 = vmatpush1.msra.mxu0 0.0
          %2566 = vmatprep.subr.mxu0 0.0
          %2567 = vmatpush1.msra.mxu0 0.0
          %2568 = vmatprep.mubr.f32.mxu0 0.0
          %2569 = vmatmul.mubr.f32.gmra.mrb[0].mxu0 %v2480
          %v2570 = vpop.f32.mrb[0].mxu0
          %v2571 = vadd.f32 %v2502, %v2570
          %v2572 = vpop.f32.mrb[0].mxu0
          %2573 = vdwg.mxu0
          %v2574 = vmax.f32 %v2571, 0.0
          %v2575 = vld [vmem:[#allocation14] sm:$0xff]
          %v2576 = vld [vmem:[#allocation14 + $0x8] sm:$0xff]
          %v2577 = vld [vmem:[#allocation14 + $0x10] sm:$0xff]
          %v2578 = vld [vmem:[#allocation14 + $0x18] sm:$0xff]
          %v2579 = vld [vmem:[#allocation14 + $0x20] sm:$0xff]
          %v2580 = vld [vmem:[#allocation14 + $0x28] sm:$0xff]
          %v2581 = vld [vmem:[#allocation14 + $0x30] sm:$0xff]
          %v2582 = vld [vmem:[#allocation14 + $0x38] sm:$0xff]
          %v2583 = vld [vmem:[#allocation14 + $0x40] sm:$0xff]
          %v2584 = vld [vmem:[#allocation14 + $0x48] sm:$0xff]
          %v2585 = vld [vmem:[#allocation14 + $0x50] sm:$0xff]
          %v2586 = vld [vmem:[#allocation14 + $0x58] sm:$0xff]
          %v2587 = vld [vmem:[#allocation14 + $0x60] sm:$0xff]
          %v2588 = vld [vmem:[#allocation14 + $0x68] sm:$0xff]
          %v2589 = vld [vmem:[#allocation14 + $0x70] sm:$0xff]
          %v2590 = vld [vmem:[#allocation14 + $0x78] sm:$0xff]
          %v2591 = vld [vmem:[%s9] sm:$0x1]
          %v2593 = vlaneseq
          %v2594 = vshrl.u32 %v2593, 7
          %v2595 = vsub.s32 0, %v2594
          %v2596 = vrot.slane %v2591, %v2595
          %2598 = vmatprep.subr.mxu0 0.0
          %2599 = vmatpush1.msra.mxu0 %v2575
          %2600 = vmatprep.subr.mxu0 0.0
          %2601 = vmatpush1.msra.mxu0 %v2576
          %2602 = vmatprep.subr.mxu0 0.0
          %2603 = vmatpush1.msra.mxu0 %v2577
          %2604 = vmatprep.subr.mxu0 0.0
          %2605 = vmatpush1.msra.mxu0 %v2578
          %2606 = vmatprep.subr.mxu0 0.0
          %2607 = vmatpush1.msra.mxu0 %v2579
          %2608 = vmatprep.subr.mxu0 0.0
          %2609 = vmatpush1.msra.mxu0 %v2580
          %2610 = vmatprep.subr.mxu0 0.0
          %2611 = vmatpush1.msra.mxu0 %v2581
          %2612 = vmatprep.subr.mxu0 0.0
          %2613 = vmatpush1.msra.mxu0 %v2582
          %2614 = vmatprep.subr.mxu0 0.0
          %2615 = vmatpush1.msra.mxu0 %v2583
          %2616 = vmatprep.subr.mxu0 0.0
          %2617 = vmatpush1.msra.mxu0 %v2584
          %2618 = vmatprep.subr.mxu0 0.0
          %2619 = vmatpush1.msra.mxu0 %v2585
          %2620 = vmatprep.subr.mxu0 0.0
          %2621 = vmatpush1.msra.mxu0 %v2586
          %2622 = vmatprep.subr.mxu0 0.0
          %2623 = vmatpush1.msra.mxu0 %v2587
          %2624 = vmatprep.subr.mxu0 0.0
          %2625 = vmatpush1.msra.mxu0 %v2588
          %2626 = vmatprep.subr.mxu0 0.0
          %2627 = vmatpush1.msra.mxu0 %v2589
          %2628 = vmatprep.subr.mxu0 0.0
          %2629 = vmatpush1.msra.mxu0 %v2590
          %2630 = vmatprep.subr.mxu0 0.0
          %2631 = vmatpush1.msra.mxu0 0.0
          %2632 = vmatprep.subr.mxu0 0.0
          %2633 = vmatpush1.msra.mxu0 0.0
          %2634 = vmatprep.subr.mxu0 0.0
          %2635 = vmatpush1.msra.mxu0 0.0
          %2636 = vmatprep.subr.mxu0 0.0
          %2637 = vmatpush1.msra.mxu0 0.0
          %2638 = vmatprep.subr.mxu0 0.0
          %2639 = vmatpush1.msra.mxu0 0.0
          %2640 = vmatprep.subr.mxu0 0.0
          %2641 = vmatpush1.msra.mxu0 0.0
          %2642 = vmatprep.subr.mxu0 0.0
          %2643 = vmatpush1.msra.mxu0 0.0
          %2644 = vmatprep.subr.mxu0 0.0
          %2645 = vmatpush1.msra.mxu0 0.0
          %2646 = vmatprep.subr.mxu0 0.0
          %2647 = vmatpush1.msra.mxu0 0.0
          %2648 = vmatprep.subr.mxu0 0.0
          %2649 = vmatpush1.msra.mxu0 0.0
          %2650 = vmatprep.subr.mxu0 0.0
          %2651 = vmatpush1.msra.mxu0 0.0
          %2652 = vmatprep.subr.mxu0 0.0
          %2653 = vmatpush1.msra.mxu0 0.0
          %2654 = vmatprep.subr.mxu0 0.0
          %2655 = vmatpush1.msra.mxu0 0.0
          %2656 = vmatprep.subr.mxu0 0.0
          %2657 = vmatpush1.msra.mxu0 0.0
          %2658 = vmatprep.subr.mxu0 0.0
          %2659 = vmatpush1.msra.mxu0 0.0
          %2660 = vmatprep.subr.mxu0 0.0
          %2661 = vmatpush1.msra.mxu0 0.0
          %2662 = vmatprep.mubr.f32.mxu0 0.0
          %2663 = vmatmul.mubr.f32.gmra.mrb[0].mxu0 %v2574
          %v2664 = vpop.f32.mrb[0].mxu0
          %v2665 = vadd.f32 %v2596, %v2664
          %v2666 = vpop.f32.mrb[0].mxu0
          %2667 = vdwg.mxu0
          %v2668 = vmax.f32 %v2665, 0.0
          %v2669 = vld [vmem:[#allocation16] sm:$0xff]
          %v2670 = vld [vmem:[#allocation16 + $0x8] sm:$0xff]
          %v2671 = vld [vmem:[#allocation16 + $0x10] sm:$0xff]
          %v2672 = vld [vmem:[#allocation16 + $0x18] sm:$0xff]
          %v2673 = vld [vmem:[#allocation16 + $0x20] sm:$0xff]
          %v2674 = vld [vmem:[#allocation16 + $0x28] sm:$0xff]
          %v2675 = vld [vmem:[#allocation16 + $0x30] sm:$0xff]
          %v2676 = vld [vmem:[#allocation16 + $0x38] sm:$0xff]
          %v2677 = vld [vmem:[#allocation16 + $0x40] sm:$0xff]
          %v2678 = vld [vmem:[#allocation16 + $0x48] sm:$0xff]
          %v2679 = vld [vmem:[#allocation16 + $0x50] sm:$0xff]
          %v2680 = vld [vmem:[#allocation16 + $0x58] sm:$0xff]
          %v2681 = vld [vmem:[#allocation16 + $0x60] sm:$0xff]
          %v2682 = vld [vmem:[#allocation16 + $0x68] sm:$0xff]
          %v2683 = vld [vmem:[#allocation16 + $0x70] sm:$0xff]
          %v2684 = vld [vmem:[#allocation16 + $0x78] sm:$0xff]
          %v2685 = vld [vmem:[%s11] sm:$0x1]
          %v2687 = vlaneseq
          %v2688 = vshrl.u32 %v2687, 7
          %v2689 = vsub.s32 0, %v2688
          %v2690 = vrot.slane %v2685, %v2689
          %2692 = vmatprep.subr.mxu0 0.0
          %2693 = vmatpush1.msra.mxu0 %v2669
          %2694 = vmatprep.subr.mxu0 0.0
          %2695 = vmatpush1.msra.mxu0 %v2670
          %2696 = vmatprep.subr.mxu0 0.0
          %2697 = vmatpush1.msra.mxu0 %v2671
          %2698 = vmatprep.subr.mxu0 0.0
          %2699 = vmatpush1.msra.mxu0 %v2672
          %2700 = vmatprep.subr.mxu0 0.0
          %2701 = vmatpush1.msra.mxu0 %v2673
          %2702 = vmatprep.subr.mxu0 0.0
          %2703 = vmatpush1.msra.mxu0 %v2674
          %2704 = vmatprep.subr.mxu0 0.0
          %2705 = vmatpush1.msra.mxu0 %v2675
          %2706 = vmatprep.subr.mxu0 0.0
          %2707 = vmatpush1.msra.mxu0 %v2676
          %2708 = vmatprep.subr.mxu0 0.0
          %2709 = vmatpush1.msra.mxu0 %v2677
          %2710 = vmatprep.subr.mxu0 0.0
          %2711 = vmatpush1.msra.mxu0 %v2678
          %2712 = vmatprep.subr.mxu0 0.0
          %2713 = vmatpush1.msra.mxu0 %v2679
          %2714 = vmatprep.subr.mxu0 0.0
          %2715 = vmatpush1.msra.mxu0 %v2680
          %2716 = vmatprep.subr.mxu0 0.0
          %2717 = vmatpush1.msra.mxu0 %v2681
          %2718 = vmatprep.subr.mxu0 0.0
          %2719 = vmatpush1.msra.mxu0 %v2682
          %2720 = vmatprep.subr.mxu0 0.0
          %2721 = vmatpush1.msra.mxu0 %v2683
          %2722 = vmatprep.subr.mxu0 0.0
          %2723 = vmatpush1.msra.mxu0 %v2684
          %2724 = vmatprep.subr.mxu0 0.0
          %2725 = vmatpush1.msra.mxu0 0.0
          %2726 = vmatprep.subr.mxu0 0.0
          %2727 = vmatpush1.msra.mxu0 0.0
          %2728 = vmatprep.subr.mxu0 0.0
          %2729 = vmatpush1.msra.mxu0 0.0
          %2730 = vmatprep.subr.mxu0 0.0
          %2731 = vmatpush1.msra.mxu0 0.0
          %2732 = vmatprep.subr.mxu0 0.0
          %2733 = vmatpush1.msra.mxu0 0.0
          %2734 = vmatprep.subr.mxu0 0.0
          %2735 = vmatpush1.msra.mxu0 0.0
          %2736 = vmatprep.subr.mxu0 0.0
          %2737 = vmatpush1.msra.mxu0 0.0
          %2738 = vmatprep.subr.mxu0 0.0
          %2739 = vmatpush1.msra.mxu0 0.0
          %2740 = vmatprep.subr.mxu0 0.0
          %2741 = vmatpush1.msra.mxu0 0.0
          %2742 = vmatprep.subr.mxu0 0.0
          %2743 = vmatpush1.msra.mxu0 0.0
          %2744 = vmatprep.subr.mxu0 0.0
          %2745 = vmatpush1.msra.mxu0 0.0
          %2746 = vmatprep.subr.mxu0 0.0
          %2747 = vmatpush1.msra.mxu0 0.0
          %2748 = vmatprep.subr.mxu0 0.0
          %2749 = vmatpush1.msra.mxu0 0.0
          %2750 = vmatprep.subr.mxu0 0.0
          %2751 = vmatpush1.msra.mxu0 0.0
          %2752 = vmatprep.subr.mxu0 0.0
          %2753 = vmatpush1.msra.mxu0 0.0
          %2754 = vmatprep.subr.mxu0 0.0
          %2755 = vmatpush1.msra.mxu0 0.0
          %2756 = vmatprep.mubr.f32.mxu0 0.0
          %2757 = vmatmul.mubr.f32.gmra.mrb[0].mxu0 %v2668
          %v2758 = vpop.f32.mrb[0].mxu0
          %v2759 = vadd.f32 %v2690, %v2758
          %v2760 = vpop.f32.mrb[0].mxu0
          %2761 = vdwg.mxu0
          %2762 = vst [vmem:[#allocation17] sm:$0xff] %v2759
        $region108: #{tpu_custom_call.1} parent=67 // pred_fallthru
          _
        // Predicated region
        $region109: #{tpu_custom_call.1} parent=67 // pred_check
          %p2763 = pneg %p300
        $region110: #{tpu_custom_call.1} parent=67 // pred_check_branch
          %2765 = sbr.rel (%p2763) target = $region112
        $region111: #{tpu_custom_call.1} parent=67 // pred_region
          %s2767 = ssub.s32 128, 128
          %2768 = vsyncadd [#allocation7], %s2767
          %s2770 = sshll.u32 [#allocation17], 4
          %s2771 = int_to_ptr.vmem [resolvable:$true] %s2770
          %2773 = dma.vmem_to_hbm [thread:$0]  %s2771, 128, %s12, [#allocation7]
        $region112: #{tpu_custom_call.1} parent=67 // pred_fallthru
          _
        // Predicated region
        $region113: #{tpu_custom_call.1} parent=67 // pred_check
          %p2774 = pneg %p300
        $region114: #{tpu_custom_call.1} parent=67 // pred_check_branch
          %2776 = sbr.rel (%p2774) target = $region116
        $region115: #{tpu_custom_call.1} parent=67 // pred_region
          %2777 = dma.done [#allocation7], 128
        $region116: #{tpu_custom_call.1} parent=67 // pred_fallthru
          _
      $region68: #{tpu_custom_call.1} parent=5 // pred_fallthru
        _
      %p2778 = scmp.le.s32.totalorder 2, %s25
      // Predicated region
      $region117: #{tpu_custom_call.1} parent=5 // pred_check
        %p2779 = pneg %p2778
      $region118: #{tpu_custom_call.1} parent=5 // pred_check_branch
        %2781 = sbr.rel (%p2779) target = $region120
      $region119: #{tpu_custom_call.1} parent=5 // pred_region
        %s2782 = ssub.s32 %s25, 2
      $region120: #{tpu_custom_call.1} parent=5 // pred_fallthru
        _
    $region6: #{tpu_custom_call.1} parent=1 // loop_footer
      %s29 = sadd.s32 1, %s25
    $region7: #{tpu_custom_call.1} parent=1 // loop_footer_branch
      %24 = sbr.rel target = $region3
    $region8: #{tpu_custom_call.1} parent=1 // loop_exit
      _
    %2783 = vsyncpa [#allocation6], 1
    %s2784 = scalar_lea.sflag [#allocation6], 1
    %2785 = vsyncpa %s2784, 1
    %2786 = vsyncpa [#allocation9], 1
    %2787 = vsyncpa [#allocation12], 1
    %2788 = vsyncpa [#allocation15], 1
    %2789 = vsyncpa [#allocation7], 1
    %s2790 = scalar_lea.sflag [#allocation7], 1
    %2791 = vsyncpa %s2790, 1

</llo_original>
